<compile_context>
chip_gen: v5e
topology: v5e:2x2
jax: 0.10.0
libtpu: 0.0.40
codegen_flags: <defaults>
</compile_context>

<pallas_src>
import functools

import jax
import jax.numpy as jnp
from jax.experimental import pallas as pl


# ----------------------------------------------------------------------------
# Fused kernel: spatial MHA -> in-VMEM relayout -> temporal MHA, one launch.
# ----------------------------------------------------------------------------
def _st_attn_kernel(p1_ref, p2_ref, p3_ref, x_ref,
                    sp_w_ref, sp_b_ref, sp_wo_ref, sp_bo_ref,
                    tp_w_ref, tp_b_ref, tp_wo_ref, tp_bo_ref,
                    o_ref, *, b, t, n, e, num_heads):
    f32 = jnp.float32
    H = num_heads
    hd = e // H

    def mha(x2, w_ref, b_ref, wo_ref, bo_ref, groups, seq):
        """Multi-head self-attention over `groups` independent sequences.

        x2: (groups*seq, e), rows ordered group-major.  w_ref holds the three
        pre-transposed (e, e) projection weights (contract along dim 0); the
        softmax scale is already folded into w_ref[0] / b_ref[0].
        """
        M = groups * seq
        # Q/K/V projections: three full-width (M, e) @ (e, e) MXU matmuls
        # (no lane slicing of a fused (M, 3e) qkv block).
        q3 = (jnp.dot(x2, w_ref[0], preferred_element_type=f32)
              + b_ref[0]).reshape(groups, seq, e)
        k3 = (jnp.dot(x2, w_ref[1], preferred_element_type=f32)
              + b_ref[1]).reshape(groups, seq, e)
        v3 = (jnp.dot(x2, w_ref[2], preferred_element_type=f32)
              + b_ref[2]).reshape(groups, seq, e)

        acc = jnp.zeros((M, e), f32)
        for h in range(H):                      # static unroll over heads
            lo = h * hd
            qh = q3[:, :, lo:lo + hd]           # (groups, seq, hd)
            kh = k3[:, :, lo:lo + hd]
            vh = v3[:, :, lo:lo + hd]
            # Scores for every attention group at once (batched dot_general).
            s = jax.lax.dot_general(
                qh, kh, (((2,), (2,)), ((0,), (0,))),
                preferred_element_type=f32)     # (groups, seq, seq)
            s = s - jnp.max(s, axis=-1, keepdims=True)
            p = jnp.exp(s)
            p = p * pl.reciprocal(jnp.sum(p, axis=-1, keepdims=True),
                                  approx=True)
            oh = jax.lax.dot_general(
                p, vh, (((2,), (1,)), ((0,), (0,))),
                preferred_element_type=f32)     # (groups, seq, hd)
            # Fold this head's slice of the output projection straight into
            # the accumulator (removes the cross-lane head concatenate).
            acc = acc + jnp.dot(oh.reshape(M, hd), wo_ref[h],
                                preferred_element_type=f32)
        return acc + bo_ref[...]                # (M, e)

    x = x_ref[...].astype(f32)                                      # (M, e)
    # Spatial stage: groups = n, sequence length = b*t.
    xs = jnp.dot(p1_ref[...], x, preferred_element_type=f32)        # rows (n,b,t)
    ys = mha(xs, sp_w_ref, sp_b_ref, sp_wo_ref, sp_bo_ref, n, b * t)
    # In-VMEM relayout to the temporal layout: groups = t, sequence = b*n.
    xt = jnp.dot(p2_ref[...], ys, preferred_element_type=f32)       # rows (t,b,n)
    yt = mha(xt, tp_w_ref, tp_b_ref, tp_wo_ref, tp_bo_ref, t, b * n)
    # Back to the natural (b, t, n) row order and store.
    o_ref[...] = jnp.dot(p3_ref[...], yt,
                         preferred_element_type=f32).astype(o_ref.dtype)


# ----------------------------------------------------------------------------
# Wrapper: weight prep (transpose / split / scale fold) + permutation matrices
# are plain JAX done once per call; the whole forward is one pallas_call.
# ----------------------------------------------------------------------------
def spatio_temporal_attention(x, params, num_heads):
    """Pallas forward of SpatioTemporalAttentionLayer. x: (b, t, n, e)."""
    b, t, n, e = x.shape
    M = b * t * n
    H = num_heads
    hd = e // H
    scale = 1.0 / (hd ** 0.5)
    # NOTE: the in-kernel (M, e) -> (groups, seq, e) reshapes stay sublane
    # (8-row) aligned because both sequence lengths (b*t and b*n) are
    # multiples of 8 at these shapes.

    def prep(wi, bi, wo, bo):
        # Pre-transpose so the kernel contracts along dim 0 of each weight and
        # fold the softmax scale into the query projection.
        wq = wi[:e].T * scale
        wk = wi[e:2 * e].T
        wv = wi[2 * e:].T
        w_qkv = jnp.stack([wq, wk, wv])                             # (3, e, e)
        b_qkv = jnp.stack([bi[:e] * scale, bi[e:2 * e], bi[2 * e:]])[:, None, :]
        wo_heads = wo.T.reshape(H, hd, e)                           # (H, hd, e)
        return w_qkv, b_qkv, wo_heads, bo.reshape(1, e)

    sp = prep(params["sp_wi"], params["sp_bi"], params["sp_wo"], params["sp_bo"])
    tp = prep(params["tp_wi"], params["tp_bi"], params["tp_wo"], params["tp_bo"])

    # Exact 0/1 permutation matrices for the three in-kernel row relayouts.
    nat = jnp.arange(M).reshape(b, t, n)
    src1 = nat.transpose(2, 0, 1).reshape(M)         # (b,t,n) -> (n,b,t)
    sp_ord = jnp.arange(M).reshape(n, b, t)
    src2 = sp_ord.transpose(2, 1, 0).reshape(M)      # (n,b,t) -> (t,b,n)
    tp_ord = jnp.arange(M).reshape(t, b, n)
    src3 = tp_ord.transpose(1, 0, 2).reshape(M)      # (t,b,n) -> (b,t,n)
    P1 = jax.nn.one_hot(src1, M, dtype=jnp.float32)
    P2 = jax.nn.one_hot(src2, M, dtype=jnp.float32)
    P3 = jax.nn.one_hot(src3, M, dtype=jnp.float32)

    kernel = functools.partial(_st_attn_kernel, b=b, t=t, n=n, e=e,
                               num_heads=H)
    out2 = pl.pallas_call(
        kernel,
        out_shape=jax.ShapeDtypeStruct((M, e), x.dtype),
    )(P1, P2, P3, x.reshape(M, e), *sp, *tp)
    return out2.reshape(b, t, n, e)


# ----------------------------------------------------------------------------
# Pure-JAX reference (same math as torch.nn.MultiheadAttention forward).
# ----------------------------------------------------------------------------
def _mha_ref(x_lne, wi, bi, wo, bo, num_heads):
    L, N, E = x_lne.shape
    hd = E // num_heads
    qkv = jnp.einsum('lne,fe->lnf', x_lne, wi) + bi
    q, k, v = qkv[..., :E], qkv[..., E:2 * E], qkv[..., 2 * E:]

    def split(z):
        return z.reshape(L, N, num_heads, hd).transpose(1, 2, 0, 3)  # (N,H,L,hd)

    q, k, v = split(q), split(k), split(v)
    s = jnp.einsum('nhqd,nhkd->nhqk', q, k) / jnp.sqrt(jnp.float32(hd))
    p = jax.nn.softmax(s, axis=-1)
    o = jnp.einsum('nhqk,nhkd->nhqd', p, v)
    o = o.transpose(2, 0, 1, 3).reshape(L, N, E)
    return jnp.einsum('lne,fe->lnf', o, wo) + bo


def spatio_temporal_attention_ref(x, params, num_heads):
    b, t, n, e = x.shape
    xs = x.reshape(b * t, n, e)
    xs = _mha_ref(xs, params["sp_wi"], params["sp_bi"],
                  params["sp_wo"], params["sp_bo"], num_heads)
    xs = xs.reshape(b, t, n, e).transpose(0, 2, 1, 3).reshape(b * n, t, e)
    xt = _mha_ref(xs, params["tp_wi"], params["tp_bi"],
                  params["tp_wo"], params["tp_bo"], num_heads)
    return xt.reshape(b, n, t, e).transpose(0, 2, 1, 3)


# ----------------------------------------------------------------------------
# Deterministic parameter init (matches shapes of nn.MultiheadAttention:
# in_proj_weight (3e,e), in_proj_bias (3e,), out_proj weight (e,e)/bias (e,)).
# ----------------------------------------------------------------------------
def init_params(key, embed_size):
    e = embed_size
    ks = jax.random.split(key, 4)

    def xavier(k, shape):
        fan_out, fan_in = shape
        lim = (6.0 / (fan_in + fan_out)) ** 0.5
        return jax.random.uniform(k, shape, jnp.float32, -lim, lim)

    return {
        "sp_wi": xavier(ks[0], (3 * e, e)),
        "sp_bi": jnp.zeros((3 * e,), jnp.float32),
        "sp_wo": xavier(ks[1], (e, e)),
        "sp_bo": jnp.zeros((e,), jnp.float32),
        "tp_wi": xavier(ks[2], (3 * e, e)),
        "tp_bi": jnp.zeros((3 * e,), jnp.float32),
        "tp_wo": xavier(ks[3], (e, e)),
        "tp_bo": jnp.zeros((e,), jnp.float32),
    }


if __name__ == "__main__":
    b, t, n, e = 2, 8, 4, 32
    num_heads = 4

    key = jax.random.PRNGKey(0)
    kx, kp = jax.random.split(key)
    x = jax.random.normal(kx, (b, t, n, e), dtype=jnp.float32)
    params = init_params(kp, e)

    fwd = jax.jit(functools.partial(spatio_temporal_attention,
                                    num_heads=num_heads))
    out = jax.block_until_ready(fwd(x, params))

    ref = spatio_temporal_attention_ref(x, params, num_heads)
    assert out.shape == (b, t, n, e), out.shape
    # Tolerance relaxed vs. the pure-f32 XLA reference only because the kernel
    # uses the EUP approximate reciprocal for the softmax normalization.
    assert jnp.allclose(out, ref, atol=1e-2, rtol=1e-2), \
        float(jnp.max(jnp.abs(out - ref)))
    print("KERNEL_OK")
</pallas_src>

<mosaic_0001>
module attributes {stable_mosaic.version = 11 : i64} {
  func.func @_st_attn_kernel(%arg0: memref<64x64xf32, #tpu.memory_space<vmem>>, %arg1: memref<64x64xf32, #tpu.memory_space<vmem>>, %arg2: memref<64x64xf32, #tpu.memory_space<vmem>>, %arg3: memref<64x32xf32, #tpu.memory_space<vmem>>, %arg4: memref<3x32x32xf32, #tpu.memory_space<vmem>>, %arg5: memref<3x1x32xf32, #tpu.memory_space<vmem>>, %arg6: memref<4x8x32xf32, #tpu.memory_space<vmem>>, %arg7: memref<1x32xf32, #tpu.memory_space<vmem>>, %arg8: memref<3x32x32xf32, #tpu.memory_space<vmem>>, %arg9: memref<3x1x32xf32, #tpu.memory_space<vmem>>, %arg10: memref<4x8x32xf32, #tpu.memory_space<vmem>>, %arg11: memref<1x32xf32, #tpu.memory_space<vmem>>, %arg12: memref<64x32xf32, #tpu.memory_space<vmem>>) attributes {dimension_semantics = [], scalar_prefetch = 0 : i64, scratch_operands = 0 : i64, tpu.core_type = #tpu.core_type<tc>} {
    %c0 = arith.constant 0 : index
    %c0_0 = arith.constant 0 : index
    %0 = vector.load %arg3[%c0, %c0_0] : memref<64x32xf32, #tpu.memory_space<vmem>>, vector<64x32xf32>
    %c0_1 = arith.constant 0 : index
    %c0_2 = arith.constant 0 : index
    %1 = vector.load %arg0[%c0_1, %c0_2] : memref<64x64xf32, #tpu.memory_space<vmem>>, vector<64x64xf32>
    %cst = arith.constant dense<0.000000e+00> : vector<64x32xf32>
    %2 = tpu.matmul %1, %0, %cst {dimension_numbers = #tpu.dot_dimension_numbers<[1], [0], [0], [1], [0, 0, 1, 1], [], []>} : vector<64x64xf32>, vector<64x32xf32>, vector<64x32xf32> -> vector<64x32xf32>
    %c0_3 = arith.constant 0 : index
    %c0_4 = arith.constant 0 : index
    %c0_5 = arith.constant 0 : index
    %3 = vector.load %arg4[%c0_3, %c0_4, %c0_5] : memref<3x32x32xf32, #tpu.memory_space<vmem>>, vector<1x32x32xf32>
    %4 = vector.shape_cast %3 : vector<1x32x32xf32> to vector<32x32xf32>
    %cst_6 = arith.constant dense<0.000000e+00> : vector<64x32xf32>
    %5 = tpu.matmul %2, %4, %cst_6 {dimension_numbers = #tpu.dot_dimension_numbers<[1], [0], [0], [1], [0, 0, 1, 1], [], []>} : vector<64x32xf32>, vector<32x32xf32>, vector<64x32xf32> -> vector<64x32xf32>
    %c0_7 = arith.constant 0 : index
    %c0_8 = arith.constant 0 : index
    %c0_9 = arith.constant 0 : index
    %6 = vector.load %arg5[%c0_7, %c0_8, %c0_9] : memref<3x1x32xf32, #tpu.memory_space<vmem>>, vector<1x1x32xf32>
    %7 = vector.shape_cast %6 : vector<1x1x32xf32> to vector<1x32xf32>
    %8 = vector.broadcast %7 : vector<1x32xf32> to vector<64x32xf32>
    %9 = arith.addf %5, %8 : vector<64x32xf32>
    %10 = vector.shape_cast %9 : vector<64x32xf32> to vector<4x16x32xf32>
    %c1 = arith.constant 1 : index
    %c0_10 = arith.constant 0 : index
    %c0_11 = arith.constant 0 : index
    %11 = vector.load %arg4[%c1, %c0_10, %c0_11] : memref<3x32x32xf32, #tpu.memory_space<vmem>>, vector<1x32x32xf32>
    %12 = vector.shape_cast %11 : vector<1x32x32xf32> to vector<32x32xf32>
    %cst_12 = arith.constant dense<0.000000e+00> : vector<64x32xf32>
    %13 = tpu.matmul %2, %12, %cst_12 {dimension_numbers = #tpu.dot_dimension_numbers<[1], [0], [0], [1], [0, 0, 1, 1], [], []>} : vector<64x32xf32>, vector<32x32xf32>, vector<64x32xf32> -> vector<64x32xf32>
    %c1_13 = arith.constant 1 : index
    %c0_14 = arith.constant 0 : index
    %c0_15 = arith.constant 0 : index
    %14 = vector.load %arg5[%c1_13, %c0_14, %c0_15] : memref<3x1x32xf32, #tpu.memory_space<vmem>>, vector<1x1x32xf32>
    %15 = vector.shape_cast %14 : vector<1x1x32xf32> to vector<1x32xf32>
    %16 = vector.broadcast %15 : vector<1x32xf32> to vector<64x32xf32>
    %17 = arith.addf %13, %16 : vector<64x32xf32>
    %18 = vector.shape_cast %17 : vector<64x32xf32> to vector<4x16x32xf32>
    %c2 = arith.constant 2 : index
    %c0_16 = arith.constant 0 : index
    %c0_17 = arith.constant 0 : index
    %19 = vector.load %arg4[%c2, %c0_16, %c0_17] : memref<3x32x32xf32, #tpu.memory_space<vmem>>, vector<1x32x32xf32>
    %20 = vector.shape_cast %19 : vector<1x32x32xf32> to vector<32x32xf32>
    %cst_18 = arith.constant dense<0.000000e+00> : vector<64x32xf32>
    %21 = tpu.matmul %2, %20, %cst_18 {dimension_numbers = #tpu.dot_dimension_numbers<[1], [0], [0], [1], [0, 0, 1, 1], [], []>} : vector<64x32xf32>, vector<32x32xf32>, vector<64x32xf32> -> vector<64x32xf32>
    %c2_19 = arith.constant 2 : index
    %c0_20 = arith.constant 0 : index
    %c0_21 = arith.constant 0 : index
    %22 = vector.load %arg5[%c2_19, %c0_20, %c0_21] : memref<3x1x32xf32, #tpu.memory_space<vmem>>, vector<1x1x32xf32>
    %23 = vector.shape_cast %22 : vector<1x1x32xf32> to vector<1x32xf32>
    %24 = vector.broadcast %23 : vector<1x32xf32> to vector<64x32xf32>
    %25 = arith.addf %21, %24 : vector<64x32xf32>
    %26 = vector.shape_cast %25 : vector<64x32xf32> to vector<4x16x32xf32>
    %cst_22 = arith.constant 0.000000e+00 : f32
    %27 = vector.broadcast %cst_22 : f32 to vector<64x32xf32>
    %28 = vector.extract_strided_slice %10 {offsets = [0, 0, 0], sizes = [4, 16, 8], strides = [1, 1, 1]} : vector<4x16x32xf32> to vector<4x16x8xf32>
    %29 = vector.extract_strided_slice %18 {offsets = [0, 0, 0], sizes = [4, 16, 8], strides = [1, 1, 1]} : vector<4x16x32xf32> to vector<4x16x8xf32>
    %30 = vector.extract_strided_slice %26 {offsets = [0, 0, 0], sizes = [4, 16, 8], strides = [1, 1, 1]} : vector<4x16x32xf32> to vector<4x16x8xf32>
    %cst_23 = arith.constant dense<0.000000e+00> : vector<4x16x16xf32>
    %31 = tpu.matmul %28, %29, %cst_23 {dimension_numbers = #tpu.dot_dimension_numbers<[2], [2], [1], [1], [0, 0, 0, 1, 1, 1], [0], [0]>} : vector<4x16x8xf32>, vector<4x16x8xf32>, vector<4x16x16xf32> -> vector<4x16x16xf32>
    %cst_24 = arith.constant dense<0xFF800000> : vector<4x16xf32>
    %32 = vector.multi_reduction <maximumf>, %31, %cst_24 [2] : vector<4x16x16xf32> to vector<4x16xf32>
    %33 = vector.shape_cast %32 : vector<4x16xf32> to vector<4x16x1xf32>
    %34 = vector.broadcast %33 : vector<4x16x1xf32> to vector<4x16x16xf32>
    %35 = arith.subf %31, %34 : vector<4x16x16xf32>
    %36 = math.exp %35 : vector<4x16x16xf32>
    %cst_25 = arith.constant dense<0.000000e+00> : vector<4x16xf32>
    %37 = vector.multi_reduction <add>, %36, %cst_25 [2] : vector<4x16x16xf32> to vector<4x16xf32>
    %38 = vector.shape_cast %37 : vector<4x16xf32> to vector<4x16x1xf32>
    %39 = tpu.reciprocal %38 {approx = true} : vector<4x16x1xf32> -> vector<4x16x1xf32>
    %40 = vector.broadcast %39 : vector<4x16x1xf32> to vector<4x16x16xf32>
    %41 = arith.mulf %36, %40 : vector<4x16x16xf32>
    %cst_26 = arith.constant dense<0.000000e+00> : vector<4x16x8xf32>
    %42 = tpu.matmul %41, %30, %cst_26 {dimension_numbers = #tpu.dot_dimension_numbers<[2], [1], [1], [2], [0, 0, 0, 1, 1, 2], [0], [0]>} : vector<4x16x16xf32>, vector<4x16x8xf32>, vector<4x16x8xf32> -> vector<4x16x8xf32>
    %43 = vector.shape_cast %42 : vector<4x16x8xf32> to vector<64x8xf32>
    %c0_27 = arith.constant 0 : index
    %c0_28 = arith.constant 0 : index
    %c0_29 = arith.constant 0 : index
    %44 = vector.load %arg6[%c0_27, %c0_28, %c0_29] : memref<4x8x32xf32, #tpu.memory_space<vmem>>, vector<1x8x32xf32>
    %45 = vector.shape_cast %44 : vector<1x8x32xf32> to vector<8x32xf32>
    %cst_30 = arith.constant dense<0.000000e+00> : vector<64x32xf32>
    %46 = tpu.matmul %43, %45, %cst_30 {dimension_numbers = #tpu.dot_dimension_numbers<[1], [0], [0], [1], [0, 0, 1, 1], [], []>} : vector<64x8xf32>, vector<8x32xf32>, vector<64x32xf32> -> vector<64x32xf32>
    %47 = arith.addf %27, %46 : vector<64x32xf32>
    %48 = vector.extract_strided_slice %10 {offsets = [0, 0, 8], sizes = [4, 16, 8], strides = [1, 1, 1]} : vector<4x16x32xf32> to vector<4x16x8xf32>
    %49 = vector.extract_strided_slice %18 {offsets = [0, 0, 8], sizes = [4, 16, 8], strides = [1, 1, 1]} : vector<4x16x32xf32> to vector<4x16x8xf32>
    %50 = vector.extract_strided_slice %26 {offsets = [0, 0, 8], sizes = [4, 16, 8], strides = [1, 1, 1]} : vector<4x16x32xf32> to vector<4x16x8xf32>
    %cst_31 = arith.constant dense<0.000000e+00> : vector<4x16x16xf32>
    %51 = tpu.matmul %48, %49, %cst_31 {dimension_numbers = #tpu.dot_dimension_numbers<[2], [2], [1], [1], [0, 0, 0, 1, 1, 1], [0], [0]>} : vector<4x16x8xf32>, vector<4x16x8xf32>, vector<4x16x16xf32> -> vector<4x16x16xf32>
    %cst_32 = arith.constant dense<0xFF800000> : vector<4x16xf32>
    %52 = vector.multi_reduction <maximumf>, %51, %cst_32 [2] : vector<4x16x16xf32> to vector<4x16xf32>
    %53 = vector.shape_cast %52 : vector<4x16xf32> to vector<4x16x1xf32>
    %54 = vector.broadcast %53 : vector<4x16x1xf32> to vector<4x16x16xf32>
    %55 = arith.subf %51, %54 : vector<4x16x16xf32>
    %56 = math.exp %55 : vector<4x16x16xf32>
    %cst_33 = arith.constant dense<0.000000e+00> : vector<4x16xf32>
    %57 = vector.multi_reduction <add>, %56, %cst_33 [2] : vector<4x16x16xf32> to vector<4x16xf32>
    %58 = vector.shape_cast %57 : vector<4x16xf32> to vector<4x16x1xf32>
    %59 = tpu.reciprocal %58 {approx = true} : vector<4x16x1xf32> -> vector<4x16x1xf32>
    %60 = vector.broadcast %59 : vector<4x16x1xf32> to vector<4x16x16xf32>
    %61 = arith.mulf %56, %60 : vector<4x16x16xf32>
    %cst_34 = arith.constant dense<0.000000e+00> : vector<4x16x8xf32>
    %62 = tpu.matmul %61, %50, %cst_34 {dimension_numbers = #tpu.dot_dimension_numbers<[2], [1], [1], [2], [0, 0, 0, 1, 1, 2], [0], [0]>} : vector<4x16x16xf32>, vector<4x16x8xf32>, vector<4x16x8xf32> -> vector<4x16x8xf32>
    %63 = vector.shape_cast %62 : vector<4x16x8xf32> to vector<64x8xf32>
    %c1_35 = arith.constant 1 : index
    %c0_36 = arith.constant 0 : index
    %c0_37 = arith.constant 0 : index
    %64 = vector.load %arg6[%c1_35, %c0_36, %c0_37] : memref<4x8x32xf32, #tpu.memory_space<vmem>>, vector<1x8x32xf32>
    %65 = vector.shape_cast %64 : vector<1x8x32xf32> to vector<8x32xf32>
    %cst_38 = arith.constant dense<0.000000e+00> : vector<64x32xf32>
    %66 = tpu.matmul %63, %65, %cst_38 {dimension_numbers = #tpu.dot_dimension_numbers<[1], [0], [0], [1], [0, 0, 1, 1], [], []>} : vector<64x8xf32>, vector<8x32xf32>, vector<64x32xf32> -> vector<64x32xf32>
    %67 = arith.addf %47, %66 : vector<64x32xf32>
    %68 = vector.extract_strided_slice %10 {offsets = [0, 0, 16], sizes = [4, 16, 8], strides = [1, 1, 1]} : vector<4x16x32xf32> to vector<4x16x8xf32>
    %69 = vector.extract_strided_slice %18 {offsets = [0, 0, 16], sizes = [4, 16, 8], strides = [1, 1, 1]} : vector<4x16x32xf32> to vector<4x16x8xf32>
    %70 = vector.extract_strided_slice %26 {offsets = [0, 0, 16], sizes = [4, 16, 8], strides = [1, 1, 1]} : vector<4x16x32xf32> to vector<4x16x8xf32>
    %cst_39 = arith.constant dense<0.000000e+00> : vector<4x16x16xf32>
    %71 = tpu.matmul %68, %69, %cst_39 {dimension_numbers = #tpu.dot_dimension_numbers<[2], [2], [1], [1], [0, 0, 0, 1, 1, 1], [0], [0]>} : vector<4x16x8xf32>, vector<4x16x8xf32>, vector<4x16x16xf32> -> vector<4x16x16xf32>
    %cst_40 = arith.constant dense<0xFF800000> : vector<4x16xf32>
    %72 = vector.multi_reduction <maximumf>, %71, %cst_40 [2] : vector<4x16x16xf32> to vector<4x16xf32>
    %73 = vector.shape_cast %72 : vector<4x16xf32> to vector<4x16x1xf32>
    %74 = vector.broadcast %73 : vector<4x16x1xf32> to vector<4x16x16xf32>
    %75 = arith.subf %71, %74 : vector<4x16x16xf32>
    %76 = math.exp %75 : vector<4x16x16xf32>
    %cst_41 = arith.constant dense<0.000000e+00> : vector<4x16xf32>
    %77 = vector.multi_reduction <add>, %76, %cst_41 [2] : vector<4x16x16xf32> to vector<4x16xf32>
    %78 = vector.shape_cast %77 : vector<4x16xf32> to vector<4x16x1xf32>
    %79 = tpu.reciprocal %78 {approx = true} : vector<4x16x1xf32> -> vector<4x16x1xf32>
    %80 = vector.broadcast %79 : vector<4x16x1xf32> to vector<4x16x16xf32>
    %81 = arith.mulf %76, %80 : vector<4x16x16xf32>
    %cst_42 = arith.constant dense<0.000000e+00> : vector<4x16x8xf32>
    %82 = tpu.matmul %81, %70, %cst_42 {dimension_numbers = #tpu.dot_dimension_numbers<[2], [1], [1], [2], [0, 0, 0, 1, 1, 2], [0], [0]>} : vector<4x16x16xf32>, vector<4x16x8xf32>, vector<4x16x8xf32> -> vector<4x16x8xf32>
    %83 = vector.shape_cast %82 : vector<4x16x8xf32> to vector<64x8xf32>
    %c2_43 = arith.constant 2 : index
    %c0_44 = arith.constant 0 : index
    %c0_45 = arith.constant 0 : index
    %84 = vector.load %arg6[%c2_43, %c0_44, %c0_45] : memref<4x8x32xf32, #tpu.memory_space<vmem>>, vector<1x8x32xf32>
    %85 = vector.shape_cast %84 : vector<1x8x32xf32> to vector<8x32xf32>
    %cst_46 = arith.constant dense<0.000000e+00> : vector<64x32xf32>
    %86 = tpu.matmul %83, %85, %cst_46 {dimension_numbers = #tpu.dot_dimension_numbers<[1], [0], [0], [1], [0, 0, 1, 1], [], []>} : vector<64x8xf32>, vector<8x32xf32>, vector<64x32xf32> -> vector<64x32xf32>
    %87 = arith.addf %67, %86 : vector<64x32xf32>
    %88 = vector.extract_strided_slice %10 {offsets = [0, 0, 24], sizes = [4, 16, 8], strides = [1, 1, 1]} : vector<4x16x32xf32> to vector<4x16x8xf32>
    %89 = vector.extract_strided_slice %18 {offsets = [0, 0, 24], sizes = [4, 16, 8], strides = [1, 1, 1]} : vector<4x16x32xf32> to vector<4x16x8xf32>
    %90 = vector.extract_strided_slice %26 {offsets = [0, 0, 24], sizes = [4, 16, 8], strides = [1, 1, 1]} : vector<4x16x32xf32> to vector<4x16x8xf32>
    %cst_47 = arith.constant dense<0.000000e+00> : vector<4x16x16xf32>
    %91 = tpu.matmul %88, %89, %cst_47 {dimension_numbers = #tpu.dot_dimension_numbers<[2], [2], [1], [1], [0, 0, 0, 1, 1, 1], [0], [0]>} : vector<4x16x8xf32>, vector<4x16x8xf32>, vector<4x16x16xf32> -> vector<4x16x16xf32>
    %cst_48 = arith.constant dense<0xFF800000> : vector<4x16xf32>
    %92 = vector.multi_reduction <maximumf>, %91, %cst_48 [2] : vector<4x16x16xf32> to vector<4x16xf32>
    %93 = vector.shape_cast %92 : vector<4x16xf32> to vector<4x16x1xf32>
    %94 = vector.broadcast %93 : vector<4x16x1xf32> to vector<4x16x16xf32>
    %95 = arith.subf %91, %94 : vector<4x16x16xf32>
    %96 = math.exp %95 : vector<4x16x16xf32>
    %cst_49 = arith.constant dense<0.000000e+00> : vector<4x16xf32>
    %97 = vector.multi_reduction <add>, %96, %cst_49 [2] : vector<4x16x16xf32> to vector<4x16xf32>
    %98 = vector.shape_cast %97 : vector<4x16xf32> to vector<4x16x1xf32>
    %99 = tpu.reciprocal %98 {approx = true} : vector<4x16x1xf32> -> vector<4x16x1xf32>
    %100 = vector.broadcast %99 : vector<4x16x1xf32> to vector<4x16x16xf32>
    %101 = arith.mulf %96, %100 : vector<4x16x16xf32>
    %cst_50 = arith.constant dense<0.000000e+00> : vector<4x16x8xf32>
    %102 = tpu.matmul %101, %90, %cst_50 {dimension_numbers = #tpu.dot_dimension_numbers<[2], [1], [1], [2], [0, 0, 0, 1, 1, 2], [0], [0]>} : vector<4x16x16xf32>, vector<4x16x8xf32>, vector<4x16x8xf32> -> vector<4x16x8xf32>
    %103 = vector.shape_cast %102 : vector<4x16x8xf32> to vector<64x8xf32>
    %c3 = arith.constant 3 : index
    %c0_51 = arith.constant 0 : index
    %c0_52 = arith.constant 0 : index
    %104 = vector.load %arg6[%c3, %c0_51, %c0_52] : memref<4x8x32xf32, #tpu.memory_space<vmem>>, vector<1x8x32xf32>
    %105 = vector.shape_cast %104 : vector<1x8x32xf32> to vector<8x32xf32>
    %cst_53 = arith.constant dense<0.000000e+00> : vector<64x32xf32>
    %106 = tpu.matmul %103, %105, %cst_53 {dimension_numbers = #tpu.dot_dimension_numbers<[1], [0], [0], [1], [0, 0, 1, 1], [], []>} : vector<64x8xf32>, vector<8x32xf32>, vector<64x32xf32> -> vector<64x32xf32>
    %107 = arith.addf %87, %106 : vector<64x32xf32>
    %c0_54 = arith.constant 0 : index
    %c0_55 = arith.constant 0 : index
    %108 = vector.load %arg7[%c0_54, %c0_55] : memref<1x32xf32, #tpu.memory_space<vmem>>, vector<1x32xf32>
    %109 = vector.broadcast %108 : vector<1x32xf32> to vector<64x32xf32>
    %110 = arith.addf %107, %109 : vector<64x32xf32>
    %c0_56 = arith.constant 0 : index
    %c0_57 = arith.constant 0 : index
    %111 = vector.load %arg1[%c0_56, %c0_57] : memref<64x64xf32, #tpu.memory_space<vmem>>, vector<64x64xf32>
    %cst_58 = arith.constant dense<0.000000e+00> : vector<64x32xf32>
    %112 = tpu.matmul %111, %110, %cst_58 {dimension_numbers = #tpu.dot_dimension_numbers<[1], [0], [0], [1], [0, 0, 1, 1], [], []>} : vector<64x64xf32>, vector<64x32xf32>, vector<64x32xf32> -> vector<64x32xf32>
    %c0_59 = arith.constant 0 : index
    %c0_60 = arith.constant 0 : index
    %c0_61 = arith.constant 0 : index
    %113 = vector.load %arg8[%c0_59, %c0_60, %c0_61] : memref<3x32x32xf32, #tpu.memory_space<vmem>>, vector<1x32x32xf32>
    %114 = vector.shape_cast %113 : vector<1x32x32xf32> to vector<32x32xf32>
    %cst_62 = arith.constant dense<0.000000e+00> : vector<64x32xf32>
    %115 = tpu.matmul %112, %114, %cst_62 {dimension_numbers = #tpu.dot_dimension_numbers<[1], [0], [0], [1], [0, 0, 1, 1], [], []>} : vector<64x32xf32>, vector<32x32xf32>, vector<64x32xf32> -> vector<64x32xf32>
    %c0_63 = arith.constant 0 : index
    %c0_64 = arith.constant 0 : index
    %c0_65 = arith.constant 0 : index
    %116 = vector.load %arg9[%c0_63, %c0_64, %c0_65] : memref<3x1x32xf32, #tpu.memory_space<vmem>>, vector<1x1x32xf32>
    %117 = vector.shape_cast %116 : vector<1x1x32xf32> to vector<1x32xf32>
    %118 = vector.broadcast %117 : vector<1x32xf32> to vector<64x32xf32>
    %119 = arith.addf %115, %118 : vector<64x32xf32>
    %120 = vector.shape_cast %119 : vector<64x32xf32> to vector<8x8x32xf32>
    %c1_66 = arith.constant 1 : index
    %c0_67 = arith.constant 0 : index
    %c0_68 = arith.constant 0 : index
    %121 = vector.load %arg8[%c1_66, %c0_67, %c0_68] : memref<3x32x32xf32, #tpu.memory_space<vmem>>, vector<1x32x32xf32>
    %122 = vector.shape_cast %121 : vector<1x32x32xf32> to vector<32x32xf32>
    %cst_69 = arith.constant dense<0.000000e+00> : vector<64x32xf32>
    %123 = tpu.matmul %112, %122, %cst_69 {dimension_numbers = #tpu.dot_dimension_numbers<[1], [0], [0], [1], [0, 0, 1, 1], [], []>} : vector<64x32xf32>, vector<32x32xf32>, vector<64x32xf32> -> vector<64x32xf32>
    %c1_70 = arith.constant 1 : index
    %c0_71 = arith.constant 0 : index
    %c0_72 = arith.constant 0 : index
    %124 = vector.load %arg9[%c1_70, %c0_71, %c0_72] : memref<3x1x32xf32, #tpu.memory_space<vmem>>, vector<1x1x32xf32>
    %125 = vector.shape_cast %124 : vector<1x1x32xf32> to vector<1x32xf32>
    %126 = vector.broadcast %125 : vector<1x32xf32> to vector<64x32xf32>
    %127 = arith.addf %123, %126 : vector<64x32xf32>
    %128 = vector.shape_cast %127 : vector<64x32xf32> to vector<8x8x32xf32>
    %c2_73 = arith.constant 2 : index
    %c0_74 = arith.constant 0 : index
    %c0_75 = arith.constant 0 : index
    %129 = vector.load %arg8[%c2_73, %c0_74, %c0_75] : memref<3x32x32xf32, #tpu.memory_space<vmem>>, vector<1x32x32xf32>
    %130 = vector.shape_cast %129 : vector<1x32x32xf32> to vector<32x32xf32>
    %cst_76 = arith.constant dense<0.000000e+00> : vector<64x32xf32>
    %131 = tpu.matmul %112, %130, %cst_76 {dimension_numbers = #tpu.dot_dimension_numbers<[1], [0], [0], [1], [0, 0, 1, 1], [], []>} : vector<64x32xf32>, vector<32x32xf32>, vector<64x32xf32> -> vector<64x32xf32>
    %c2_77 = arith.constant 2 : index
    %c0_78 = arith.constant 0 : index
    %c0_79 = arith.constant 0 : index
    %132 = vector.load %arg9[%c2_77, %c0_78, %c0_79] : memref<3x1x32xf32, #tpu.memory_space<vmem>>, vector<1x1x32xf32>
    %133 = vector.shape_cast %132 : vector<1x1x32xf32> to vector<1x32xf32>
    %134 = vector.broadcast %133 : vector<1x32xf32> to vector<64x32xf32>
    %135 = arith.addf %131, %134 : vector<64x32xf32>
    %136 = vector.shape_cast %135 : vector<64x32xf32> to vector<8x8x32xf32>
    %cst_80 = arith.constant 0.000000e+00 : f32
    %137 = vector.broadcast %cst_80 : f32 to vector<64x32xf32>
    %138 = vector.extract_strided_slice %120 {offsets = [0, 0, 0], sizes = [8, 8, 8], strides = [1, 1, 1]} : vector<8x8x32xf32> to vector<8x8x8xf32>
    %139 = vector.extract_strided_slice %128 {offsets = [0, 0, 0], sizes = [8, 8, 8], strides = [1, 1, 1]} : vector<8x8x32xf32> to vector<8x8x8xf32>
    %140 = vector.extract_strided_slice %136 {offsets = [0, 0, 0], sizes = [8, 8, 8], strides = [1, 1, 1]} : vector<8x8x32xf32> to vector<8x8x8xf32>
    %cst_81 = arith.constant dense<0.000000e+00> : vector<8x8x8xf32>
    %141 = tpu.matmul %138, %139, %cst_81 {dimension_numbers = #tpu.dot_dimension_numbers<[2], [2], [1], [1], [0, 0, 0, 1, 1, 1], [0], [0]>} : vector<8x8x8xf32>, vector<8x8x8xf32>, vector<8x8x8xf32> -> vector<8x8x8xf32>
    %cst_82 = arith.constant dense<0xFF800000> : vector<8x8xf32>
    %142 = vector.multi_reduction <maximumf>, %141, %cst_82 [2] : vector<8x8x8xf32> to vector<8x8xf32>
    %143 = vector.shape_cast %142 : vector<8x8xf32> to vector<8x8x1xf32>
    %144 = vector.broadcast %143 : vector<8x8x1xf32> to vector<8x8x8xf32>
    %145 = arith.subf %141, %144 : vector<8x8x8xf32>
    %146 = math.exp %145 : vector<8x8x8xf32>
    %cst_83 = arith.constant dense<0.000000e+00> : vector<8x8xf32>
    %147 = vector.multi_reduction <add>, %146, %cst_83 [2] : vector<8x8x8xf32> to vector<8x8xf32>
    %148 = vector.shape_cast %147 : vector<8x8xf32> to vector<8x8x1xf32>
    %149 = tpu.reciprocal %148 {approx = true} : vector<8x8x1xf32> -> vector<8x8x1xf32>
    %150 = vector.broadcast %149 : vector<8x8x1xf32> to vector<8x8x8xf32>
    %151 = arith.mulf %146, %150 : vector<8x8x8xf32>
    %cst_84 = arith.constant dense<0.000000e+00> : vector<8x8x8xf32>
    %152 = tpu.matmul %151, %140, %cst_84 {dimension_numbers = #tpu.dot_dimension_numbers<[2], [1], [1], [2], [0, 0, 0, 1, 1, 2], [0], [0]>} : vector<8x8x8xf32>, vector<8x8x8xf32>, vector<8x8x8xf32> -> vector<8x8x8xf32>
    %153 = vector.shape_cast %152 : vector<8x8x8xf32> to vector<64x8xf32>
    %c0_85 = arith.constant 0 : index
    %c0_86 = arith.constant 0 : index
    %c0_87 = arith.constant 0 : index
    %154 = vector.load %arg10[%c0_85, %c0_86, %c0_87] : memref<4x8x32xf32, #tpu.memory_space<vmem>>, vector<1x8x32xf32>
    %155 = vector.shape_cast %154 : vector<1x8x32xf32> to vector<8x32xf32>
    %cst_88 = arith.constant dense<0.000000e+00> : vector<64x32xf32>
    %156 = tpu.matmul %153, %155, %cst_88 {dimension_numbers = #tpu.dot_dimension_numbers<[1], [0], [0], [1], [0, 0, 1, 1], [], []>} : vector<64x8xf32>, vector<8x32xf32>, vector<64x32xf32> -> vector<64x32xf32>
    %157 = arith.addf %137, %156 : vector<64x32xf32>
    %158 = vector.extract_strided_slice %120 {offsets = [0, 0, 8], sizes = [8, 8, 8], strides = [1, 1, 1]} : vector<8x8x32xf32> to vector<8x8x8xf32>
    %159 = vector.extract_strided_slice %128 {offsets = [0, 0, 8], sizes = [8, 8, 8], strides = [1, 1, 1]} : vector<8x8x32xf32> to vector<8x8x8xf32>
    %160 = vector.extract_strided_slice %136 {offsets = [0, 0, 8], sizes = [8, 8, 8], strides = [1, 1, 1]} : vector<8x8x32xf32> to vector<8x8x8xf32>
    %cst_89 = arith.constant dense<0.000000e+00> : vector<8x8x8xf32>
    %161 = tpu.matmul %158, %159, %cst_89 {dimension_numbers = #tpu.dot_dimension_numbers<[2], [2], [1], [1], [0, 0, 0, 1, 1, 1], [0], [0]>} : vector<8x8x8xf32>, vector<8x8x8xf32>, vector<8x8x8xf32> -> vector<8x8x8xf32>
    %cst_90 = arith.constant dense<0xFF800000> : vector<8x8xf32>
    %162 = vector.multi_reduction <maximumf>, %161, %cst_90 [2] : vector<8x8x8xf32> to vector<8x8xf32>
    %163 = vector.shape_cast %162 : vector<8x8xf32> to vector<8x8x1xf32>
    %164 = vector.broadcast %163 : vector<8x8x1xf32> to vector<8x8x8xf32>
    %165 = arith.subf %161, %164 : vector<8x8x8xf32>
    %166 = math.exp %165 : vector<8x8x8xf32>
    %cst_91 = arith.constant dense<0.000000e+00> : vector<8x8xf32>
    %167 = vector.multi_reduction <add>, %166, %cst_91 [2] : vector<8x8x8xf32> to vector<8x8xf32>
    %168 = vector.shape_cast %167 : vector<8x8xf32> to vector<8x8x1xf32>
    %169 = tpu.reciprocal %168 {approx = true} : vector<8x8x1xf32> -> vector<8x8x1xf32>
    %170 = vector.broadcast %169 : vector<8x8x1xf32> to vector<8x8x8xf32>
    %171 = arith.mulf %166, %170 : vector<8x8x8xf32>
    %cst_92 = arith.constant dense<0.000000e+00> : vector<8x8x8xf32>
    %172 = tpu.matmul %171, %160, %cst_92 {dimension_numbers = #tpu.dot_dimension_numbers<[2], [1], [1], [2], [0, 0, 0, 1, 1, 2], [0], [0]>} : vector<8x8x8xf32>, vector<8x8x8xf32>, vector<8x8x8xf32> -> vector<8x8x8xf32>
    %173 = vector.shape_cast %172 : vector<8x8x8xf32> to vector<64x8xf32>
    %c1_93 = arith.constant 1 : index
    %c0_94 = arith.constant 0 : index
    %c0_95 = arith.constant 0 : index
    %174 = vector.load %arg10[%c1_93, %c0_94, %c0_95] : memref<4x8x32xf32, #tpu.memory_space<vmem>>, vector<1x8x32xf32>
    %175 = vector.shape_cast %174 : vector<1x8x32xf32> to vector<8x32xf32>
    %cst_96 = arith.constant dense<0.000000e+00> : vector<64x32xf32>
    %176 = tpu.matmul %173, %175, %cst_96 {dimension_numbers = #tpu.dot_dimension_numbers<[1], [0], [0], [1], [0, 0, 1, 1], [], []>} : vector<64x8xf32>, vector<8x32xf32>, vector<64x32xf32> -> vector<64x32xf32>
    %177 = arith.addf %157, %176 : vector<64x32xf32>
    %178 = vector.extract_strided_slice %120 {offsets = [0, 0, 16], sizes = [8, 8, 8], strides = [1, 1, 1]} : vector<8x8x32xf32> to vector<8x8x8xf32>
    %179 = vector.extract_strided_slice %128 {offsets = [0, 0, 16], sizes = [8, 8, 8], strides = [1, 1, 1]} : vector<8x8x32xf32> to vector<8x8x8xf32>
    %180 = vector.extract_strided_slice %136 {offsets = [0, 0, 16], sizes = [8, 8, 8], strides = [1, 1, 1]} : vector<8x8x32xf32> to vector<8x8x8xf32>
    %cst_97 = arith.constant dense<0.000000e+00> : vector<8x8x8xf32>
    %181 = tpu.matmul %178, %179, %cst_97 {dimension_numbers = #tpu.dot_dimension_numbers<[2], [2], [1], [1], [0, 0, 0, 1, 1, 1], [0], [0]>} : vector<8x8x8xf32>, vector<8x8x8xf32>, vector<8x8x8xf32> -> vector<8x8x8xf32>
    %cst_98 = arith.constant dense<0xFF800000> : vector<8x8xf32>
    %182 = vector.multi_reduction <maximumf>, %181, %cst_98 [2] : vector<8x8x8xf32> to vector<8x8xf32>
    %183 = vector.shape_cast %182 : vector<8x8xf32> to vector<8x8x1xf32>
    %184 = vector.broadcast %183 : vector<8x8x1xf32> to vector<8x8x8xf32>
    %185 = arith.subf %181, %184 : vector<8x8x8xf32>
    %186 = math.exp %185 : vector<8x8x8xf32>
    %cst_99 = arith.constant dense<0.000000e+00> : vector<8x8xf32>
    %187 = vector.multi_reduction <add>, %186, %cst_99 [2] : vector<8x8x8xf32> to vector<8x8xf32>
    %188 = vector.shape_cast %187 : vector<8x8xf32> to vector<8x8x1xf32>
    %189 = tpu.reciprocal %188 {approx = true} : vector<8x8x1xf32> -> vector<8x8x1xf32>
    %190 = vector.broadcast %189 : vector<8x8x1xf32> to vector<8x8x8xf32>
    %191 = arith.mulf %186, %190 : vector<8x8x8xf32>
    %cst_100 = arith.constant dense<0.000000e+00> : vector<8x8x8xf32>
    %192 = tpu.matmul %191, %180, %cst_100 {dimension_numbers = #tpu.dot_dimension_numbers<[2], [1], [1], [2], [0, 0, 0, 1, 1, 2], [0], [0]>} : vector<8x8x8xf32>, vector<8x8x8xf32>, vector<8x8x8xf32> -> vector<8x8x8xf32>
    %193 = vector.shape_cast %192 : vector<8x8x8xf32> to vector<64x8xf32>
    %c2_101 = arith.constant 2 : index
    %c0_102 = arith.constant 0 : index
    %c0_103 = arith.constant 0 : index
    %194 = vector.load %arg10[%c2_101, %c0_102, %c0_103] : memref<4x8x32xf32, #tpu.memory_space<vmem>>, vector<1x8x32xf32>
    %195 = vector.shape_cast %194 : vector<1x8x32xf32> to vector<8x32xf32>
    %cst_104 = arith.constant dense<0.000000e+00> : vector<64x32xf32>
    %196 = tpu.matmul %193, %195, %cst_104 {dimension_numbers = #tpu.dot_dimension_numbers<[1], [0], [0], [1], [0, 0, 1, 1], [], []>} : vector<64x8xf32>, vector<8x32xf32>, vector<64x32xf32> -> vector<64x32xf32>
    %197 = arith.addf %177, %196 : vector<64x32xf32>
    %198 = vector.extract_strided_slice %120 {offsets = [0, 0, 24], sizes = [8, 8, 8], strides = [1, 1, 1]} : vector<8x8x32xf32> to vector<8x8x8xf32>
    %199 = vector.extract_strided_slice %128 {offsets = [0, 0, 24], sizes = [8, 8, 8], strides = [1, 1, 1]} : vector<8x8x32xf32> to vector<8x8x8xf32>
    %200 = vector.extract_strided_slice %136 {offsets = [0, 0, 24], sizes = [8, 8, 8], strides = [1, 1, 1]} : vector<8x8x32xf32> to vector<8x8x8xf32>
    %cst_105 = arith.constant dense<0.000000e+00> : vector<8x8x8xf32>
    %201 = tpu.matmul %198, %199, %cst_105 {dimension_numbers = #tpu.dot_dimension_numbers<[2], [2], [1], [1], [0, 0, 0, 1, 1, 1], [0], [0]>} : vector<8x8x8xf32>, vector<8x8x8xf32>, vector<8x8x8xf32> -> vector<8x8x8xf32>
    %cst_106 = arith.constant dense<0xFF800000> : vector<8x8xf32>
    %202 = vector.multi_reduction <maximumf>, %201, %cst_106 [2] : vector<8x8x8xf32> to vector<8x8xf32>
    %203 = vector.shape_cast %202 : vector<8x8xf32> to vector<8x8x1xf32>
    %204 = vector.broadcast %203 : vector<8x8x1xf32> to vector<8x8x8xf32>
    %205 = arith.subf %201, %204 : vector<8x8x8xf32>
    %206 = math.exp %205 : vector<8x8x8xf32>
    %cst_107 = arith.constant dense<0.000000e+00> : vector<8x8xf32>
    %207 = vector.multi_reduction <add>, %206, %cst_107 [2] : vector<8x8x8xf32> to vector<8x8xf32>
    %208 = vector.shape_cast %207 : vector<8x8xf32> to vector<8x8x1xf32>
    %209 = tpu.reciprocal %208 {approx = true} : vector<8x8x1xf32> -> vector<8x8x1xf32>
    %210 = vector.broadcast %209 : vector<8x8x1xf32> to vector<8x8x8xf32>
    %211 = arith.mulf %206, %210 : vector<8x8x8xf32>
    %cst_108 = arith.constant dense<0.000000e+00> : vector<8x8x8xf32>
    %212 = tpu.matmul %211, %200, %cst_108 {dimension_numbers = #tpu.dot_dimension_numbers<[2], [1], [1], [2], [0, 0, 0, 1, 1, 2], [0], [0]>} : vector<8x8x8xf32>, vector<8x8x8xf32>, vector<8x8x8xf32> -> vector<8x8x8xf32>
    %213 = vector.shape_cast %212 : vector<8x8x8xf32> to vector<64x8xf32>
    %c3_109 = arith.constant 3 : index
    %c0_110 = arith.constant 0 : index
    %c0_111 = arith.constant 0 : index
    %214 = vector.load %arg10[%c3_109, %c0_110, %c0_111] : memref<4x8x32xf32, #tpu.memory_space<vmem>>, vector<1x8x32xf32>
    %215 = vector.shape_cast %214 : vector<1x8x32xf32> to vector<8x32xf32>
    %cst_112 = arith.constant dense<0.000000e+00> : vector<64x32xf32>
    %216 = tpu.matmul %213, %215, %cst_112 {dimension_numbers = #tpu.dot_dimension_numbers<[1], [0], [0], [1], [0, 0, 1, 1], [], []>} : vector<64x8xf32>, vector<8x32xf32>, vector<64x32xf32> -> vector<64x32xf32>
    %217 = arith.addf %197, %216 : vector<64x32xf32>
    %c0_113 = arith.constant 0 : index
    %c0_114 = arith.constant 0 : index
    %218 = vector.load %arg11[%c0_113, %c0_114] : memref<1x32xf32, #tpu.memory_space<vmem>>, vector<1x32xf32>
    %219 = vector.broadcast %218 : vector<1x32xf32> to vector<64x32xf32>
    %220 = arith.addf %217, %219 : vector<64x32xf32>
    %c0_115 = arith.constant 0 : index
    %c0_116 = arith.constant 0 : index
    %221 = vector.load %arg2[%c0_115, %c0_116] : memref<64x64xf32, #tpu.memory_space<vmem>>, vector<64x64xf32>
    %cst_117 = arith.constant dense<0.000000e+00> : vector<64x32xf32>
    %222 = tpu.matmul %221, %220, %cst_117 {dimension_numbers = #tpu.dot_dimension_numbers<[1], [0], [0], [1], [0, 0, 1, 1], [], []>} : vector<64x64xf32>, vector<64x32xf32>, vector<64x32xf32> -> vector<64x32xf32>
    %c0_118 = arith.constant 0 : index
    %c0_119 = arith.constant 0 : index
    %223 = vector.load %arg12[%c0_118, %c0_119] : memref<64x32xf32, #tpu.memory_space<vmem>>, vector<64x32xf32>
    tpu.vector_store %arg12[%c0_118, %c0_119], %222 {strides = array<i32>} : memref<64x32xf32, #tpu.memory_space<vmem>>, vector<64x32xf32>,
    return
  }
}

</mosaic_0001>

<llo_original>
// kernel: spatio_temporal_attention.1
$region0: #{spatio_temporal_attention.1}
  #allocation0 [shape = 'u32[]', space=smem, size = 0x4, offset = 0x4, fixed_abs, tag = 'smem constant byte address 0x4 - core index']
  #allocation1 [shape = 'u32[72,128]{1,0:T(1,128)}', space=vmem, size = 0x9000, scoped, tag = 'internal scratch']
  %s0 = inlined_call_operand.vmem [shape: f32[64,64], index: 0, kind: input, shape index: {}]
  %s1 = inlined_call_operand.vmem [shape: f32[64,64], index: 1, kind: input, shape index: {}]
  %s2 = inlined_call_operand.vmem [shape: f32[64,64], index: 2, kind: input, shape index: {}]
  %s3 = inlined_call_operand.vmem [shape: f32[64,32], index: 3, kind: input, shape index: {}]
  %s4 = inlined_call_operand.vmem [shape: f32[3,32,32], index: 4, kind: input, shape index: {}]
  %s5 = inlined_call_operand.vmem [shape: f32[3,1,32], index: 5, kind: input, shape index: {}]
  %s6 = inlined_call_operand.vmem [shape: f32[4,8,32], index: 6, kind: input, shape index: {}]
  %s7 = inlined_call_operand.vmem [shape: f32[1,32], index: 7, kind: input, shape index: {}]
  %s8 = inlined_call_operand.vmem [shape: f32[3,32,32], index: 8, kind: input, shape index: {}]
  %s9 = inlined_call_operand.vmem [shape: f32[3,1,32], index: 9, kind: input, shape index: {}]
  %s10 = inlined_call_operand.vmem [shape: f32[4,8,32], index: 10, kind: input, shape index: {}]
  %s11 = inlined_call_operand.vmem [shape: f32[1,32], index: 11, kind: input, shape index: {}]
  %s12 = inlined_call_operand.hbm [shape: f32[64,32], index: 12, kind: output, shape index: {}]
  %s13 = sld [smem:[#allocation0]]
  $region58: #{spatio_temporal_attention.1} parent=0
    _
  %s15 = ssub.s32 1, %s13
  %s16 = scalar_select 0, %s15, %s13
  $region1: #{spatio_temporal_attention.1} parent=0
    #allocation2 [shape = 'u8[32768]{0}', space=vmem, size = 0x8000, scoped, tag = 'output window, operand 0, single buffered']
    #allocation3 [shape = 's32[1]{0}', space=sflag, size = 0x4, scoped, tag = 'scoped memory for spatio_temporal_attention.1']
    %17 = vsyncpa [#allocation3], 0
    // Predicated region
    $region2: #{spatio_temporal_attention.1} parent=1 // pred_check
      _
    $region3: #{spatio_temporal_attention.1} parent=1 // pred_check_branch
      %19 = sbr.rel (0) target = $region5
    $region4: #{spatio_temporal_attention.1} parent=1 // pred_region
      _
    $region5: #{spatio_temporal_attention.1} parent=1 // pred_fallthru
      _
    // Predicated region
    $region6: #{spatio_temporal_attention.1} parent=1 // pred_check
      _
    $region7: #{spatio_temporal_attention.1} parent=1 // pred_check_branch
      %21 = sbr.rel (0) target = $region9
    $region8: #{spatio_temporal_attention.1} parent=1 // pred_region
      _
    $region9: #{spatio_temporal_attention.1} parent=1 // pred_fallthru
      _
    // Predicated region
    $region10: #{spatio_temporal_attention.1} parent=1 // pred_check
      _
    $region11: #{spatio_temporal_attention.1} parent=1 // pred_check_branch
      %23 = sbr.rel (0) target = $region13
    $region12: #{spatio_temporal_attention.1} parent=1 // pred_region
      _
    $region13: #{spatio_temporal_attention.1} parent=1 // pred_fallthru
      _
    // Predicated region
    $region14: #{spatio_temporal_attention.1} parent=1 // pred_check
      _
    $region15: #{spatio_temporal_attention.1} parent=1 // pred_check_branch
      %25 = sbr.rel (0) target = $region17
    $region16: #{spatio_temporal_attention.1} parent=1 // pred_region
      _
    $region17: #{spatio_temporal_attention.1} parent=1 // pred_fallthru
      _
    // Predicated region
    $region18: #{spatio_temporal_attention.1} parent=1 // pred_check
      _
    $region19: #{spatio_temporal_attention.1} parent=1 // pred_check_branch
      %27 = sbr.rel (0) target = $region21
    $region20: #{spatio_temporal_attention.1} parent=1 // pred_region
      _
    $region21: #{spatio_temporal_attention.1} parent=1 // pred_fallthru
      _
    // Predicated region
    $region22: #{spatio_temporal_attention.1} parent=1 // pred_check
      _
    $region23: #{spatio_temporal_attention.1} parent=1 // pred_check_branch
      %29 = sbr.rel (0) target = $region25
    $region24: #{spatio_temporal_attention.1} parent=1 // pred_region
      _
    $region25: #{spatio_temporal_attention.1} parent=1 // pred_fallthru
      _
    // Predicated region
    $region26: #{spatio_temporal_attention.1} parent=1 // pred_check
      _
    $region27: #{spatio_temporal_attention.1} parent=1 // pred_check_branch
      %31 = sbr.rel (0) target = $region29
    $region28: #{spatio_temporal_attention.1} parent=1 // pred_region
      _
    $region29: #{spatio_temporal_attention.1} parent=1 // pred_fallthru
      _
    // Predicated region
    $region30: #{spatio_temporal_attention.1} parent=1 // pred_check
      _
    $region31: #{spatio_temporal_attention.1} parent=1 // pred_check_branch
      %33 = sbr.rel (0) target = $region33
    $region32: #{spatio_temporal_attention.1} parent=1 // pred_region
      _
    $region33: #{spatio_temporal_attention.1} parent=1 // pred_fallthru
      _
    // Predicated region
    $region34: #{spatio_temporal_attention.1} parent=1 // pred_check
      _
    $region35: #{spatio_temporal_attention.1} parent=1 // pred_check_branch
      %35 = sbr.rel (0) target = $region37
    $region36: #{spatio_temporal_attention.1} parent=1 // pred_region
      _
    $region37: #{spatio_temporal_attention.1} parent=1 // pred_fallthru
      _
    // Predicated region
    $region38: #{spatio_temporal_attention.1} parent=1 // pred_check
      _
    $region39: #{spatio_temporal_attention.1} parent=1 // pred_check_branch
      %37 = sbr.rel (0) target = $region41
    $region40: #{spatio_temporal_attention.1} parent=1 // pred_region
      _
    $region41: #{spatio_temporal_attention.1} parent=1 // pred_fallthru
      _
    // Predicated region
    $region42: #{spatio_temporal_attention.1} parent=1 // pred_check
      _
    $region43: #{spatio_temporal_attention.1} parent=1 // pred_check_branch
      %39 = sbr.rel (0) target = $region45
    $region44: #{spatio_temporal_attention.1} parent=1 // pred_region
      _
    $region45: #{spatio_temporal_attention.1} parent=1 // pred_fallthru
      _
    // Predicated region
    $region46: #{spatio_temporal_attention.1} parent=1 // pred_check
      _
    $region47: #{spatio_temporal_attention.1} parent=1 // pred_check_branch
      %41 = sbr.rel (0) target = $region49
    $region48: #{spatio_temporal_attention.1} parent=1 // pred_region
      _
    $region49: #{spatio_temporal_attention.1} parent=1 // pred_fallthru
      _
    %v42 = vld [vmem:[%s3] sm:$0xff]
    %v43 = vld [vmem:[%s3 + $0x8] sm:$0xff]
    %v44 = vld [vmem:[%s3 + $0x10] sm:$0xff]
    %v45 = vld [vmem:[%s3 + $0x18] sm:$0xff]
    %v46 = vld [vmem:[%s3 + $0x20] sm:$0xff]
    %v47 = vld [vmem:[%s3 + $0x28] sm:$0xff]
    %v48 = vld [vmem:[%s3 + $0x30] sm:$0xff]
    %v49 = vld [vmem:[%s3 + $0x38] sm:$0xff]
    %v50 = vld [vmem:[%s0] sm:$0xff]
    %v51 = vld [vmem:[%s0 + $0x8] sm:$0xff]
    %v52 = vld [vmem:[%s0 + $0x10] sm:$0xff]
    %v53 = vld [vmem:[%s0 + $0x18] sm:$0xff]
    %v54 = vld [vmem:[%s0 + $0x20] sm:$0xff]
    %v55 = vld [vmem:[%s0 + $0x28] sm:$0xff]
    %v56 = vld [vmem:[%s0 + $0x30] sm:$0xff]
    %v57 = vld [vmem:[%s0 + $0x38] sm:$0xff]
    %vm58 = vcmask 523264
    %v60 = vsel %vm58, %v50, 0
    %v63 = vsel %vm58, %v51, 0
    %v66 = vsel %vm58, %v52, 0
    %v69 = vsel %vm58, %v53, 0
    %v72 = vsel %vm58, %v54, 0
    %v75 = vsel %vm58, %v55, 0
    %v78 = vsel %vm58, %v56, 0
    %v81 = vsel %vm58, %v57, 0
    %83 = vmatpush.msra.mxu0 0.0
    %84 = vmatpush.msra.mxu0 0.0
    %85 = vmatpush.msra.mxu0 0.0
    %86 = vmatpush.msra.mxu0 0.0
    %87 = vmatpush.msra.mxu0 0.0
    %88 = vmatpush.msra.mxu0 0.0
    %89 = vmatpush.msra.mxu0 0.0
    %90 = vmatpush.msra.mxu0 0.0
    %91 = vmatpush.msra.mxu0 %v49
    %92 = vmatpush.msra.mxu0 %v48
    %93 = vmatpush.msra.mxu0 %v47
    %94 = vmatpush.msra.mxu0 %v46
    %95 = vmatpush.msra.mxu0 %v45
    %96 = vmatpush.msra.mxu0 %v44
    %97 = vmatpush.msra.mxu0 %v43
    %98 = vmatpush.msra.mxu0 %v42
    %99 = vmatmul.f32.gmra.mxu0 %v60
    %v100 = vpop.f32.mrf.mxu0
    %v101 = vadd.f32 0.0, %v100
    %102 = vmatmul.f32.gmra.mxu0 %v63
    %v103 = vpop.f32.mrf.mxu0
    %v104 = vadd.f32 0.0, %v103
    %105 = vmatmul.f32.gmra.mxu0 %v66
    %v106 = vpop.f32.mrf.mxu0
    %v107 = vadd.f32 0.0, %v106
    %108 = vmatmul.f32.gmra.mxu0 %v69
    %v109 = vpop.f32.mrf.mxu0
    %v110 = vadd.f32 0.0, %v109
    %111 = vmatmul.f32.gmra.mxu0 %v72
    %v112 = vpop.f32.mrf.mxu0
    %v113 = vadd.f32 0.0, %v112
    %114 = vmatmul.f32.gmra.mxu0 %v75
    %v115 = vpop.f32.mrf.mxu0
    %v116 = vadd.f32 0.0, %v115
    %117 = vmatmul.f32.gmra.mxu0 %v78
    %v118 = vpop.f32.mrf.mxu0
    %v119 = vadd.f32 0.0, %v118
    %120 = vmatmul.f32.gmra.mxu0 %v81
    %v121 = vpop.f32.mrf.mxu0
    %v122 = vadd.f32 0.0, %v121
    %123 = vdwg.mxu0
    %v124 = vld [vmem:[%s4] sm:$0xff]
    %v125 = vld [vmem:[%s4 + $0x8] sm:$0xff]
    %v126 = vld [vmem:[%s4 + $0x10] sm:$0xff]
    %v127 = vld [vmem:[%s4 + $0x18] sm:$0xff]
    %v128 = vld [vmem:[%s5] sm:$0x1]
    %v130 = vperm.slane %v128, 0
    %vm132 = vcmask 261120
    %v134 = vsel %vm132, %v101, 0
    %v137 = vsel %vm132, %v104, 0
    %v140 = vsel %vm132, %v107, 0
    %v143 = vsel %vm132, %v110, 0
    %v146 = vsel %vm132, %v113, 0
    %v149 = vsel %vm132, %v116, 0
    %v152 = vsel %vm132, %v119, 0
    %v155 = vsel %vm132, %v122, 0
    %157 = vmatpush.msra.mxu0 0.0
    %158 = vmatpush.msra.mxu0 0.0
    %159 = vmatpush.msra.mxu0 0.0
    %160 = vmatpush.msra.mxu0 0.0
    %161 = vmatpush.msra.mxu0 0.0
    %162 = vmatpush.msra.mxu0 0.0
    %163 = vmatpush.msra.mxu0 0.0
    %164 = vmatpush.msra.mxu0 0.0
    %165 = vmatpush.msra.mxu0 0.0
    %166 = vmatpush.msra.mxu0 0.0
    %167 = vmatpush.msra.mxu0 0.0
    %168 = vmatpush.msra.mxu0 0.0
    %169 = vmatpush.msra.mxu0 %v127
    %170 = vmatpush.msra.mxu0 %v126
    %171 = vmatpush.msra.mxu0 %v125
    %172 = vmatpush.msra.mxu0 %v124
    %173 = vmatmul.f32.gmra.mxu0 %v134
    %v174 = vpop.f32.mrf.mxu0
    %v175 = vadd.f32 %v130, %v174
    %176 = vmatmul.f32.gmra.mxu0 %v137
    %v177 = vpop.f32.mrf.mxu0
    %v178 = vadd.f32 %v130, %v177
    %179 = vmatmul.f32.gmra.mxu0 %v140
    %v180 = vpop.f32.mrf.mxu0
    %v181 = vadd.f32 %v130, %v180
    %182 = vmatmul.f32.gmra.mxu0 %v143
    %v183 = vpop.f32.mrf.mxu0
    %v184 = vadd.f32 %v130, %v183
    %185 = vmatmul.f32.gmra.mxu0 %v146
    %v186 = vpop.f32.mrf.mxu0
    %v187 = vadd.f32 %v130, %v186
    %188 = vmatmul.f32.gmra.mxu0 %v149
    %v189 = vpop.f32.mrf.mxu0
    %v190 = vadd.f32 %v130, %v189
    %191 = vmatmul.f32.gmra.mxu0 %v152
    %v192 = vpop.f32.mrf.mxu0
    %v193 = vadd.f32 %v130, %v192
    %194 = vmatmul.f32.gmra.mxu0 %v155
    %v195 = vpop.f32.mrf.mxu0
    %v196 = vadd.f32 %v130, %v195
    %197 = vdwg.mxu0
    %s198 = scalar_lea.vmem %s4, 32
    %v199 = vld [vmem:[%s198] sm:$0xff]
    %v200 = vld [vmem:[%s198 + $0x8] sm:$0xff]
    %v201 = vld [vmem:[%s198 + $0x10] sm:$0xff]
    %v202 = vld [vmem:[%s198 + $0x18] sm:$0xff]
    %s203 = scalar_lea.vmem %s5, 1
    %v204 = vld [vmem:[%s203] sm:$0x1]
    %v206 = vperm.slane %v204, 0
    %208 = vmatpush.msra.mxu0 0.0
    %209 = vmatpush.msra.mxu0 0.0
    %210 = vmatpush.msra.mxu0 0.0
    %211 = vmatpush.msra.mxu0 0.0
    %212 = vmatpush.msra.mxu0 0.0
    %213 = vmatpush.msra.mxu0 0.0
    %214 = vmatpush.msra.mxu0 0.0
    %215 = vmatpush.msra.mxu0 0.0
    %216 = vmatpush.msra.mxu0 0.0
    %217 = vmatpush.msra.mxu0 0.0
    %218 = vmatpush.msra.mxu0 0.0
    %219 = vmatpush.msra.mxu0 0.0
    %220 = vmatpush.msra.mxu0 %v202
    %221 = vmatpush.msra.mxu0 %v201
    %222 = vmatpush.msra.mxu0 %v200
    %223 = vmatpush.msra.mxu0 %v199
    %224 = vmatmul.f32.gmra.mxu0 %v134
    %v225 = vpop.f32.mrf.mxu0
    %v226 = vadd.f32 %v206, %v225
    %227 = vmatmul.f32.gmra.mxu0 %v137
    %v228 = vpop.f32.mrf.mxu0
    %v229 = vadd.f32 %v206, %v228
    %230 = vmatmul.f32.gmra.mxu0 %v140
    %v231 = vpop.f32.mrf.mxu0
    %v232 = vadd.f32 %v206, %v231
    %233 = vmatmul.f32.gmra.mxu0 %v143
    %v234 = vpop.f32.mrf.mxu0
    %v235 = vadd.f32 %v206, %v234
    %236 = vmatmul.f32.gmra.mxu0 %v146
    %v237 = vpop.f32.mrf.mxu0
    %v238 = vadd.f32 %v206, %v237
    %239 = vmatmul.f32.gmra.mxu0 %v149
    %v240 = vpop.f32.mrf.mxu0
    %v241 = vadd.f32 %v206, %v240
    %242 = vmatmul.f32.gmra.mxu0 %v152
    %v243 = vpop.f32.mrf.mxu0
    %v244 = vadd.f32 %v206, %v243
    %245 = vmatmul.f32.gmra.mxu0 %v155
    %v246 = vpop.f32.mrf.mxu0
    %v247 = vadd.f32 %v206, %v246
    %248 = vdwg.mxu0
    %s249 = scalar_lea.vmem %s4, 64
    %v250 = vld [vmem:[%s249] sm:$0xff]
    %v251 = vld [vmem:[%s249 + $0x8] sm:$0xff]
    %v252 = vld [vmem:[%s249 + $0x10] sm:$0xff]
    %v253 = vld [vmem:[%s249 + $0x18] sm:$0xff]
    %s254 = scalar_lea.vmem %s5, 2
    %v255 = vld [vmem:[%s254] sm:$0x1]
    %v257 = vperm.slane %v255, 0
    %259 = vmatpush.msra.mxu0 0.0
    %260 = vmatpush.msra.mxu0 0.0
    %261 = vmatpush.msra.mxu0 0.0
    %262 = vmatpush.msra.mxu0 0.0
    %263 = vmatpush.msra.mxu0 0.0
    %264 = vmatpush.msra.mxu0 0.0
    %265 = vmatpush.msra.mxu0 0.0
    %266 = vmatpush.msra.mxu0 0.0
    %267 = vmatpush.msra.mxu0 0.0
    %268 = vmatpush.msra.mxu0 0.0
    %269 = vmatpush.msra.mxu0 0.0
    %270 = vmatpush.msra.mxu0 0.0
    %271 = vmatpush.msra.mxu0 %v253
    %272 = vmatpush.msra.mxu0 %v252
    %273 = vmatpush.msra.mxu0 %v251
    %274 = vmatpush.msra.mxu0 %v250
    %275 = vmatmul.f32.gmra.mxu0 %v134
    %v276 = vpop.f32.mrf.mxu0
    %v277 = vadd.f32 %v257, %v276
    %278 = vmatmul.f32.gmra.mxu0 %v137
    %v279 = vpop.f32.mrf.mxu0
    %v280 = vadd.f32 %v257, %v279
    %281 = vmatmul.f32.gmra.mxu0 %v140
    %v282 = vpop.f32.mrf.mxu0
    %v283 = vadd.f32 %v257, %v282
    %284 = vmatmul.f32.gmra.mxu0 %v143
    %v285 = vpop.f32.mrf.mxu0
    %v286 = vadd.f32 %v257, %v285
    %287 = vmatmul.f32.gmra.mxu0 %v146
    %v288 = vpop.f32.mrf.mxu0
    %v289 = vadd.f32 %v257, %v288
    %290 = vmatmul.f32.gmra.mxu0 %v149
    %v291 = vpop.f32.mrf.mxu0
    %v292 = vadd.f32 %v257, %v291
    %293 = vmatmul.f32.gmra.mxu0 %v152
    %v294 = vpop.f32.mrf.mxu0
    %v295 = vadd.f32 %v257, %v294
    %296 = vmatmul.f32.gmra.mxu0 %v155
    %v297 = vpop.f32.mrf.mxu0
    %v298 = vadd.f32 %v257, %v297
    %299 = vdwg.mxu0
    %vm300 = vcmask 64512
    %v302 = vsel %vm300, %v175, 0
    %v305 = vsel %vm300, %v178, 0
    %v308 = vsel %vm300, %v226, 0
    %v311 = vsel %vm300, %v229, 0
    %313 = vmatpush.xpose.msra.mxu0 0.0
    %314 = vmatpush.xpose.msra.mxu0 0.0
    %315 = vmatpush.xpose.msra.mxu0 0.0
    %316 = vmatpush.xpose.msra.mxu0 0.0
    %317 = vmatpush.xpose.msra.mxu0 0.0
    %318 = vmatpush.xpose.msra.mxu0 0.0
    %319 = vmatpush.xpose.msra.mxu0 0.0
    %320 = vmatpush.xpose.msra.mxu0 0.0
    %321 = vmatpush.xpose.msra.mxu0 0.0
    %322 = vmatpush.xpose.msra.mxu0 0.0
    %323 = vmatpush.xpose.msra.mxu0 0.0
    %324 = vmatpush.xpose.msra.mxu0 0.0
    %325 = vmatpush.xpose.msra.mxu0 0.0
    %326 = vmatpush.xpose.msra.mxu0 0.0
    %327 = vmatpush.xpose.msra.mxu0 %v311
    %328 = vmatpush.xpose.msra.mxu0 %v308
    %329 = vmatmul.f32.gmra.mxu0 %v302
    %v330 = vpop.f32.mrf.mxu0
    %v331 = vadd.f32 0.0, %v330
    %332 = vmatmul.f32.gmra.mxu0 %v305
    %v333 = vpop.f32.mrf.mxu0
    %v334 = vadd.f32 0.0, %v333
    %335 = vdwg.mxu0
    %v337 = vsel %vm300, %v181, 0
    %v340 = vsel %vm300, %v184, 0
    %v343 = vsel %vm300, %v232, 0
    %v346 = vsel %vm300, %v235, 0
    %348 = vmatpush.xpose.msra.mxu0 0.0
    %349 = vmatpush.xpose.msra.mxu0 0.0
    %350 = vmatpush.xpose.msra.mxu0 0.0
    %351 = vmatpush.xpose.msra.mxu0 0.0
    %352 = vmatpush.xpose.msra.mxu0 0.0
    %353 = vmatpush.xpose.msra.mxu0 0.0
    %354 = vmatpush.xpose.msra.mxu0 0.0
    %355 = vmatpush.xpose.msra.mxu0 0.0
    %356 = vmatpush.xpose.msra.mxu0 0.0
    %357 = vmatpush.xpose.msra.mxu0 0.0
    %358 = vmatpush.xpose.msra.mxu0 0.0
    %359 = vmatpush.xpose.msra.mxu0 0.0
    %360 = vmatpush.xpose.msra.mxu0 0.0
    %361 = vmatpush.xpose.msra.mxu0 0.0
    %362 = vmatpush.xpose.msra.mxu0 %v346
    %363 = vmatpush.xpose.msra.mxu0 %v343
    %364 = vmatmul.f32.gmra.mxu0 %v337
    %v365 = vpop.f32.mrf.mxu0
    %v366 = vadd.f32 0.0, %v365
    %367 = vmatmul.f32.gmra.mxu0 %v340
    %v368 = vpop.f32.mrf.mxu0
    %v369 = vadd.f32 0.0, %v368
    %370 = vdwg.mxu0
    %v372 = vsel %vm300, %v187, 0
    %v375 = vsel %vm300, %v190, 0
    %v378 = vsel %vm300, %v238, 0
    %v381 = vsel %vm300, %v241, 0
    %383 = vmatpush.xpose.msra.mxu0 0.0
    %384 = vmatpush.xpose.msra.mxu0 0.0
    %385 = vmatpush.xpose.msra.mxu0 0.0
    %386 = vmatpush.xpose.msra.mxu0 0.0
    %387 = vmatpush.xpose.msra.mxu0 0.0
    %388 = vmatpush.xpose.msra.mxu0 0.0
    %389 = vmatpush.xpose.msra.mxu0 0.0
    %390 = vmatpush.xpose.msra.mxu0 0.0
    %391 = vmatpush.xpose.msra.mxu0 0.0
    %392 = vmatpush.xpose.msra.mxu0 0.0
    %393 = vmatpush.xpose.msra.mxu0 0.0
    %394 = vmatpush.xpose.msra.mxu0 0.0
    %395 = vmatpush.xpose.msra.mxu0 0.0
    %396 = vmatpush.xpose.msra.mxu0 0.0
    %397 = vmatpush.xpose.msra.mxu0 %v381
    %398 = vmatpush.xpose.msra.mxu0 %v378
    %399 = vmatmul.f32.gmra.mxu0 %v372
    %v400 = vpop.f32.mrf.mxu0
    %v401 = vadd.f32 0.0, %v400
    %402 = vmatmul.f32.gmra.mxu0 %v375
    %v403 = vpop.f32.mrf.mxu0
    %v404 = vadd.f32 0.0, %v403
    %405 = vdwg.mxu0
    %v407 = vsel %vm300, %v193, 0
    %v410 = vsel %vm300, %v196, 0
    %v413 = vsel %vm300, %v244, 0
    %v416 = vsel %vm300, %v247, 0
    %418 = vmatpush.xpose.msra.mxu0 0.0
    %419 = vmatpush.xpose.msra.mxu0 0.0
    %420 = vmatpush.xpose.msra.mxu0 0.0
    %421 = vmatpush.xpose.msra.mxu0 0.0
    %422 = vmatpush.xpose.msra.mxu0 0.0
    %423 = vmatpush.xpose.msra.mxu0 0.0
    %424 = vmatpush.xpose.msra.mxu0 0.0
    %425 = vmatpush.xpose.msra.mxu0 0.0
    %426 = vmatpush.xpose.msra.mxu0 0.0
    %427 = vmatpush.xpose.msra.mxu0 0.0
    %428 = vmatpush.xpose.msra.mxu0 0.0
    %429 = vmatpush.xpose.msra.mxu0 0.0
    %430 = vmatpush.xpose.msra.mxu0 0.0
    %431 = vmatpush.xpose.msra.mxu0 0.0
    %432 = vmatpush.xpose.msra.mxu0 %v416
    %433 = vmatpush.xpose.msra.mxu0 %v413
    %434 = vmatmul.f32.gmra.mxu0 %v407
    %v435 = vpop.f32.mrf.mxu0
    %v436 = vadd.f32 0.0, %v435
    %437 = vmatmul.f32.gmra.mxu0 %v410
    %v438 = vpop.f32.mrf.mxu0
    %v439 = vadd.f32 0.0, %v438
    %440 = vdwg.mxu0
    %vm441 = vcmask 130048
    %v442 = vsel %vm441, %v331, -inf
    %443 = vmax.xlane.f32.xlu0 %v442
    %v444 = vpop.xlane.xlu0 %443
    %v445 = vsel %vm441, %v334, -inf
    %446 = vmax.xlane.f32.xlu0 %v445
    %v447 = vpop.xlane.xlu0 %446
    %v448 = vsel %vm441, %v366, -inf
    %449 = vmax.xlane.f32.xlu0 %v448
    %v450 = vpop.xlane.xlu0 %449
    %v451 = vsel %vm441, %v369, -inf
    %452 = vmax.xlane.f32.xlu0 %v451
    %v453 = vpop.xlane.xlu0 %452
    %v454 = vsel %vm441, %v401, -inf
    %455 = vmax.xlane.f32.xlu0 %v454
    %v456 = vpop.xlane.xlu0 %455
    %v457 = vsel %vm441, %v404, -inf
    %458 = vmax.xlane.f32.xlu0 %v457
    %v459 = vpop.xlane.xlu0 %458
    %v460 = vsel %vm441, %v436, -inf
    %461 = vmax.xlane.f32.xlu0 %v460
    %v462 = vpop.xlane.xlu0 %461
    %v463 = vsel %vm441, %v439, -inf
    %464 = vmax.xlane.f32.xlu0 %v463
    %v465 = vpop.xlane.xlu0 %464
    %v466 = vsub.f32 %v331, %v444
    %v467 = vsub.f32 %v334, %v447
    %v468 = vsub.f32 %v366, %v450
    %v469 = vsub.f32 %v369, %v453
    %v470 = vsub.f32 %v401, %v456
    %v471 = vsub.f32 %v404, %v459
    %v472 = vsub.f32 %v436, %v462
    %v473 = vsub.f32 %v439, %v465
    %v474 = vmul.f32 %v466, 1.442695
    %v475 = vpow.pop %v474
    %v476 = vmul.f32 %v467, 1.442695
    %v477 = vpow.pop %v476
    %v478 = vmul.f32 %v468, 1.442695
    %v479 = vpow.pop %v478
    %v480 = vmul.f32 %v469, 1.442695
    %v481 = vpow.pop %v480
    %v482 = vmul.f32 %v470, 1.442695
    %v483 = vpow.pop %v482
    %v484 = vmul.f32 %v471, 1.442695
    %v485 = vpow.pop %v484
    %v486 = vmul.f32 %v472, 1.442695
    %v487 = vpow.pop %v486
    %v488 = vmul.f32 %v473, 1.442695
    %v489 = vpow.pop %v488
    %v490 = vsel %vm441, %v475, 0.0
    %491 = vadd.xlane.f32.xlu0 %v490
    %v492 = vpop.xlane.xlu0 %491
    %v493 = vsel %vm441, %v477, 0.0
    %494 = vadd.xlane.f32.xlu0 %v493
    %v495 = vpop.xlane.xlu0 %494
    %v496 = vsel %vm441, %v479, 0.0
    %497 = vadd.xlane.f32.xlu0 %v496
    %v498 = vpop.xlane.xlu0 %497
    %v499 = vsel %vm441, %v481, 0.0
    %500 = vadd.xlane.f32.xlu0 %v499
    %v501 = vpop.xlane.xlu0 %500
    %v502 = vsel %vm441, %v483, 0.0
    %503 = vadd.xlane.f32.xlu0 %v502
    %v504 = vpop.xlane.xlu0 %503
    %v505 = vsel %vm441, %v485, 0.0
    %506 = vadd.xlane.f32.xlu0 %v505
    %v507 = vpop.xlane.xlu0 %506
    %v508 = vsel %vm441, %v487, 0.0
    %509 = vadd.xlane.f32.xlu0 %v508
    %v510 = vpop.xlane.xlu0 %509
    %v511 = vsel %vm441, %v489, 0.0
    %512 = vadd.xlane.f32.xlu0 %v511
    %v513 = vpop.xlane.xlu0 %512
    %v514 = vrcp.pop %v492
    %v515 = vrcp.pop %v495
    %v516 = vrcp.pop %v498
    %v517 = vrcp.pop %v501
    %v518 = vrcp.pop %v504
    %v519 = vrcp.pop %v507
    %v520 = vrcp.pop %v510
    %v521 = vrcp.pop %v513
    %v522 = vmul.f32 %v475, %v514
    %v523 = vmul.f32 %v477, %v515
    %v524 = vmul.f32 %v479, %v516
    %v525 = vmul.f32 %v481, %v517
    %v526 = vmul.f32 %v483, %v518
    %v527 = vmul.f32 %v485, %v519
    %v528 = vmul.f32 %v487, %v520
    %v529 = vmul.f32 %v489, %v521
    %v531 = vsel %vm441, %v522, 0
    %v534 = vsel %vm441, %v523, 0
    %536 = vmatpush.msra.mxu0 0.0
    %537 = vmatpush.msra.mxu0 0.0
    %538 = vmatpush.msra.mxu0 0.0
    %539 = vmatpush.msra.mxu0 0.0
    %540 = vmatpush.msra.mxu0 0.0
    %541 = vmatpush.msra.mxu0 0.0
    %542 = vmatpush.msra.mxu0 0.0
    %543 = vmatpush.msra.mxu0 0.0
    %544 = vmatpush.msra.mxu0 0.0
    %545 = vmatpush.msra.mxu0 0.0
    %546 = vmatpush.msra.mxu0 0.0
    %547 = vmatpush.msra.mxu0 0.0
    %548 = vmatpush.msra.mxu0 0.0
    %549 = vmatpush.msra.mxu0 0.0
    %550 = vmatpush.msra.mxu0 %v280
    %551 = vmatpush.msra.mxu0 %v277
    %552 = vmatmul.f32.gmra.mxu0 %v531
    %v553 = vpop.f32.mrf.mxu0
    %v554 = vadd.f32 0.0, %v553
    %555 = vmatmul.f32.gmra.mxu0 %v534
    %v556 = vpop.f32.mrf.mxu0
    %v557 = vadd.f32 0.0, %v556
    %558 = vdwg.mxu0
    %v560 = vsel %vm441, %v524, 0
    %v563 = vsel %vm441, %v525, 0
    %565 = vmatpush.msra.mxu0 0.0
    %566 = vmatpush.msra.mxu0 0.0
    %567 = vmatpush.msra.mxu0 0.0
    %568 = vmatpush.msra.mxu0 0.0
    %569 = vmatpush.msra.mxu0 0.0
    %570 = vmatpush.msra.mxu0 0.0
    %571 = vmatpush.msra.mxu0 0.0
    %572 = vmatpush.msra.mxu0 0.0
    %573 = vmatpush.msra.mxu0 0.0
    %574 = vmatpush.msra.mxu0 0.0
    %575 = vmatpush.msra.mxu0 0.0
    %576 = vmatpush.msra.mxu0 0.0
    %577 = vmatpush.msra.mxu0 0.0
    %578 = vmatpush.msra.mxu0 0.0
    %579 = vmatpush.msra.mxu0 %v286
    %580 = vmatpush.msra.mxu0 %v283
    %581 = vmatmul.f32.gmra.mxu0 %v560
    %v582 = vpop.f32.mrf.mxu0
    %v583 = vadd.f32 0.0, %v582
    %584 = vmatmul.f32.gmra.mxu0 %v563
    %v585 = vpop.f32.mrf.mxu0
    %v586 = vadd.f32 0.0, %v585
    %587 = vdwg.mxu0
    %v589 = vsel %vm441, %v526, 0
    %v592 = vsel %vm441, %v527, 0
    %594 = vmatpush.msra.mxu0 0.0
    %595 = vmatpush.msra.mxu0 0.0
    %596 = vmatpush.msra.mxu0 0.0
    %597 = vmatpush.msra.mxu0 0.0
    %598 = vmatpush.msra.mxu0 0.0
    %599 = vmatpush.msra.mxu0 0.0
    %600 = vmatpush.msra.mxu0 0.0
    %601 = vmatpush.msra.mxu0 0.0
    %602 = vmatpush.msra.mxu0 0.0
    %603 = vmatpush.msra.mxu0 0.0
    %604 = vmatpush.msra.mxu0 0.0
    %605 = vmatpush.msra.mxu0 0.0
    %606 = vmatpush.msra.mxu0 0.0
    %607 = vmatpush.msra.mxu0 0.0
    %608 = vmatpush.msra.mxu0 %v292
    %609 = vmatpush.msra.mxu0 %v289
    %610 = vmatmul.f32.gmra.mxu0 %v589
    %v611 = vpop.f32.mrf.mxu0
    %v612 = vadd.f32 0.0, %v611
    %613 = vmatmul.f32.gmra.mxu0 %v592
    %v614 = vpop.f32.mrf.mxu0
    %v615 = vadd.f32 0.0, %v614
    %616 = vdwg.mxu0
    %v618 = vsel %vm441, %v528, 0
    %v621 = vsel %vm441, %v529, 0
    %623 = vmatpush.msra.mxu0 0.0
    %624 = vmatpush.msra.mxu0 0.0
    %625 = vmatpush.msra.mxu0 0.0
    %626 = vmatpush.msra.mxu0 0.0
    %627 = vmatpush.msra.mxu0 0.0
    %628 = vmatpush.msra.mxu0 0.0
    %629 = vmatpush.msra.mxu0 0.0
    %630 = vmatpush.msra.mxu0 0.0
    %631 = vmatpush.msra.mxu0 0.0
    %632 = vmatpush.msra.mxu0 0.0
    %633 = vmatpush.msra.mxu0 0.0
    %634 = vmatpush.msra.mxu0 0.0
    %635 = vmatpush.msra.mxu0 0.0
    %636 = vmatpush.msra.mxu0 0.0
    %637 = vmatpush.msra.mxu0 %v298
    %638 = vmatpush.msra.mxu0 %v295
    %639 = vmatmul.f32.gmra.mxu0 %v618
    %v640 = vpop.f32.mrf.mxu0
    %v641 = vadd.f32 0.0, %v640
    %642 = vmatmul.f32.gmra.mxu0 %v621
    %v643 = vpop.f32.mrf.mxu0
    %v644 = vadd.f32 0.0, %v643
    %645 = vdwg.mxu0
    %v646 = vld [vmem:[%s6] sm:$0xff]
    %647 = vrot.lane.b32.xlu0 %v175, 120
    %v648 = vpop.permute.xlu0 %647
    %649 = vrot.lane.b32.xlu0 %v178, 120
    %v650 = vpop.permute.xlu0 %649
    %651 = vrot.lane.b32.xlu0 %v226, 120
    %v652 = vpop.permute.xlu0 %651
    %653 = vrot.lane.b32.xlu0 %v229, 120
    %v654 = vpop.permute.xlu0 %653
    %v655 = vsel %vm300, %v648, 0
    %v657 = vsel %vm300, %v650, 0
    %v659 = vsel %vm300, %v652, 0
    %v661 = vsel %vm300, %v654, 0
    %663 = vmatpush.xpose.msra.mxu0 0.0
    %664 = vmatpush.xpose.msra.mxu0 0.0
    %665 = vmatpush.xpose.msra.mxu0 0.0
    %666 = vmatpush.xpose.msra.mxu0 0.0
    %667 = vmatpush.xpose.msra.mxu0 0.0
    %668 = vmatpush.xpose.msra.mxu0 0.0
    %669 = vmatpush.xpose.msra.mxu0 0.0
    %670 = vmatpush.xpose.msra.mxu0 0.0
    %671 = vmatpush.xpose.msra.mxu0 0.0
    %672 = vmatpush.xpose.msra.mxu0 0.0
    %673 = vmatpush.xpose.msra.mxu0 0.0
    %674 = vmatpush.xpose.msra.mxu0 0.0
    %675 = vmatpush.xpose.msra.mxu0 0.0
    %676 = vmatpush.xpose.msra.mxu0 0.0
    %677 = vmatpush.xpose.msra.mxu0 %v661
    %678 = vmatpush.xpose.msra.mxu0 %v659
    %679 = vmatmul.f32.gmra.mxu0 %v655
    %v680 = vpop.f32.mrf.mxu0
    %v681 = vadd.f32 0.0, %v680
    %682 = vmatmul.f32.gmra.mxu0 %v657
    %v683 = vpop.f32.mrf.mxu0
    %v684 = vadd.f32 0.0, %v683
    %685 = vdwg.mxu0
    %686 = vrot.lane.b32.xlu0 %v181, 120
    %v687 = vpop.permute.xlu0 %686
    %688 = vrot.lane.b32.xlu0 %v184, 120
    %v689 = vpop.permute.xlu0 %688
    %690 = vrot.lane.b32.xlu0 %v232, 120
    %v691 = vpop.permute.xlu0 %690
    %692 = vrot.lane.b32.xlu0 %v235, 120
    %v693 = vpop.permute.xlu0 %692
    %v694 = vsel %vm300, %v687, 0
    %v696 = vsel %vm300, %v689, 0
    %v698 = vsel %vm300, %v691, 0
    %v700 = vsel %vm300, %v693, 0
    %702 = vmatpush.xpose.msra.mxu0 0.0
    %703 = vmatpush.xpose.msra.mxu0 0.0
    %704 = vmatpush.xpose.msra.mxu0 0.0
    %705 = vmatpush.xpose.msra.mxu0 0.0
    %706 = vmatpush.xpose.msra.mxu0 0.0
    %707 = vmatpush.xpose.msra.mxu0 0.0
    %708 = vmatpush.xpose.msra.mxu0 0.0
    %709 = vmatpush.xpose.msra.mxu0 0.0
    %710 = vmatpush.xpose.msra.mxu0 0.0
    %711 = vmatpush.xpose.msra.mxu0 0.0
    %712 = vmatpush.xpose.msra.mxu0 0.0
    %713 = vmatpush.xpose.msra.mxu0 0.0
    %714 = vmatpush.xpose.msra.mxu0 0.0
    %715 = vmatpush.xpose.msra.mxu0 0.0
    %716 = vmatpush.xpose.msra.mxu0 %v700
    %717 = vmatpush.xpose.msra.mxu0 %v698
    %718 = vmatmul.f32.gmra.mxu0 %v694
    %v719 = vpop.f32.mrf.mxu0
    %v720 = vadd.f32 0.0, %v719
    %721 = vmatmul.f32.gmra.mxu0 %v696
    %v722 = vpop.f32.mrf.mxu0
    %v723 = vadd.f32 0.0, %v722
    %724 = vdwg.mxu0
    %725 = vrot.lane.b32.xlu0 %v187, 120
    %v726 = vpop.permute.xlu0 %725
    %727 = vrot.lane.b32.xlu0 %v190, 120
    %v728 = vpop.permute.xlu0 %727
    %729 = vrot.lane.b32.xlu0 %v238, 120
    %v730 = vpop.permute.xlu0 %729
    %731 = vrot.lane.b32.xlu0 %v241, 120
    %v732 = vpop.permute.xlu0 %731
    %v733 = vsel %vm300, %v726, 0
    %v735 = vsel %vm300, %v728, 0
    %v737 = vsel %vm300, %v730, 0
    %v739 = vsel %vm300, %v732, 0
    %741 = vmatpush.xpose.msra.mxu0 0.0
    %742 = vmatpush.xpose.msra.mxu0 0.0
    %743 = vmatpush.xpose.msra.mxu0 0.0
    %744 = vmatpush.xpose.msra.mxu0 0.0
    %745 = vmatpush.xpose.msra.mxu0 0.0
    %746 = vmatpush.xpose.msra.mxu0 0.0
    %747 = vmatpush.xpose.msra.mxu0 0.0
    %748 = vmatpush.xpose.msra.mxu0 0.0
    %749 = vmatpush.xpose.msra.mxu0 0.0
    %750 = vmatpush.xpose.msra.mxu0 0.0
    %751 = vmatpush.xpose.msra.mxu0 0.0
    %752 = vmatpush.xpose.msra.mxu0 0.0
    %753 = vmatpush.xpose.msra.mxu0 0.0
    %754 = vmatpush.xpose.msra.mxu0 0.0
    %755 = vmatpush.xpose.msra.mxu0 %v739
    %756 = vmatpush.xpose.msra.mxu0 %v737
    %757 = vmatmul.f32.gmra.mxu0 %v733
    %v758 = vpop.f32.mrf.mxu0
    %v759 = vadd.f32 0.0, %v758
    %760 = vmatmul.f32.gmra.mxu0 %v735
    %v761 = vpop.f32.mrf.mxu0
    %v762 = vadd.f32 0.0, %v761
    %763 = vdwg.mxu0
    %764 = vrot.lane.b32.xlu0 %v193, 120
    %v765 = vpop.permute.xlu0 %764
    %766 = vrot.lane.b32.xlu0 %v196, 120
    %v767 = vpop.permute.xlu0 %766
    %768 = vrot.lane.b32.xlu0 %v244, 120
    %v769 = vpop.permute.xlu0 %768
    %770 = vrot.lane.b32.xlu0 %v247, 120
    %v771 = vpop.permute.xlu0 %770
    %v772 = vsel %vm300, %v765, 0
    %v774 = vsel %vm300, %v767, 0
    %v776 = vsel %vm300, %v769, 0
    %v778 = vsel %vm300, %v771, 0
    %780 = vmatpush.xpose.msra.mxu0 0.0
    %781 = vmatpush.xpose.msra.mxu0 0.0
    %782 = vmatpush.xpose.msra.mxu0 0.0
    %783 = vmatpush.xpose.msra.mxu0 0.0
    %784 = vmatpush.xpose.msra.mxu0 0.0
    %785 = vmatpush.xpose.msra.mxu0 0.0
    %786 = vmatpush.xpose.msra.mxu0 0.0
    %787 = vmatpush.xpose.msra.mxu0 0.0
    %788 = vmatpush.xpose.msra.mxu0 0.0
    %789 = vmatpush.xpose.msra.mxu0 0.0
    %790 = vmatpush.xpose.msra.mxu0 0.0
    %791 = vmatpush.xpose.msra.mxu0 0.0
    %792 = vmatpush.xpose.msra.mxu0 0.0
    %793 = vmatpush.xpose.msra.mxu0 0.0
    %794 = vmatpush.xpose.msra.mxu0 %v778
    %795 = vmatpush.xpose.msra.mxu0 %v776
    %796 = vmatmul.f32.gmra.mxu0 %v772
    %v797 = vpop.f32.mrf.mxu0
    %v798 = vadd.f32 0.0, %v797
    %799 = vmatmul.f32.gmra.mxu0 %v774
    %v800 = vpop.f32.mrf.mxu0
    %v801 = vadd.f32 0.0, %v800
    %802 = vdwg.mxu0
    %v803 = vsel %vm441, %v681, -inf
    %804 = vmax.xlane.f32.xlu0 %v803
    %v805 = vpop.xlane.xlu0 %804
    %v806 = vsel %vm441, %v684, -inf
    %807 = vmax.xlane.f32.xlu0 %v806
    %v808 = vpop.xlane.xlu0 %807
    %v809 = vsel %vm441, %v720, -inf
    %810 = vmax.xlane.f32.xlu0 %v809
    %v811 = vpop.xlane.xlu0 %810
    %v812 = vsel %vm441, %v723, -inf
    %813 = vmax.xlane.f32.xlu0 %v812
    %v814 = vpop.xlane.xlu0 %813
    %v815 = vsel %vm441, %v759, -inf
    %816 = vmax.xlane.f32.xlu0 %v815
    %v817 = vpop.xlane.xlu0 %816
    %v818 = vsel %vm441, %v762, -inf
    %819 = vmax.xlane.f32.xlu0 %v818
    %v820 = vpop.xlane.xlu0 %819
    %v821 = vsel %vm441, %v798, -inf
    %822 = vmax.xlane.f32.xlu0 %v821
    %v823 = vpop.xlane.xlu0 %822
    %v824 = vsel %vm441, %v801, -inf
    %825 = vmax.xlane.f32.xlu0 %v824
    %v826 = vpop.xlane.xlu0 %825
    %v827 = vsub.f32 %v681, %v805
    %v828 = vsub.f32 %v684, %v808
    %v829 = vsub.f32 %v720, %v811
    %v830 = vsub.f32 %v723, %v814
    %v831 = vsub.f32 %v759, %v817
    %v832 = vsub.f32 %v762, %v820
    %v833 = vsub.f32 %v798, %v823
    %v834 = vsub.f32 %v801, %v826
    %v835 = vmul.f32 %v827, 1.442695
    %v836 = vpow.pop %v835
    %v837 = vmul.f32 %v828, 1.442695
    %v838 = vpow.pop %v837
    %v839 = vmul.f32 %v829, 1.442695
    %v840 = vpow.pop %v839
    %v841 = vmul.f32 %v830, 1.442695
    %v842 = vpow.pop %v841
    %v843 = vmul.f32 %v831, 1.442695
    %v844 = vpow.pop %v843
    %v845 = vmul.f32 %v832, 1.442695
    %v846 = vpow.pop %v845
    %v847 = vmul.f32 %v833, 1.442695
    %v848 = vpow.pop %v847
    %v849 = vmul.f32 %v834, 1.442695
    %v850 = vpow.pop %v849
    %v851 = vsel %vm441, %v836, 0.0
    %852 = vadd.xlane.f32.xlu0 %v851
    %v853 = vpop.xlane.xlu0 %852
    %v854 = vsel %vm441, %v838, 0.0
    %855 = vadd.xlane.f32.xlu0 %v854
    %v856 = vpop.xlane.xlu0 %855
    %v857 = vsel %vm441, %v840, 0.0
    %858 = vadd.xlane.f32.xlu0 %v857
    %v859 = vpop.xlane.xlu0 %858
    %v860 = vsel %vm441, %v842, 0.0
    %861 = vadd.xlane.f32.xlu0 %v860
    %v862 = vpop.xlane.xlu0 %861
    %v863 = vsel %vm441, %v844, 0.0
    %864 = vadd.xlane.f32.xlu0 %v863
    %v865 = vpop.xlane.xlu0 %864
    %v866 = vsel %vm441, %v846, 0.0
    %867 = vadd.xlane.f32.xlu0 %v866
    %v868 = vpop.xlane.xlu0 %867
    %v869 = vsel %vm441, %v848, 0.0
    %870 = vadd.xlane.f32.xlu0 %v869
    %v871 = vpop.xlane.xlu0 %870
    %v872 = vsel %vm441, %v850, 0.0
    %873 = vadd.xlane.f32.xlu0 %v872
    %v874 = vpop.xlane.xlu0 %873
    %v875 = vrcp.pop %v853
    %v876 = vrcp.pop %v856
    %v877 = vrcp.pop %v859
    %v878 = vrcp.pop %v862
    %v879 = vrcp.pop %v865
    %v880 = vrcp.pop %v868
    %v881 = vrcp.pop %v871
    %v882 = vrcp.pop %v874
    %v883 = vmul.f32 %v836, %v875
    %v884 = vmul.f32 %v838, %v876
    %v885 = vmul.f32 %v840, %v877
    %v886 = vmul.f32 %v842, %v878
    %v887 = vmul.f32 %v844, %v879
    %v888 = vmul.f32 %v846, %v880
    %v889 = vmul.f32 %v848, %v881
    %v890 = vmul.f32 %v850, %v882
    %893 = vrot.lane.b32.xlu0 %v277, 120
    %v894 = vpop.permute.xlu0 %893
    %895 = vrot.lane.b32.xlu0 %v280, 120
    %v896 = vpop.permute.xlu0 %895
    %v900 = vsel %vm441, %v883, 0
    %v903 = vsel %vm441, %v884, 0
    %905 = vmatpush.msra.mxu0 0.0
    %906 = vmatpush.msra.mxu0 0.0
    %907 = vmatpush.msra.mxu0 0.0
    %908 = vmatpush.msra.mxu0 0.0
    %909 = vmatpush.msra.mxu0 0.0
    %910 = vmatpush.msra.mxu0 0.0
    %911 = vmatpush.msra.mxu0 0.0
    %912 = vmatpush.msra.mxu0 0.0
    %913 = vmatpush.msra.mxu0 0.0
    %914 = vmatpush.msra.mxu0 0.0
    %915 = vmatpush.msra.mxu0 0.0
    %916 = vmatpush.msra.mxu0 0.0
    %917 = vmatpush.msra.mxu0 0.0
    %918 = vmatpush.msra.mxu0 0.0
    %919 = vmatpush.msra.mxu0 %v896
    %920 = vmatpush.msra.mxu0 %v894
    %921 = vmatmul.f32.gmra.mxu0 %v900
    %v922 = vpop.f32.mrf.mxu0
    %v923 = vadd.f32 0.0, %v922
    %924 = vmatmul.f32.gmra.mxu0 %v903
    %v925 = vpop.f32.mrf.mxu0
    %v926 = vadd.f32 0.0, %v925
    %927 = vdwg.mxu0
    %930 = vrot.lane.b32.xlu0 %v283, 120
    %v931 = vpop.permute.xlu0 %930
    %932 = vrot.lane.b32.xlu0 %v286, 120
    %v933 = vpop.permute.xlu0 %932
    %v937 = vsel %vm441, %v885, 0
    %v940 = vsel %vm441, %v886, 0
    %942 = vmatpush.msra.mxu0 0.0
    %943 = vmatpush.msra.mxu0 0.0
    %944 = vmatpush.msra.mxu0 0.0
    %945 = vmatpush.msra.mxu0 0.0
    %946 = vmatpush.msra.mxu0 0.0
    %947 = vmatpush.msra.mxu0 0.0
    %948 = vmatpush.msra.mxu0 0.0
    %949 = vmatpush.msra.mxu0 0.0
    %950 = vmatpush.msra.mxu0 0.0
    %951 = vmatpush.msra.mxu0 0.0
    %952 = vmatpush.msra.mxu0 0.0
    %953 = vmatpush.msra.mxu0 0.0
    %954 = vmatpush.msra.mxu0 0.0
    %955 = vmatpush.msra.mxu0 0.0
    %956 = vmatpush.msra.mxu0 %v933
    %957 = vmatpush.msra.mxu0 %v931
    %958 = vmatmul.f32.gmra.mxu0 %v937
    %v959 = vpop.f32.mrf.mxu0
    %v960 = vadd.f32 0.0, %v959
    %961 = vmatmul.f32.gmra.mxu0 %v940
    %v962 = vpop.f32.mrf.mxu0
    %v963 = vadd.f32 0.0, %v962
    %964 = vdwg.mxu0
    %967 = vrot.lane.b32.xlu0 %v289, 120
    %v968 = vpop.permute.xlu0 %967
    %969 = vrot.lane.b32.xlu0 %v292, 120
    %v970 = vpop.permute.xlu0 %969
    %v974 = vsel %vm441, %v887, 0
    %v977 = vsel %vm441, %v888, 0
    %979 = vmatpush.msra.mxu0 0.0
    %980 = vmatpush.msra.mxu0 0.0
    %981 = vmatpush.msra.mxu0 0.0
    %982 = vmatpush.msra.mxu0 0.0
    %983 = vmatpush.msra.mxu0 0.0
    %984 = vmatpush.msra.mxu0 0.0
    %985 = vmatpush.msra.mxu0 0.0
    %986 = vmatpush.msra.mxu0 0.0
    %987 = vmatpush.msra.mxu0 0.0
    %988 = vmatpush.msra.mxu0 0.0
    %989 = vmatpush.msra.mxu0 0.0
    %990 = vmatpush.msra.mxu0 0.0
    %991 = vmatpush.msra.mxu0 0.0
    %992 = vmatpush.msra.mxu0 0.0
    %993 = vmatpush.msra.mxu0 %v970
    %994 = vmatpush.msra.mxu0 %v968
    %995 = vmatmul.f32.gmra.mxu0 %v974
    %v996 = vpop.f32.mrf.mxu0
    %v997 = vadd.f32 0.0, %v996
    %998 = vmatmul.f32.gmra.mxu0 %v977
    %v999 = vpop.f32.mrf.mxu0
    %v1000 = vadd.f32 0.0, %v999
    %1001 = vdwg.mxu0
    %1004 = vrot.lane.b32.xlu0 %v295, 120
    %v1005 = vpop.permute.xlu0 %1004
    %1006 = vrot.lane.b32.xlu0 %v298, 120
    %v1007 = vpop.permute.xlu0 %1006
    %v1011 = vsel %vm441, %v889, 0
    %v1014 = vsel %vm441, %v890, 0
    %1016 = vmatpush.msra.mxu0 0.0
    %1017 = vmatpush.msra.mxu0 0.0
    %1018 = vmatpush.msra.mxu0 0.0
    %1019 = vmatpush.msra.mxu0 0.0
    %1020 = vmatpush.msra.mxu0 0.0
    %1021 = vmatpush.msra.mxu0 0.0
    %1022 = vmatpush.msra.mxu0 0.0
    %1023 = vmatpush.msra.mxu0 0.0
    %1024 = vmatpush.msra.mxu0 0.0
    %1025 = vmatpush.msra.mxu0 0.0
    %1026 = vmatpush.msra.mxu0 0.0
    %1027 = vmatpush.msra.mxu0 0.0
    %1028 = vmatpush.msra.mxu0 0.0
    %1029 = vmatpush.msra.mxu0 0.0
    %1030 = vmatpush.msra.mxu0 %v1007
    %1031 = vmatpush.msra.mxu0 %v1005
    %1032 = vmatmul.f32.gmra.mxu0 %v1011
    %v1033 = vpop.f32.mrf.mxu0
    %v1034 = vadd.f32 0.0, %v1033
    %1035 = vmatmul.f32.gmra.mxu0 %v1014
    %v1036 = vpop.f32.mrf.mxu0
    %v1037 = vadd.f32 0.0, %v1036
    %1038 = vdwg.mxu0
    %s1039 = scalar_lea.vmem %s6, 8
    %v1040 = vld [vmem:[%s1039] sm:$0xff]
    %v1042 = vsel %vm300, %v923, 0
    %v1045 = vsel %vm300, %v926, 0
    %v1048 = vsel %vm300, %v960, 0
    %v1051 = vsel %vm300, %v963, 0
    %v1054 = vsel %vm300, %v997, 0
    %v1057 = vsel %vm300, %v1000, 0
    %v1060 = vsel %vm300, %v1034, 0
    %v1063 = vsel %vm300, %v1037, 0
    %1065 = vmatpush.msra.mxu0 0.0
    %1066 = vmatpush.msra.mxu0 0.0
    %1067 = vmatpush.msra.mxu0 0.0
    %1068 = vmatpush.msra.mxu0 0.0
    %1069 = vmatpush.msra.mxu0 0.0
    %1070 = vmatpush.msra.mxu0 0.0
    %1071 = vmatpush.msra.mxu0 0.0
    %1072 = vmatpush.msra.mxu0 0.0
    %1073 = vmatpush.msra.mxu0 0.0
    %1074 = vmatpush.msra.mxu0 0.0
    %1075 = vmatpush.msra.mxu0 0.0
    %1076 = vmatpush.msra.mxu0 0.0
    %1077 = vmatpush.msra.mxu0 0.0
    %1078 = vmatpush.msra.mxu0 0.0
    %1079 = vmatpush.msra.mxu0 0.0
    %1080 = vmatpush.msra.mxu0 %v1040
    %1081 = vmatmul.f32.gmra.mxu0 %v1042
    %v1082 = vpop.f32.mrf.mxu0
    %v1083 = vadd.f32 0.0, %v1082
    %1084 = vmatmul.f32.gmra.mxu0 %v1045
    %v1085 = vpop.f32.mrf.mxu0
    %v1086 = vadd.f32 0.0, %v1085
    %1087 = vmatmul.f32.gmra.mxu0 %v1048
    %v1088 = vpop.f32.mrf.mxu0
    %v1089 = vadd.f32 0.0, %v1088
    %1090 = vmatmul.f32.gmra.mxu0 %v1051
    %v1091 = vpop.f32.mrf.mxu0
    %v1092 = vadd.f32 0.0, %v1091
    %1093 = vmatmul.f32.gmra.mxu0 %v1054
    %v1094 = vpop.f32.mrf.mxu0
    %v1095 = vadd.f32 0.0, %v1094
    %1096 = vmatmul.f32.gmra.mxu0 %v1057
    %v1097 = vpop.f32.mrf.mxu0
    %v1098 = vadd.f32 0.0, %v1097
    %1099 = vmatmul.f32.gmra.mxu0 %v1060
    %v1100 = vpop.f32.mrf.mxu0
    %v1101 = vadd.f32 0.0, %v1100
    %1102 = vmatmul.f32.gmra.mxu0 %v1063
    %v1103 = vpop.f32.mrf.mxu0
    %v1104 = vadd.f32 0.0, %v1103
    %1105 = vdwg.mxu0
    %v1107 = vsel %vm300, %v554, 0
    %v1110 = vsel %vm300, %v557, 0
    %v1113 = vsel %vm300, %v583, 0
    %v1116 = vsel %vm300, %v586, 0
    %v1119 = vsel %vm300, %v612, 0
    %v1122 = vsel %vm300, %v615, 0
    %v1125 = vsel %vm300, %v641, 0
    %v1128 = vsel %vm300, %v644, 0
    %1130 = vmatpush.msra.mxu0 0.0
    %1131 = vmatpush.msra.mxu0 0.0
    %1132 = vmatpush.msra.mxu0 0.0
    %1133 = vmatpush.msra.mxu0 0.0
    %1134 = vmatpush.msra.mxu0 0.0
    %1135 = vmatpush.msra.mxu0 0.0
    %1136 = vmatpush.msra.mxu0 0.0
    %1137 = vmatpush.msra.mxu0 0.0
    %1138 = vmatpush.msra.mxu0 0.0
    %1139 = vmatpush.msra.mxu0 0.0
    %1140 = vmatpush.msra.mxu0 0.0
    %1141 = vmatpush.msra.mxu0 0.0
    %1142 = vmatpush.msra.mxu0 0.0
    %1143 = vmatpush.msra.mxu0 0.0
    %1144 = vmatpush.msra.mxu0 0.0
    %1145 = vmatpush.msra.mxu0 %v646
    %1146 = vmatmul.f32.gmra.mxu0 %v1107
    %v1147 = vpop.f32.mrf.mxu0
    %v1148 = vadd.f32 %v1083, %v1147
    %1149 = vmatmul.f32.gmra.mxu0 %v1110
    %v1150 = vpop.f32.mrf.mxu0
    %v1151 = vadd.f32 %v1086, %v1150
    %1152 = vmatmul.f32.gmra.mxu0 %v1113
    %v1153 = vpop.f32.mrf.mxu0
    %v1154 = vadd.f32 %v1089, %v1153
    %1155 = vmatmul.f32.gmra.mxu0 %v1116
    %v1156 = vpop.f32.mrf.mxu0
    %v1157 = vadd.f32 %v1092, %v1156
    %1158 = vmatmul.f32.gmra.mxu0 %v1119
    %v1159 = vpop.f32.mrf.mxu0
    %v1160 = vadd.f32 %v1095, %v1159
    %1161 = vmatmul.f32.gmra.mxu0 %v1122
    %v1162 = vpop.f32.mrf.mxu0
    %v1163 = vadd.f32 %v1098, %v1162
    %1164 = vmatmul.f32.gmra.mxu0 %v1125
    %v1165 = vpop.f32.mrf.mxu0
    %v1166 = vadd.f32 %v1101, %v1165
    %1167 = vmatmul.f32.gmra.mxu0 %v1128
    %v1168 = vpop.f32.mrf.mxu0
    %v1169 = vadd.f32 %v1104, %v1168
    %1170 = vdwg.mxu0
    %1171 = vrot.lane.b32.xlu0 %v175, 112
    %v1172 = vpop.permute.xlu0 %1171
    %1173 = vrot.lane.b32.xlu0 %v178, 112
    %v1174 = vpop.permute.xlu0 %1173
    %1175 = vrot.lane.b32.xlu0 %v226, 112
    %v1176 = vpop.permute.xlu0 %1175
    %1177 = vrot.lane.b32.xlu0 %v229, 112
    %v1178 = vpop.permute.xlu0 %1177
    %v1179 = vsel %vm300, %v1172, 0
    %v1181 = vsel %vm300, %v1174, 0
    %v1183 = vsel %vm300, %v1176, 0
    %v1185 = vsel %vm300, %v1178, 0
    %1187 = vmatpush.xpose.msra.mxu0 0.0
    %1188 = vmatpush.xpose.msra.mxu0 0.0
    %1189 = vmatpush.xpose.msra.mxu0 0.0
    %1190 = vmatpush.xpose.msra.mxu0 0.0
    %1191 = vmatpush.xpose.msra.mxu0 0.0
    %1192 = vmatpush.xpose.msra.mxu0 0.0
    %1193 = vmatpush.xpose.msra.mxu0 0.0
    %1194 = vmatpush.xpose.msra.mxu0 0.0
    %1195 = vmatpush.xpose.msra.mxu0 0.0
    %1196 = vmatpush.xpose.msra.mxu0 0.0
    %1197 = vmatpush.xpose.msra.mxu0 0.0
    %1198 = vmatpush.xpose.msra.mxu0 0.0
    %1199 = vmatpush.xpose.msra.mxu0 0.0
    %1200 = vmatpush.xpose.msra.mxu0 0.0
    %1201 = vmatpush.xpose.msra.mxu0 %v1185
    %1202 = vmatpush.xpose.msra.mxu0 %v1183
    %1203 = vmatmul.f32.gmra.mxu0 %v1179
    %v1204 = vpop.f32.mrf.mxu0
    %v1205 = vadd.f32 0.0, %v1204
    %1206 = vmatmul.f32.gmra.mxu0 %v1181
    %v1207 = vpop.f32.mrf.mxu0
    %v1208 = vadd.f32 0.0, %v1207
    %1209 = vdwg.mxu0
    %1210 = vrot.lane.b32.xlu0 %v181, 112
    %v1211 = vpop.permute.xlu0 %1210
    %1212 = vrot.lane.b32.xlu0 %v184, 112
    %v1213 = vpop.permute.xlu0 %1212
    %1214 = vrot.lane.b32.xlu0 %v232, 112
    %v1215 = vpop.permute.xlu0 %1214
    %1216 = vrot.lane.b32.xlu0 %v235, 112
    %v1217 = vpop.permute.xlu0 %1216
    %v1218 = vsel %vm300, %v1211, 0
    %v1220 = vsel %vm300, %v1213, 0
    %v1222 = vsel %vm300, %v1215, 0
    %v1224 = vsel %vm300, %v1217, 0
    %1226 = vmatpush.xpose.msra.mxu0 0.0
    %1227 = vmatpush.xpose.msra.mxu0 0.0
    %1228 = vmatpush.xpose.msra.mxu0 0.0
    %1229 = vmatpush.xpose.msra.mxu0 0.0
    %1230 = vmatpush.xpose.msra.mxu0 0.0
    %1231 = vmatpush.xpose.msra.mxu0 0.0
    %1232 = vmatpush.xpose.msra.mxu0 0.0
    %1233 = vmatpush.xpose.msra.mxu0 0.0
    %1234 = vmatpush.xpose.msra.mxu0 0.0
    %1235 = vmatpush.xpose.msra.mxu0 0.0
    %1236 = vmatpush.xpose.msra.mxu0 0.0
    %1237 = vmatpush.xpose.msra.mxu0 0.0
    %1238 = vmatpush.xpose.msra.mxu0 0.0
    %1239 = vmatpush.xpose.msra.mxu0 0.0
    %1240 = vmatpush.xpose.msra.mxu0 %v1224
    %1241 = vmatpush.xpose.msra.mxu0 %v1222
    %1242 = vmatmul.f32.gmra.mxu0 %v1218
    %v1243 = vpop.f32.mrf.mxu0
    %v1244 = vadd.f32 0.0, %v1243
    %1245 = vmatmul.f32.gmra.mxu0 %v1220
    %v1246 = vpop.f32.mrf.mxu0
    %v1247 = vadd.f32 0.0, %v1246
    %1248 = vdwg.mxu0
    %1249 = vrot.lane.b32.xlu0 %v187, 112
    %v1250 = vpop.permute.xlu0 %1249
    %1251 = vrot.lane.b32.xlu0 %v190, 112
    %v1252 = vpop.permute.xlu0 %1251
    %1253 = vrot.lane.b32.xlu0 %v238, 112
    %v1254 = vpop.permute.xlu0 %1253
    %1255 = vrot.lane.b32.xlu0 %v241, 112
    %v1256 = vpop.permute.xlu0 %1255
    %v1257 = vsel %vm300, %v1250, 0
    %v1259 = vsel %vm300, %v1252, 0
    %v1261 = vsel %vm300, %v1254, 0
    %v1263 = vsel %vm300, %v1256, 0
    %1265 = vmatpush.xpose.msra.mxu0 0.0
    %1266 = vmatpush.xpose.msra.mxu0 0.0
    %1267 = vmatpush.xpose.msra.mxu0 0.0
    %1268 = vmatpush.xpose.msra.mxu0 0.0
    %1269 = vmatpush.xpose.msra.mxu0 0.0
    %1270 = vmatpush.xpose.msra.mxu0 0.0
    %1271 = vmatpush.xpose.msra.mxu0 0.0
    %1272 = vmatpush.xpose.msra.mxu0 0.0
    %1273 = vmatpush.xpose.msra.mxu0 0.0
    %1274 = vmatpush.xpose.msra.mxu0 0.0
    %1275 = vmatpush.xpose.msra.mxu0 0.0
    %1276 = vmatpush.xpose.msra.mxu0 0.0
    %1277 = vmatpush.xpose.msra.mxu0 0.0
    %1278 = vmatpush.xpose.msra.mxu0 0.0
    %1279 = vmatpush.xpose.msra.mxu0 %v1263
    %1280 = vmatpush.xpose.msra.mxu0 %v1261
    %1281 = vmatmul.f32.gmra.mxu0 %v1257
    %v1282 = vpop.f32.mrf.mxu0
    %v1283 = vadd.f32 0.0, %v1282
    %1284 = vmatmul.f32.gmra.mxu0 %v1259
    %v1285 = vpop.f32.mrf.mxu0
    %v1286 = vadd.f32 0.0, %v1285
    %1287 = vdwg.mxu0
    %1288 = vrot.lane.b32.xlu0 %v193, 112
    %v1289 = vpop.permute.xlu0 %1288
    %1290 = vrot.lane.b32.xlu0 %v196, 112
    %v1291 = vpop.permute.xlu0 %1290
    %1292 = vrot.lane.b32.xlu0 %v244, 112
    %v1293 = vpop.permute.xlu0 %1292
    %1294 = vrot.lane.b32.xlu0 %v247, 112
    %v1295 = vpop.permute.xlu0 %1294
    %v1296 = vsel %vm300, %v1289, 0
    %v1298 = vsel %vm300, %v1291, 0
    %v1300 = vsel %vm300, %v1293, 0
    %v1302 = vsel %vm300, %v1295, 0
    %1304 = vmatpush.xpose.msra.mxu0 0.0
    %1305 = vmatpush.xpose.msra.mxu0 0.0
    %1306 = vmatpush.xpose.msra.mxu0 0.0
    %1307 = vmatpush.xpose.msra.mxu0 0.0
    %1308 = vmatpush.xpose.msra.mxu0 0.0
    %1309 = vmatpush.xpose.msra.mxu0 0.0
    %1310 = vmatpush.xpose.msra.mxu0 0.0
    %1311 = vmatpush.xpose.msra.mxu0 0.0
    %1312 = vmatpush.xpose.msra.mxu0 0.0
    %1313 = vmatpush.xpose.msra.mxu0 0.0
    %1314 = vmatpush.xpose.msra.mxu0 0.0
    %1315 = vmatpush.xpose.msra.mxu0 0.0
    %1316 = vmatpush.xpose.msra.mxu0 0.0
    %1317 = vmatpush.xpose.msra.mxu0 0.0
    %1318 = vmatpush.xpose.msra.mxu0 %v1302
    %1319 = vmatpush.xpose.msra.mxu0 %v1300
    %1320 = vmatmul.f32.gmra.mxu0 %v1296
    %v1321 = vpop.f32.mrf.mxu0
    %v1322 = vadd.f32 0.0, %v1321
    %1323 = vmatmul.f32.gmra.mxu0 %v1298
    %v1324 = vpop.f32.mrf.mxu0
    %v1325 = vadd.f32 0.0, %v1324
    %1326 = vdwg.mxu0
    %v1327 = vsel %vm441, %v1205, -inf
    %1328 = vmax.xlane.f32.xlu0 %v1327
    %v1329 = vpop.xlane.xlu0 %1328
    %v1330 = vsel %vm441, %v1208, -inf
    %1331 = vmax.xlane.f32.xlu0 %v1330
    %v1332 = vpop.xlane.xlu0 %1331
    %v1333 = vsel %vm441, %v1244, -inf
    %1334 = vmax.xlane.f32.xlu0 %v1333
    %v1335 = vpop.xlane.xlu0 %1334
    %v1336 = vsel %vm441, %v1247, -inf
    %1337 = vmax.xlane.f32.xlu0 %v1336
    %v1338 = vpop.xlane.xlu0 %1337
    %v1339 = vsel %vm441, %v1283, -inf
    %1340 = vmax.xlane.f32.xlu0 %v1339
    %v1341 = vpop.xlane.xlu0 %1340
    %v1342 = vsel %vm441, %v1286, -inf
    %1343 = vmax.xlane.f32.xlu0 %v1342
    %v1344 = vpop.xlane.xlu0 %1343
    %v1345 = vsel %vm441, %v1322, -inf
    %1346 = vmax.xlane.f32.xlu0 %v1345
    %v1347 = vpop.xlane.xlu0 %1346
    %v1348 = vsel %vm441, %v1325, -inf
    %1349 = vmax.xlane.f32.xlu0 %v1348
    %v1350 = vpop.xlane.xlu0 %1349
    %v1351 = vsub.f32 %v1205, %v1329
    %v1352 = vsub.f32 %v1208, %v1332
    %v1353 = vsub.f32 %v1244, %v1335
    %v1354 = vsub.f32 %v1247, %v1338
    %v1355 = vsub.f32 %v1283, %v1341
    %v1356 = vsub.f32 %v1286, %v1344
    %v1357 = vsub.f32 %v1322, %v1347
    %v1358 = vsub.f32 %v1325, %v1350
    %v1359 = vmul.f32 %v1351, 1.442695
    %v1360 = vpow.pop %v1359
    %v1361 = vmul.f32 %v1352, 1.442695
    %v1362 = vpow.pop %v1361
    %v1363 = vmul.f32 %v1353, 1.442695
    %v1364 = vpow.pop %v1363
    %v1365 = vmul.f32 %v1354, 1.442695
    %v1366 = vpow.pop %v1365
    %v1367 = vmul.f32 %v1355, 1.442695
    %v1368 = vpow.pop %v1367
    %v1369 = vmul.f32 %v1356, 1.442695
    %v1370 = vpow.pop %v1369
    %v1371 = vmul.f32 %v1357, 1.442695
    %v1372 = vpow.pop %v1371
    %v1373 = vmul.f32 %v1358, 1.442695
    %v1374 = vpow.pop %v1373
    %v1375 = vsel %vm441, %v1360, 0.0
    %1376 = vadd.xlane.f32.xlu0 %v1375
    %v1377 = vpop.xlane.xlu0 %1376
    %v1378 = vsel %vm441, %v1362, 0.0
    %1379 = vadd.xlane.f32.xlu0 %v1378
    %v1380 = vpop.xlane.xlu0 %1379
    %v1381 = vsel %vm441, %v1364, 0.0
    %1382 = vadd.xlane.f32.xlu0 %v1381
    %v1383 = vpop.xlane.xlu0 %1382
    %v1384 = vsel %vm441, %v1366, 0.0
    %1385 = vadd.xlane.f32.xlu0 %v1384
    %v1386 = vpop.xlane.xlu0 %1385
    %v1387 = vsel %vm441, %v1368, 0.0
    %1388 = vadd.xlane.f32.xlu0 %v1387
    %v1389 = vpop.xlane.xlu0 %1388
    %v1390 = vsel %vm441, %v1370, 0.0
    %1391 = vadd.xlane.f32.xlu0 %v1390
    %v1392 = vpop.xlane.xlu0 %1391
    %v1393 = vsel %vm441, %v1372, 0.0
    %1394 = vadd.xlane.f32.xlu0 %v1393
    %v1395 = vpop.xlane.xlu0 %1394
    %v1396 = vsel %vm441, %v1374, 0.0
    %1397 = vadd.xlane.f32.xlu0 %v1396
    %v1398 = vpop.xlane.xlu0 %1397
    %v1399 = vrcp.pop %v1377
    %v1400 = vrcp.pop %v1380
    %v1401 = vrcp.pop %v1383
    %v1402 = vrcp.pop %v1386
    %v1403 = vrcp.pop %v1389
    %v1404 = vrcp.pop %v1392
    %v1405 = vrcp.pop %v1395
    %v1406 = vrcp.pop %v1398
    %v1407 = vmul.f32 %v1360, %v1399
    %v1408 = vmul.f32 %v1362, %v1400
    %v1409 = vmul.f32 %v1364, %v1401
    %v1410 = vmul.f32 %v1366, %v1402
    %v1411 = vmul.f32 %v1368, %v1403
    %v1412 = vmul.f32 %v1370, %v1404
    %v1413 = vmul.f32 %v1372, %v1405
    %v1414 = vmul.f32 %v1374, %v1406
    %1415 = vrot.lane.b32.xlu0 %v277, 112
    %v1416 = vpop.permute.xlu0 %1415
    %1417 = vrot.lane.b32.xlu0 %v280, 112
    %v1418 = vpop.permute.xlu0 %1417
    %v1422 = vsel %vm441, %v1407, 0
    %v1425 = vsel %vm441, %v1408, 0
    %1427 = vmatpush.msra.mxu0 0.0
    %1428 = vmatpush.msra.mxu0 0.0
    %1429 = vmatpush.msra.mxu0 0.0
    %1430 = vmatpush.msra.mxu0 0.0
    %1431 = vmatpush.msra.mxu0 0.0
    %1432 = vmatpush.msra.mxu0 0.0
    %1433 = vmatpush.msra.mxu0 0.0
    %1434 = vmatpush.msra.mxu0 0.0
    %1435 = vmatpush.msra.mxu0 0.0
    %1436 = vmatpush.msra.mxu0 0.0
    %1437 = vmatpush.msra.mxu0 0.0
    %1438 = vmatpush.msra.mxu0 0.0
    %1439 = vmatpush.msra.mxu0 0.0
    %1440 = vmatpush.msra.mxu0 0.0
    %1441 = vmatpush.msra.mxu0 %v1418
    %1442 = vmatpush.msra.mxu0 %v1416
    %1443 = vmatmul.f32.gmra.mxu0 %v1422
    %v1444 = vpop.f32.mrf.mxu0
    %v1445 = vadd.f32 0.0, %v1444
    %1446 = vmatmul.f32.gmra.mxu0 %v1425
    %v1447 = vpop.f32.mrf.mxu0
    %v1448 = vadd.f32 0.0, %v1447
    %1449 = vdwg.mxu0
    %1450 = vrot.lane.b32.xlu0 %v283, 112
    %v1451 = vpop.permute.xlu0 %1450
    %1452 = vrot.lane.b32.xlu0 %v286, 112
    %v1453 = vpop.permute.xlu0 %1452
    %v1457 = vsel %vm441, %v1409, 0
    %v1460 = vsel %vm441, %v1410, 0
    %1462 = vmatpush.msra.mxu0 0.0
    %1463 = vmatpush.msra.mxu0 0.0
    %1464 = vmatpush.msra.mxu0 0.0
    %1465 = vmatpush.msra.mxu0 0.0
    %1466 = vmatpush.msra.mxu0 0.0
    %1467 = vmatpush.msra.mxu0 0.0
    %1468 = vmatpush.msra.mxu0 0.0
    %1469 = vmatpush.msra.mxu0 0.0
    %1470 = vmatpush.msra.mxu0 0.0
    %1471 = vmatpush.msra.mxu0 0.0
    %1472 = vmatpush.msra.mxu0 0.0
    %1473 = vmatpush.msra.mxu0 0.0
    %1474 = vmatpush.msra.mxu0 0.0
    %1475 = vmatpush.msra.mxu0 0.0
    %1476 = vmatpush.msra.mxu0 %v1453
    %1477 = vmatpush.msra.mxu0 %v1451
    %1478 = vmatmul.f32.gmra.mxu0 %v1457
    %v1479 = vpop.f32.mrf.mxu0
    %v1480 = vadd.f32 0.0, %v1479
    %1481 = vmatmul.f32.gmra.mxu0 %v1460
    %v1482 = vpop.f32.mrf.mxu0
    %v1483 = vadd.f32 0.0, %v1482
    %1484 = vdwg.mxu0
    %1485 = vrot.lane.b32.xlu0 %v289, 112
    %v1486 = vpop.permute.xlu0 %1485
    %1487 = vrot.lane.b32.xlu0 %v292, 112
    %v1488 = vpop.permute.xlu0 %1487
    %v1492 = vsel %vm441, %v1411, 0
    %v1495 = vsel %vm441, %v1412, 0
    %1497 = vmatpush.msra.mxu0 0.0
    %1498 = vmatpush.msra.mxu0 0.0
    %1499 = vmatpush.msra.mxu0 0.0
    %1500 = vmatpush.msra.mxu0 0.0
    %1501 = vmatpush.msra.mxu0 0.0
    %1502 = vmatpush.msra.mxu0 0.0
    %1503 = vmatpush.msra.mxu0 0.0
    %1504 = vmatpush.msra.mxu0 0.0
    %1505 = vmatpush.msra.mxu0 0.0
    %1506 = vmatpush.msra.mxu0 0.0
    %1507 = vmatpush.msra.mxu0 0.0
    %1508 = vmatpush.msra.mxu0 0.0
    %1509 = vmatpush.msra.mxu0 0.0
    %1510 = vmatpush.msra.mxu0 0.0
    %1511 = vmatpush.msra.mxu0 %v1488
    %1512 = vmatpush.msra.mxu0 %v1486
    %1513 = vmatmul.f32.gmra.mxu0 %v1492
    %v1514 = vpop.f32.mrf.mxu0
    %v1515 = vadd.f32 0.0, %v1514
    %1516 = vmatmul.f32.gmra.mxu0 %v1495
    %v1517 = vpop.f32.mrf.mxu0
    %v1518 = vadd.f32 0.0, %v1517
    %1519 = vdwg.mxu0
    %1520 = vrot.lane.b32.xlu0 %v295, 112
    %v1521 = vpop.permute.xlu0 %1520
    %1522 = vrot.lane.b32.xlu0 %v298, 112
    %v1523 = vpop.permute.xlu0 %1522
    %v1527 = vsel %vm441, %v1413, 0
    %v1530 = vsel %vm441, %v1414, 0
    %1532 = vmatpush.msra.mxu0 0.0
    %1533 = vmatpush.msra.mxu0 0.0
    %1534 = vmatpush.msra.mxu0 0.0
    %1535 = vmatpush.msra.mxu0 0.0
    %1536 = vmatpush.msra.mxu0 0.0
    %1537 = vmatpush.msra.mxu0 0.0
    %1538 = vmatpush.msra.mxu0 0.0
    %1539 = vmatpush.msra.mxu0 0.0
    %1540 = vmatpush.msra.mxu0 0.0
    %1541 = vmatpush.msra.mxu0 0.0
    %1542 = vmatpush.msra.mxu0 0.0
    %1543 = vmatpush.msra.mxu0 0.0
    %1544 = vmatpush.msra.mxu0 0.0
    %1545 = vmatpush.msra.mxu0 0.0
    %1546 = vmatpush.msra.mxu0 %v1523
    %1547 = vmatpush.msra.mxu0 %v1521
    %1548 = vmatmul.f32.gmra.mxu0 %v1527
    %v1549 = vpop.f32.mrf.mxu0
    %v1550 = vadd.f32 0.0, %v1549
    %1551 = vmatmul.f32.gmra.mxu0 %v1530
    %v1552 = vpop.f32.mrf.mxu0
    %v1553 = vadd.f32 0.0, %v1552
    %1554 = vdwg.mxu0
    %s1555 = scalar_lea.vmem %s6, 16
    %v1556 = vld [vmem:[%s1555] sm:$0xff]
    %v1558 = vsel %vm300, %v1445, 0
    %v1561 = vsel %vm300, %v1448, 0
    %v1564 = vsel %vm300, %v1480, 0
    %v1567 = vsel %vm300, %v1483, 0
    %v1570 = vsel %vm300, %v1515, 0
    %v1573 = vsel %vm300, %v1518, 0
    %v1576 = vsel %vm300, %v1550, 0
    %v1579 = vsel %vm300, %v1553, 0
    %1581 = vmatpush.msra.mxu0 0.0
    %1582 = vmatpush.msra.mxu0 0.0
    %1583 = vmatpush.msra.mxu0 0.0
    %1584 = vmatpush.msra.mxu0 0.0
    %1585 = vmatpush.msra.mxu0 0.0
    %1586 = vmatpush.msra.mxu0 0.0
    %1587 = vmatpush.msra.mxu0 0.0
    %1588 = vmatpush.msra.mxu0 0.0
    %1589 = vmatpush.msra.mxu0 0.0
    %1590 = vmatpush.msra.mxu0 0.0
    %1591 = vmatpush.msra.mxu0 0.0
    %1592 = vmatpush.msra.mxu0 0.0
    %1593 = vmatpush.msra.mxu0 0.0
    %1594 = vmatpush.msra.mxu0 0.0
    %1595 = vmatpush.msra.mxu0 0.0
    %1596 = vmatpush.msra.mxu0 %v1556
    %1597 = vmatmul.f32.gmra.mxu0 %v1558
    %v1598 = vpop.f32.mrf.mxu0
    %v1599 = vadd.f32 0.0, %v1598
    %1600 = vmatmul.f32.gmra.mxu0 %v1561
    %v1601 = vpop.f32.mrf.mxu0
    %v1602 = vadd.f32 0.0, %v1601
    %1603 = vmatmul.f32.gmra.mxu0 %v1564
    %v1604 = vpop.f32.mrf.mxu0
    %v1605 = vadd.f32 0.0, %v1604
    %1606 = vmatmul.f32.gmra.mxu0 %v1567
    %v1607 = vpop.f32.mrf.mxu0
    %v1608 = vadd.f32 0.0, %v1607
    %1609 = vmatmul.f32.gmra.mxu0 %v1570
    %v1610 = vpop.f32.mrf.mxu0
    %v1611 = vadd.f32 0.0, %v1610
    %1612 = vmatmul.f32.gmra.mxu0 %v1573
    %v1613 = vpop.f32.mrf.mxu0
    %v1614 = vadd.f32 0.0, %v1613
    %1615 = vmatmul.f32.gmra.mxu0 %v1576
    %v1616 = vpop.f32.mrf.mxu0
    %v1617 = vadd.f32 0.0, %v1616
    %1618 = vmatmul.f32.gmra.mxu0 %v1579
    %v1619 = vpop.f32.mrf.mxu0
    %v1620 = vadd.f32 0.0, %v1619
    %1621 = vdwg.mxu0
    %v1622 = vadd.f32 %v1148, %v1599
    %v1623 = vadd.f32 %v1151, %v1602
    %v1624 = vadd.f32 %v1154, %v1605
    %v1625 = vadd.f32 %v1157, %v1608
    %v1626 = vadd.f32 %v1160, %v1611
    %v1627 = vadd.f32 %v1163, %v1614
    %v1628 = vadd.f32 %v1166, %v1617
    %v1629 = vadd.f32 %v1169, %v1620
    %1630 = vrot.lane.b32.xlu0 %v175, 104
    %v1631 = vpop.permute.xlu0 %1630
    %1632 = vrot.lane.b32.xlu0 %v178, 104
    %v1633 = vpop.permute.xlu0 %1632
    %1634 = vrot.lane.b32.xlu0 %v226, 104
    %v1635 = vpop.permute.xlu0 %1634
    %1636 = vrot.lane.b32.xlu0 %v229, 104
    %v1637 = vpop.permute.xlu0 %1636
    %v1638 = vsel %vm300, %v1631, 0
    %v1640 = vsel %vm300, %v1633, 0
    %v1642 = vsel %vm300, %v1635, 0
    %v1644 = vsel %vm300, %v1637, 0
    %1646 = vmatpush.xpose.msra.mxu0 0.0
    %1647 = vmatpush.xpose.msra.mxu0 0.0
    %1648 = vmatpush.xpose.msra.mxu0 0.0
    %1649 = vmatpush.xpose.msra.mxu0 0.0
    %1650 = vmatpush.xpose.msra.mxu0 0.0
    %1651 = vmatpush.xpose.msra.mxu0 0.0
    %1652 = vmatpush.xpose.msra.mxu0 0.0
    %1653 = vmatpush.xpose.msra.mxu0 0.0
    %1654 = vmatpush.xpose.msra.mxu0 0.0
    %1655 = vmatpush.xpose.msra.mxu0 0.0
    %1656 = vmatpush.xpose.msra.mxu0 0.0
    %1657 = vmatpush.xpose.msra.mxu0 0.0
    %1658 = vmatpush.xpose.msra.mxu0 0.0
    %1659 = vmatpush.xpose.msra.mxu0 0.0
    %1660 = vmatpush.xpose.msra.mxu0 %v1644
    %1661 = vmatpush.xpose.msra.mxu0 %v1642
    %1662 = vmatmul.f32.gmra.mxu0 %v1638
    %v1663 = vpop.f32.mrf.mxu0
    %v1664 = vadd.f32 0.0, %v1663
    %1665 = vmatmul.f32.gmra.mxu0 %v1640
    %v1666 = vpop.f32.mrf.mxu0
    %v1667 = vadd.f32 0.0, %v1666
    %1668 = vdwg.mxu0
    %1669 = vrot.lane.b32.xlu0 %v181, 104
    %v1670 = vpop.permute.xlu0 %1669
    %1671 = vrot.lane.b32.xlu0 %v184, 104
    %v1672 = vpop.permute.xlu0 %1671
    %1673 = vrot.lane.b32.xlu0 %v232, 104
    %v1674 = vpop.permute.xlu0 %1673
    %1675 = vrot.lane.b32.xlu0 %v235, 104
    %v1676 = vpop.permute.xlu0 %1675
    %v1677 = vsel %vm300, %v1670, 0
    %v1679 = vsel %vm300, %v1672, 0
    %v1681 = vsel %vm300, %v1674, 0
    %v1683 = vsel %vm300, %v1676, 0
    %1685 = vmatpush.xpose.msra.mxu0 0.0
    %1686 = vmatpush.xpose.msra.mxu0 0.0
    %1687 = vmatpush.xpose.msra.mxu0 0.0
    %1688 = vmatpush.xpose.msra.mxu0 0.0
    %1689 = vmatpush.xpose.msra.mxu0 0.0
    %1690 = vmatpush.xpose.msra.mxu0 0.0
    %1691 = vmatpush.xpose.msra.mxu0 0.0
    %1692 = vmatpush.xpose.msra.mxu0 0.0
    %1693 = vmatpush.xpose.msra.mxu0 0.0
    %1694 = vmatpush.xpose.msra.mxu0 0.0
    %1695 = vmatpush.xpose.msra.mxu0 0.0
    %1696 = vmatpush.xpose.msra.mxu0 0.0
    %1697 = vmatpush.xpose.msra.mxu0 0.0
    %1698 = vmatpush.xpose.msra.mxu0 0.0
    %1699 = vmatpush.xpose.msra.mxu0 %v1683
    %1700 = vmatpush.xpose.msra.mxu0 %v1681
    %1701 = vmatmul.f32.gmra.mxu0 %v1677
    %v1702 = vpop.f32.mrf.mxu0
    %v1703 = vadd.f32 0.0, %v1702
    %1704 = vmatmul.f32.gmra.mxu0 %v1679
    %v1705 = vpop.f32.mrf.mxu0
    %v1706 = vadd.f32 0.0, %v1705
    %1707 = vdwg.mxu0
    %1708 = vrot.lane.b32.xlu0 %v187, 104
    %v1709 = vpop.permute.xlu0 %1708
    %1710 = vrot.lane.b32.xlu0 %v190, 104
    %v1711 = vpop.permute.xlu0 %1710
    %1712 = vrot.lane.b32.xlu0 %v238, 104
    %v1713 = vpop.permute.xlu0 %1712
    %1714 = vrot.lane.b32.xlu0 %v241, 104
    %v1715 = vpop.permute.xlu0 %1714
    %v1716 = vsel %vm300, %v1709, 0
    %v1718 = vsel %vm300, %v1711, 0
    %v1720 = vsel %vm300, %v1713, 0
    %v1722 = vsel %vm300, %v1715, 0
    %1724 = vmatpush.xpose.msra.mxu0 0.0
    %1725 = vmatpush.xpose.msra.mxu0 0.0
    %1726 = vmatpush.xpose.msra.mxu0 0.0
    %1727 = vmatpush.xpose.msra.mxu0 0.0
    %1728 = vmatpush.xpose.msra.mxu0 0.0
    %1729 = vmatpush.xpose.msra.mxu0 0.0
    %1730 = vmatpush.xpose.msra.mxu0 0.0
    %1731 = vmatpush.xpose.msra.mxu0 0.0
    %1732 = vmatpush.xpose.msra.mxu0 0.0
    %1733 = vmatpush.xpose.msra.mxu0 0.0
    %1734 = vmatpush.xpose.msra.mxu0 0.0
    %1735 = vmatpush.xpose.msra.mxu0 0.0
    %1736 = vmatpush.xpose.msra.mxu0 0.0
    %1737 = vmatpush.xpose.msra.mxu0 0.0
    %1738 = vmatpush.xpose.msra.mxu0 %v1722
    %1739 = vmatpush.xpose.msra.mxu0 %v1720
    %1740 = vmatmul.f32.gmra.mxu0 %v1716
    %v1741 = vpop.f32.mrf.mxu0
    %v1742 = vadd.f32 0.0, %v1741
    %1743 = vmatmul.f32.gmra.mxu0 %v1718
    %v1744 = vpop.f32.mrf.mxu0
    %v1745 = vadd.f32 0.0, %v1744
    %1746 = vdwg.mxu0
    %1747 = vrot.lane.b32.xlu0 %v193, 104
    %v1748 = vpop.permute.xlu0 %1747
    %1749 = vrot.lane.b32.xlu0 %v196, 104
    %v1750 = vpop.permute.xlu0 %1749
    %1751 = vrot.lane.b32.xlu0 %v244, 104
    %v1752 = vpop.permute.xlu0 %1751
    %1753 = vrot.lane.b32.xlu0 %v247, 104
    %v1754 = vpop.permute.xlu0 %1753
    %v1755 = vsel %vm300, %v1748, 0
    %v1757 = vsel %vm300, %v1750, 0
    %v1759 = vsel %vm300, %v1752, 0
    %v1761 = vsel %vm300, %v1754, 0
    %1763 = vmatpush.xpose.msra.mxu0 0.0
    %1764 = vmatpush.xpose.msra.mxu0 0.0
    %1765 = vmatpush.xpose.msra.mxu0 0.0
    %1766 = vmatpush.xpose.msra.mxu0 0.0
    %1767 = vmatpush.xpose.msra.mxu0 0.0
    %1768 = vmatpush.xpose.msra.mxu0 0.0
    %1769 = vmatpush.xpose.msra.mxu0 0.0
    %1770 = vmatpush.xpose.msra.mxu0 0.0
    %1771 = vmatpush.xpose.msra.mxu0 0.0
    %1772 = vmatpush.xpose.msra.mxu0 0.0
    %1773 = vmatpush.xpose.msra.mxu0 0.0
    %1774 = vmatpush.xpose.msra.mxu0 0.0
    %1775 = vmatpush.xpose.msra.mxu0 0.0
    %1776 = vmatpush.xpose.msra.mxu0 0.0
    %1777 = vmatpush.xpose.msra.mxu0 %v1761
    %1778 = vmatpush.xpose.msra.mxu0 %v1759
    %1779 = vmatmul.f32.gmra.mxu0 %v1755
    %v1780 = vpop.f32.mrf.mxu0
    %v1781 = vadd.f32 0.0, %v1780
    %1782 = vmatmul.f32.gmra.mxu0 %v1757
    %v1783 = vpop.f32.mrf.mxu0
    %v1784 = vadd.f32 0.0, %v1783
    %1785 = vdwg.mxu0
    %v1786 = vsel %vm441, %v1664, -inf
    %1787 = vmax.xlane.f32.xlu0 %v1786
    %v1788 = vpop.xlane.xlu0 %1787
    %v1789 = vsel %vm441, %v1667, -inf
    %1790 = vmax.xlane.f32.xlu0 %v1789
    %v1791 = vpop.xlane.xlu0 %1790
    %v1792 = vsel %vm441, %v1703, -inf
    %1793 = vmax.xlane.f32.xlu0 %v1792
    %v1794 = vpop.xlane.xlu0 %1793
    %v1795 = vsel %vm441, %v1706, -inf
    %1796 = vmax.xlane.f32.xlu0 %v1795
    %v1797 = vpop.xlane.xlu0 %1796
    %v1798 = vsel %vm441, %v1742, -inf
    %1799 = vmax.xlane.f32.xlu0 %v1798
    %v1800 = vpop.xlane.xlu0 %1799
    %v1801 = vsel %vm441, %v1745, -inf
    %1802 = vmax.xlane.f32.xlu0 %v1801
    %v1803 = vpop.xlane.xlu0 %1802
    %v1804 = vsel %vm441, %v1781, -inf
    %1805 = vmax.xlane.f32.xlu0 %v1804
    %v1806 = vpop.xlane.xlu0 %1805
    %v1807 = vsel %vm441, %v1784, -inf
    %1808 = vmax.xlane.f32.xlu0 %v1807
    %v1809 = vpop.xlane.xlu0 %1808
    %v1810 = vsub.f32 %v1664, %v1788
    %v1811 = vsub.f32 %v1667, %v1791
    %v1812 = vsub.f32 %v1703, %v1794
    %v1813 = vsub.f32 %v1706, %v1797
    %v1814 = vsub.f32 %v1742, %v1800
    %v1815 = vsub.f32 %v1745, %v1803
    %v1816 = vsub.f32 %v1781, %v1806
    %v1817 = vsub.f32 %v1784, %v1809
    %v1818 = vmul.f32 %v1810, 1.442695
    %v1819 = vpow.pop %v1818
    %v1820 = vmul.f32 %v1811, 1.442695
    %v1821 = vpow.pop %v1820
    %v1822 = vmul.f32 %v1812, 1.442695
    %v1823 = vpow.pop %v1822
    %v1824 = vmul.f32 %v1813, 1.442695
    %v1825 = vpow.pop %v1824
    %v1826 = vmul.f32 %v1814, 1.442695
    %v1827 = vpow.pop %v1826
    %v1828 = vmul.f32 %v1815, 1.442695
    %v1829 = vpow.pop %v1828
    %v1830 = vmul.f32 %v1816, 1.442695
    %v1831 = vpow.pop %v1830
    %v1832 = vmul.f32 %v1817, 1.442695
    %v1833 = vpow.pop %v1832
    %v1834 = vsel %vm441, %v1819, 0.0
    %1835 = vadd.xlane.f32.xlu0 %v1834
    %v1836 = vpop.xlane.xlu0 %1835
    %v1837 = vsel %vm441, %v1821, 0.0
    %1838 = vadd.xlane.f32.xlu0 %v1837
    %v1839 = vpop.xlane.xlu0 %1838
    %v1840 = vsel %vm441, %v1823, 0.0
    %1841 = vadd.xlane.f32.xlu0 %v1840
    %v1842 = vpop.xlane.xlu0 %1841
    %v1843 = vsel %vm441, %v1825, 0.0
    %1844 = vadd.xlane.f32.xlu0 %v1843
    %v1845 = vpop.xlane.xlu0 %1844
    %v1846 = vsel %vm441, %v1827, 0.0
    %1847 = vadd.xlane.f32.xlu0 %v1846
    %v1848 = vpop.xlane.xlu0 %1847
    %v1849 = vsel %vm441, %v1829, 0.0
    %1850 = vadd.xlane.f32.xlu0 %v1849
    %v1851 = vpop.xlane.xlu0 %1850
    %v1852 = vsel %vm441, %v1831, 0.0
    %1853 = vadd.xlane.f32.xlu0 %v1852
    %v1854 = vpop.xlane.xlu0 %1853
    %v1855 = vsel %vm441, %v1833, 0.0
    %1856 = vadd.xlane.f32.xlu0 %v1855
    %v1857 = vpop.xlane.xlu0 %1856
    %v1858 = vrcp.pop %v1836
    %v1859 = vrcp.pop %v1839
    %v1860 = vrcp.pop %v1842
    %v1861 = vrcp.pop %v1845
    %v1862 = vrcp.pop %v1848
    %v1863 = vrcp.pop %v1851
    %v1864 = vrcp.pop %v1854
    %v1865 = vrcp.pop %v1857
    %v1866 = vmul.f32 %v1819, %v1858
    %v1867 = vmul.f32 %v1821, %v1859
    %v1868 = vmul.f32 %v1823, %v1860
    %v1869 = vmul.f32 %v1825, %v1861
    %v1870 = vmul.f32 %v1827, %v1862
    %v1871 = vmul.f32 %v1829, %v1863
    %v1872 = vmul.f32 %v1831, %v1864
    %v1873 = vmul.f32 %v1833, %v1865
    %1874 = vrot.lane.b32.xlu0 %v277, 104
    %v1875 = vpop.permute.xlu0 %1874
    %1876 = vrot.lane.b32.xlu0 %v280, 104
    %v1877 = vpop.permute.xlu0 %1876
    %v1881 = vsel %vm441, %v1866, 0
    %v1884 = vsel %vm441, %v1867, 0
    %1886 = vmatpush.msra.mxu0 0.0
    %1887 = vmatpush.msra.mxu0 0.0
    %1888 = vmatpush.msra.mxu0 0.0
    %1889 = vmatpush.msra.mxu0 0.0
    %1890 = vmatpush.msra.mxu0 0.0
    %1891 = vmatpush.msra.mxu0 0.0
    %1892 = vmatpush.msra.mxu0 0.0
    %1893 = vmatpush.msra.mxu0 0.0
    %1894 = vmatpush.msra.mxu0 0.0
    %1895 = vmatpush.msra.mxu0 0.0
    %1896 = vmatpush.msra.mxu0 0.0
    %1897 = vmatpush.msra.mxu0 0.0
    %1898 = vmatpush.msra.mxu0 0.0
    %1899 = vmatpush.msra.mxu0 0.0
    %1900 = vmatpush.msra.mxu0 %v1877
    %1901 = vmatpush.msra.mxu0 %v1875
    %1902 = vmatmul.f32.gmra.mxu0 %v1881
    %v1903 = vpop.f32.mrf.mxu0
    %v1904 = vadd.f32 0.0, %v1903
    %1905 = vmatmul.f32.gmra.mxu0 %v1884
    %v1906 = vpop.f32.mrf.mxu0
    %v1907 = vadd.f32 0.0, %v1906
    %1908 = vdwg.mxu0
    %1909 = vrot.lane.b32.xlu0 %v283, 104
    %v1910 = vpop.permute.xlu0 %1909
    %1911 = vrot.lane.b32.xlu0 %v286, 104
    %v1912 = vpop.permute.xlu0 %1911
    %v1916 = vsel %vm441, %v1868, 0
    %v1919 = vsel %vm441, %v1869, 0
    %1921 = vmatpush.msra.mxu0 0.0
    %1922 = vmatpush.msra.mxu0 0.0
    %1923 = vmatpush.msra.mxu0 0.0
    %1924 = vmatpush.msra.mxu0 0.0
    %1925 = vmatpush.msra.mxu0 0.0
    %1926 = vmatpush.msra.mxu0 0.0
    %1927 = vmatpush.msra.mxu0 0.0
    %1928 = vmatpush.msra.mxu0 0.0
    %1929 = vmatpush.msra.mxu0 0.0
    %1930 = vmatpush.msra.mxu0 0.0
    %1931 = vmatpush.msra.mxu0 0.0
    %1932 = vmatpush.msra.mxu0 0.0
    %1933 = vmatpush.msra.mxu0 0.0
    %1934 = vmatpush.msra.mxu0 0.0
    %1935 = vmatpush.msra.mxu0 %v1912
    %1936 = vmatpush.msra.mxu0 %v1910
    %1937 = vmatmul.f32.gmra.mxu0 %v1916
    %v1938 = vpop.f32.mrf.mxu0
    %v1939 = vadd.f32 0.0, %v1938
    %1940 = vmatmul.f32.gmra.mxu0 %v1919
    %v1941 = vpop.f32.mrf.mxu0
    %v1942 = vadd.f32 0.0, %v1941
    %1943 = vdwg.mxu0
    %1944 = vrot.lane.b32.xlu0 %v289, 104
    %v1945 = vpop.permute.xlu0 %1944
    %1946 = vrot.lane.b32.xlu0 %v292, 104
    %v1947 = vpop.permute.xlu0 %1946
    %v1951 = vsel %vm441, %v1870, 0
    %v1954 = vsel %vm441, %v1871, 0
    %1956 = vmatpush.msra.mxu0 0.0
    %1957 = vmatpush.msra.mxu0 0.0
    %1958 = vmatpush.msra.mxu0 0.0
    %1959 = vmatpush.msra.mxu0 0.0
    %1960 = vmatpush.msra.mxu0 0.0
    %1961 = vmatpush.msra.mxu0 0.0
    %1962 = vmatpush.msra.mxu0 0.0
    %1963 = vmatpush.msra.mxu0 0.0
    %1964 = vmatpush.msra.mxu0 0.0
    %1965 = vmatpush.msra.mxu0 0.0
    %1966 = vmatpush.msra.mxu0 0.0
    %1967 = vmatpush.msra.mxu0 0.0
    %1968 = vmatpush.msra.mxu0 0.0
    %1969 = vmatpush.msra.mxu0 0.0
    %1970 = vmatpush.msra.mxu0 %v1947
    %1971 = vmatpush.msra.mxu0 %v1945
    %1972 = vmatmul.f32.gmra.mxu0 %v1951
    %v1973 = vpop.f32.mrf.mxu0
    %v1974 = vadd.f32 0.0, %v1973
    %1975 = vmatmul.f32.gmra.mxu0 %v1954
    %v1976 = vpop.f32.mrf.mxu0
    %v1977 = vadd.f32 0.0, %v1976
    %1978 = vdwg.mxu0
    %1979 = vrot.lane.b32.xlu0 %v295, 104
    %v1980 = vpop.permute.xlu0 %1979
    %1981 = vrot.lane.b32.xlu0 %v298, 104
    %v1982 = vpop.permute.xlu0 %1981
    %v1986 = vsel %vm441, %v1872, 0
    %v1989 = vsel %vm441, %v1873, 0
    %1991 = vmatpush.msra.mxu0 0.0
    %1992 = vmatpush.msra.mxu0 0.0
    %1993 = vmatpush.msra.mxu0 0.0
    %1994 = vmatpush.msra.mxu0 0.0
    %1995 = vmatpush.msra.mxu0 0.0
    %1996 = vmatpush.msra.mxu0 0.0
    %1997 = vmatpush.msra.mxu0 0.0
    %1998 = vmatpush.msra.mxu0 0.0
    %1999 = vmatpush.msra.mxu0 0.0
    %2000 = vmatpush.msra.mxu0 0.0
    %2001 = vmatpush.msra.mxu0 0.0
    %2002 = vmatpush.msra.mxu0 0.0
    %2003 = vmatpush.msra.mxu0 0.0
    %2004 = vmatpush.msra.mxu0 0.0
    %2005 = vmatpush.msra.mxu0 %v1982
    %2006 = vmatpush.msra.mxu0 %v1980
    %2007 = vmatmul.f32.gmra.mxu0 %v1986
    %v2008 = vpop.f32.mrf.mxu0
    %v2009 = vadd.f32 0.0, %v2008
    %2010 = vmatmul.f32.gmra.mxu0 %v1989
    %v2011 = vpop.f32.mrf.mxu0
    %v2012 = vadd.f32 0.0, %v2011
    %2013 = vdwg.mxu0
    %s2014 = scalar_lea.vmem %s6, 24
    %v2015 = vld [vmem:[%s2014] sm:$0xff]
    %v2017 = vsel %vm300, %v1904, 0
    %v2020 = vsel %vm300, %v1907, 0
    %v2023 = vsel %vm300, %v1939, 0
    %v2026 = vsel %vm300, %v1942, 0
    %v2029 = vsel %vm300, %v1974, 0
    %v2032 = vsel %vm300, %v1977, 0
    %v2035 = vsel %vm300, %v2009, 0
    %v2038 = vsel %vm300, %v2012, 0
    %2040 = vmatpush.msra.mxu0 0.0
    %2041 = vmatpush.msra.mxu0 0.0
    %2042 = vmatpush.msra.mxu0 0.0
    %2043 = vmatpush.msra.mxu0 0.0
    %2044 = vmatpush.msra.mxu0 0.0
    %2045 = vmatpush.msra.mxu0 0.0
    %2046 = vmatpush.msra.mxu0 0.0
    %2047 = vmatpush.msra.mxu0 0.0
    %2048 = vmatpush.msra.mxu0 0.0
    %2049 = vmatpush.msra.mxu0 0.0
    %2050 = vmatpush.msra.mxu0 0.0
    %2051 = vmatpush.msra.mxu0 0.0
    %2052 = vmatpush.msra.mxu0 0.0
    %2053 = vmatpush.msra.mxu0 0.0
    %2054 = vmatpush.msra.mxu0 0.0
    %2055 = vmatpush.msra.mxu0 %v2015
    %2056 = vmatmul.f32.gmra.mxu0 %v2017
    %v2057 = vpop.f32.mrf.mxu0
    %v2058 = vadd.f32 0.0, %v2057
    %2059 = vmatmul.f32.gmra.mxu0 %v2020
    %v2060 = vpop.f32.mrf.mxu0
    %v2061 = vadd.f32 0.0, %v2060
    %2062 = vmatmul.f32.gmra.mxu0 %v2023
    %v2063 = vpop.f32.mrf.mxu0
    %v2064 = vadd.f32 0.0, %v2063
    %2065 = vmatmul.f32.gmra.mxu0 %v2026
    %v2066 = vpop.f32.mrf.mxu0
    %v2067 = vadd.f32 0.0, %v2066
    %2068 = vmatmul.f32.gmra.mxu0 %v2029
    %v2069 = vpop.f32.mrf.mxu0
    %v2070 = vadd.f32 0.0, %v2069
    %2071 = vmatmul.f32.gmra.mxu0 %v2032
    %v2072 = vpop.f32.mrf.mxu0
    %v2073 = vadd.f32 0.0, %v2072
    %2074 = vmatmul.f32.gmra.mxu0 %v2035
    %v2075 = vpop.f32.mrf.mxu0
    %v2076 = vadd.f32 0.0, %v2075
    %2077 = vmatmul.f32.gmra.mxu0 %v2038
    %v2078 = vpop.f32.mrf.mxu0
    %v2079 = vadd.f32 0.0, %v2078
    %2080 = vdwg.mxu0
    %v2081 = vadd.f32 %v1622, %v2058
    %v2082 = vadd.f32 %v1623, %v2061
    %v2083 = vadd.f32 %v1624, %v2064
    %v2084 = vadd.f32 %v1625, %v2067
    %v2085 = vadd.f32 %v1626, %v2070
    %v2086 = vadd.f32 %v1627, %v2073
    %v2087 = vadd.f32 %v1628, %v2076
    %v2088 = vadd.f32 %v1629, %v2079
    %v2089 = vld [vmem:[%s7] sm:$0x1]
    %v2091 = vperm.slane %v2089, 0
    %v2093 = vadd.f32 %v2081, %v2091
    %v2094 = vadd.f32 %v2082, %v2091
    %v2095 = vadd.f32 %v2083, %v2091
    %v2096 = vadd.f32 %v2084, %v2091
    %v2097 = vadd.f32 %v2085, %v2091
    %v2098 = vadd.f32 %v2086, %v2091
    %v2099 = vadd.f32 %v2087, %v2091
    %v2100 = vadd.f32 %v2088, %v2091
    %v2101 = vld [vmem:[%s1] sm:$0xff]
    %v2102 = vld [vmem:[%s1 + $0x8] sm:$0xff]
    %v2103 = vld [vmem:[%s1 + $0x10] sm:$0xff]
    %v2104 = vld [vmem:[%s1 + $0x18] sm:$0xff]
    %v2105 = vld [vmem:[%s1 + $0x20] sm:$0xff]
    %v2106 = vld [vmem:[%s1 + $0x28] sm:$0xff]
    %v2107 = vld [vmem:[%s1 + $0x30] sm:$0xff]
    %v2108 = vld [vmem:[%s1 + $0x38] sm:$0xff]
    %v2110 = vsel %vm58, %v2101, 0
    %v2113 = vsel %vm58, %v2102, 0
    %v2116 = vsel %vm58, %v2103, 0
    %v2119 = vsel %vm58, %v2104, 0
    %v2122 = vsel %vm58, %v2105, 0
    %v2125 = vsel %vm58, %v2106, 0
    %v2128 = vsel %vm58, %v2107, 0
    %v2131 = vsel %vm58, %v2108, 0
    %2133 = vmatpush.msra.mxu0 0.0
    %2134 = vmatpush.msra.mxu0 0.0
    %2135 = vmatpush.msra.mxu0 0.0
    %2136 = vmatpush.msra.mxu0 0.0
    %2137 = vmatpush.msra.mxu0 0.0
    %2138 = vmatpush.msra.mxu0 0.0
    %2139 = vmatpush.msra.mxu0 0.0
    %2140 = vmatpush.msra.mxu0 0.0
    %2141 = vmatpush.msra.mxu0 %v2100
    %2142 = vmatpush.msra.mxu0 %v2099
    %2143 = vmatpush.msra.mxu0 %v2098
    %2144 = vmatpush.msra.mxu0 %v2097
    %2145 = vmatpush.msra.mxu0 %v2096
    %2146 = vmatpush.msra.mxu0 %v2095
    %2147 = vmatpush.msra.mxu0 %v2094
    %2148 = vmatpush.msra.mxu0 %v2093
    %2149 = vmatmul.f32.gmra.mxu0 %v2110
    %v2150 = vpop.f32.mrf.mxu0
    %v2151 = vadd.f32 0.0, %v2150
    %2152 = vmatmul.f32.gmra.mxu0 %v2113
    %v2153 = vpop.f32.mrf.mxu0
    %v2154 = vadd.f32 0.0, %v2153
    %2155 = vmatmul.f32.gmra.mxu0 %v2116
    %v2156 = vpop.f32.mrf.mxu0
    %v2157 = vadd.f32 0.0, %v2156
    %2158 = vmatmul.f32.gmra.mxu0 %v2119
    %v2159 = vpop.f32.mrf.mxu0
    %v2160 = vadd.f32 0.0, %v2159
    %2161 = vmatmul.f32.gmra.mxu0 %v2122
    %v2162 = vpop.f32.mrf.mxu0
    %v2163 = vadd.f32 0.0, %v2162
    %2164 = vmatmul.f32.gmra.mxu0 %v2125
    %v2165 = vpop.f32.mrf.mxu0
    %v2166 = vadd.f32 0.0, %v2165
    %2167 = vmatmul.f32.gmra.mxu0 %v2128
    %v2168 = vpop.f32.mrf.mxu0
    %v2169 = vadd.f32 0.0, %v2168
    %2170 = vmatmul.f32.gmra.mxu0 %v2131
    %v2171 = vpop.f32.mrf.mxu0
    %v2172 = vadd.f32 0.0, %v2171
    %2173 = vdwg.mxu0
    %v2174 = vld [vmem:[%s8] sm:$0xff]
    %v2175 = vld [vmem:[%s8 + $0x8] sm:$0xff]
    %v2176 = vld [vmem:[%s8 + $0x10] sm:$0xff]
    %v2177 = vld [vmem:[%s8 + $0x18] sm:$0xff]
    %v2178 = vld [vmem:[%s9] sm:$0x1]
    %v2180 = vperm.slane %v2178, 0
    %v2183 = vsel %vm132, %v2151, 0
    %v2186 = vsel %vm132, %v2154, 0
    %v2189 = vsel %vm132, %v2157, 0
    %v2192 = vsel %vm132, %v2160, 0
    %v2195 = vsel %vm132, %v2163, 0
    %v2198 = vsel %vm132, %v2166, 0
    %v2201 = vsel %vm132, %v2169, 0
    %v2204 = vsel %vm132, %v2172, 0
    %2206 = vmatpush.msra.mxu0 0.0
    %2207 = vmatpush.msra.mxu0 0.0
    %2208 = vmatpush.msra.mxu0 0.0
    %2209 = vmatpush.msra.mxu0 0.0
    %2210 = vmatpush.msra.mxu0 0.0
    %2211 = vmatpush.msra.mxu0 0.0
    %2212 = vmatpush.msra.mxu0 0.0
    %2213 = vmatpush.msra.mxu0 0.0
    %2214 = vmatpush.msra.mxu0 0.0
    %2215 = vmatpush.msra.mxu0 0.0
    %2216 = vmatpush.msra.mxu0 0.0
    %2217 = vmatpush.msra.mxu0 0.0
    %2218 = vmatpush.msra.mxu0 %v2177
    %2219 = vmatpush.msra.mxu0 %v2176
    %2220 = vmatpush.msra.mxu0 %v2175
    %2221 = vmatpush.msra.mxu0 %v2174
    %2222 = vmatmul.f32.gmra.mxu0 %v2183
    %v2223 = vpop.f32.mrf.mxu0
    %v2224 = vadd.f32 %v2180, %v2223
    %2225 = vmatmul.f32.gmra.mxu0 %v2186
    %v2226 = vpop.f32.mrf.mxu0
    %v2227 = vadd.f32 %v2180, %v2226
    %2228 = vmatmul.f32.gmra.mxu0 %v2189
    %v2229 = vpop.f32.mrf.mxu0
    %v2230 = vadd.f32 %v2180, %v2229
    %2231 = vmatmul.f32.gmra.mxu0 %v2192
    %v2232 = vpop.f32.mrf.mxu0
    %v2233 = vadd.f32 %v2180, %v2232
    %2234 = vmatmul.f32.gmra.mxu0 %v2195
    %v2235 = vpop.f32.mrf.mxu0
    %v2236 = vadd.f32 %v2180, %v2235
    %2237 = vmatmul.f32.gmra.mxu0 %v2198
    %v2238 = vpop.f32.mrf.mxu0
    %v2239 = vadd.f32 %v2180, %v2238
    %2240 = vmatmul.f32.gmra.mxu0 %v2201
    %v2241 = vpop.f32.mrf.mxu0
    %v2242 = vadd.f32 %v2180, %v2241
    %2243 = vmatmul.f32.gmra.mxu0 %v2204
    %v2244 = vpop.f32.mrf.mxu0
    %v2245 = vadd.f32 %v2180, %v2244
    %2246 = vdwg.mxu0
    %s2247 = scalar_lea.vmem %s8, 32
    %v2248 = vld [vmem:[%s2247] sm:$0xff]
    %v2249 = vld [vmem:[%s2247 + $0x8] sm:$0xff]
    %v2250 = vld [vmem:[%s2247 + $0x10] sm:$0xff]
    %v2251 = vld [vmem:[%s2247 + $0x18] sm:$0xff]
    %s2252 = scalar_lea.vmem %s9, 1
    %v2253 = vld [vmem:[%s2252] sm:$0x1]
    %v2255 = vperm.slane %v2253, 0
    %2257 = vmatpush.msra.mxu0 0.0
    %2258 = vmatpush.msra.mxu0 0.0
    %2259 = vmatpush.msra.mxu0 0.0
    %2260 = vmatpush.msra.mxu0 0.0
    %2261 = vmatpush.msra.mxu0 0.0
    %2262 = vmatpush.msra.mxu0 0.0
    %2263 = vmatpush.msra.mxu0 0.0
    %2264 = vmatpush.msra.mxu0 0.0
    %2265 = vmatpush.msra.mxu0 0.0
    %2266 = vmatpush.msra.mxu0 0.0
    %2267 = vmatpush.msra.mxu0 0.0
    %2268 = vmatpush.msra.mxu0 0.0
    %2269 = vmatpush.msra.mxu0 %v2251
    %2270 = vmatpush.msra.mxu0 %v2250
    %2271 = vmatpush.msra.mxu0 %v2249
    %2272 = vmatpush.msra.mxu0 %v2248
    %2273 = vmatmul.f32.gmra.mxu0 %v2183
    %v2274 = vpop.f32.mrf.mxu0
    %v2275 = vadd.f32 %v2255, %v2274
    %2276 = vmatmul.f32.gmra.mxu0 %v2186
    %v2277 = vpop.f32.mrf.mxu0
    %v2278 = vadd.f32 %v2255, %v2277
    %2279 = vmatmul.f32.gmra.mxu0 %v2189
    %v2280 = vpop.f32.mrf.mxu0
    %v2281 = vadd.f32 %v2255, %v2280
    %2282 = vmatmul.f32.gmra.mxu0 %v2192
    %v2283 = vpop.f32.mrf.mxu0
    %v2284 = vadd.f32 %v2255, %v2283
    %2285 = vmatmul.f32.gmra.mxu0 %v2195
    %v2286 = vpop.f32.mrf.mxu0
    %v2287 = vadd.f32 %v2255, %v2286
    %2288 = vmatmul.f32.gmra.mxu0 %v2198
    %v2289 = vpop.f32.mrf.mxu0
    %v2290 = vadd.f32 %v2255, %v2289
    %2291 = vmatmul.f32.gmra.mxu0 %v2201
    %v2292 = vpop.f32.mrf.mxu0
    %v2293 = vadd.f32 %v2255, %v2292
    %2294 = vmatmul.f32.gmra.mxu0 %v2204
    %v2295 = vpop.f32.mrf.mxu0
    %v2296 = vadd.f32 %v2255, %v2295
    %2297 = vdwg.mxu0
    %s2298 = scalar_lea.vmem %s8, 64
    %v2299 = vld [vmem:[%s2298] sm:$0xff]
    %v2300 = vld [vmem:[%s2298 + $0x8] sm:$0xff]
    %v2301 = vld [vmem:[%s2298 + $0x10] sm:$0xff]
    %v2302 = vld [vmem:[%s2298 + $0x18] sm:$0xff]
    %s2303 = scalar_lea.vmem %s9, 2
    %v2304 = vld [vmem:[%s2303] sm:$0x1]
    %v2306 = vperm.slane %v2304, 0
    %2308 = vmatpush.msra.mxu0 0.0
    %2309 = vmatpush.msra.mxu0 0.0
    %2310 = vmatpush.msra.mxu0 0.0
    %2311 = vmatpush.msra.mxu0 0.0
    %2312 = vmatpush.msra.mxu0 0.0
    %2313 = vmatpush.msra.mxu0 0.0
    %2314 = vmatpush.msra.mxu0 0.0
    %2315 = vmatpush.msra.mxu0 0.0
    %2316 = vmatpush.msra.mxu0 0.0
    %2317 = vmatpush.msra.mxu0 0.0
    %2318 = vmatpush.msra.mxu0 0.0
    %2319 = vmatpush.msra.mxu0 0.0
    %2320 = vmatpush.msra.mxu0 %v2302
    %2321 = vmatpush.msra.mxu0 %v2301
    %2322 = vmatpush.msra.mxu0 %v2300
    %2323 = vmatpush.msra.mxu0 %v2299
    %2324 = vmatmul.f32.gmra.mxu0 %v2183
    %v2325 = vpop.f32.mrf.mxu0
    %v2326 = vadd.f32 %v2306, %v2325
    %2327 = vmatmul.f32.gmra.mxu0 %v2186
    %v2328 = vpop.f32.mrf.mxu0
    %v2329 = vadd.f32 %v2306, %v2328
    %2330 = vmatmul.f32.gmra.mxu0 %v2189
    %v2331 = vpop.f32.mrf.mxu0
    %v2332 = vadd.f32 %v2306, %v2331
    %2333 = vmatmul.f32.gmra.mxu0 %v2192
    %v2334 = vpop.f32.mrf.mxu0
    %v2335 = vadd.f32 %v2306, %v2334
    %2336 = vmatmul.f32.gmra.mxu0 %v2195
    %v2337 = vpop.f32.mrf.mxu0
    %v2338 = vadd.f32 %v2306, %v2337
    %2339 = vmatmul.f32.gmra.mxu0 %v2198
    %v2340 = vpop.f32.mrf.mxu0
    %v2341 = vadd.f32 %v2306, %v2340
    %2342 = vmatmul.f32.gmra.mxu0 %v2201
    %v2343 = vpop.f32.mrf.mxu0
    %v2344 = vadd.f32 %v2306, %v2343
    %2345 = vmatmul.f32.gmra.mxu0 %v2204
    %v2346 = vpop.f32.mrf.mxu0
    %v2347 = vadd.f32 %v2306, %v2346
    %2348 = vdwg.mxu0
    %v2350 = vsel %vm300, %v2224, 0
    %v2353 = vsel %vm300, %v2275, 0
    %2355 = vmatpush.xpose.msra.mxu0 0.0
    %2356 = vmatpush.xpose.msra.mxu0 0.0
    %2357 = vmatpush.xpose.msra.mxu0 0.0
    %2358 = vmatpush.xpose.msra.mxu0 0.0
    %2359 = vmatpush.xpose.msra.mxu0 0.0
    %2360 = vmatpush.xpose.msra.mxu0 0.0
    %2361 = vmatpush.xpose.msra.mxu0 0.0
    %2362 = vmatpush.xpose.msra.mxu0 0.0
    %2363 = vmatpush.xpose.msra.mxu0 0.0
    %2364 = vmatpush.xpose.msra.mxu0 0.0
    %2365 = vmatpush.xpose.msra.mxu0 0.0
    %2366 = vmatpush.xpose.msra.mxu0 0.0
    %2367 = vmatpush.xpose.msra.mxu0 0.0
    %2368 = vmatpush.xpose.msra.mxu0 0.0
    %2369 = vmatpush.xpose.msra.mxu0 0.0
    %2370 = vmatpush.xpose.msra.mxu0 %v2353
    %2371 = vmatmul.f32.gmra.mxu0 %v2350
    %v2372 = vpop.f32.mrf.mxu0
    %v2373 = vadd.f32 0.0, %v2372
    %2374 = vdwg.mxu0
    %v2376 = vsel %vm300, %v2227, 0
    %v2379 = vsel %vm300, %v2278, 0
    %2381 = vmatpush.xpose.msra.mxu0 0.0
    %2382 = vmatpush.xpose.msra.mxu0 0.0
    %2383 = vmatpush.xpose.msra.mxu0 0.0
    %2384 = vmatpush.xpose.msra.mxu0 0.0
    %2385 = vmatpush.xpose.msra.mxu0 0.0
    %2386 = vmatpush.xpose.msra.mxu0 0.0
    %2387 = vmatpush.xpose.msra.mxu0 0.0
    %2388 = vmatpush.xpose.msra.mxu0 0.0
    %2389 = vmatpush.xpose.msra.mxu0 0.0
    %2390 = vmatpush.xpose.msra.mxu0 0.0
    %2391 = vmatpush.xpose.msra.mxu0 0.0
    %2392 = vmatpush.xpose.msra.mxu0 0.0
    %2393 = vmatpush.xpose.msra.mxu0 0.0
    %2394 = vmatpush.xpose.msra.mxu0 0.0
    %2395 = vmatpush.xpose.msra.mxu0 0.0
    %2396 = vmatpush.xpose.msra.mxu0 %v2379
    %2397 = vmatmul.f32.gmra.mxu0 %v2376
    %v2398 = vpop.f32.mrf.mxu0
    %v2399 = vadd.f32 0.0, %v2398
    %2400 = vdwg.mxu0
    %v2402 = vsel %vm300, %v2230, 0
    %v2405 = vsel %vm300, %v2281, 0
    %2407 = vmatpush.xpose.msra.mxu0 0.0
    %2408 = vmatpush.xpose.msra.mxu0 0.0
    %2409 = vmatpush.xpose.msra.mxu0 0.0
    %2410 = vmatpush.xpose.msra.mxu0 0.0
    %2411 = vmatpush.xpose.msra.mxu0 0.0
    %2412 = vmatpush.xpose.msra.mxu0 0.0
    %2413 = vmatpush.xpose.msra.mxu0 0.0
    %2414 = vmatpush.xpose.msra.mxu0 0.0
    %2415 = vmatpush.xpose.msra.mxu0 0.0
    %2416 = vmatpush.xpose.msra.mxu0 0.0
    %2417 = vmatpush.xpose.msra.mxu0 0.0
    %2418 = vmatpush.xpose.msra.mxu0 0.0
    %2419 = vmatpush.xpose.msra.mxu0 0.0
    %2420 = vmatpush.xpose.msra.mxu0 0.0
    %2421 = vmatpush.xpose.msra.mxu0 0.0
    %2422 = vmatpush.xpose.msra.mxu0 %v2405
    %2423 = vmatmul.f32.gmra.mxu0 %v2402
    %v2424 = vpop.f32.mrf.mxu0
    %v2425 = vadd.f32 0.0, %v2424
    %2426 = vdwg.mxu0
    %v2428 = vsel %vm300, %v2233, 0
    %v2431 = vsel %vm300, %v2284, 0
    %2433 = vmatpush.xpose.msra.mxu0 0.0
    %2434 = vmatpush.xpose.msra.mxu0 0.0
    %2435 = vmatpush.xpose.msra.mxu0 0.0
    %2436 = vmatpush.xpose.msra.mxu0 0.0
    %2437 = vmatpush.xpose.msra.mxu0 0.0
    %2438 = vmatpush.xpose.msra.mxu0 0.0
    %2439 = vmatpush.xpose.msra.mxu0 0.0
    %2440 = vmatpush.xpose.msra.mxu0 0.0
    %2441 = vmatpush.xpose.msra.mxu0 0.0
    %2442 = vmatpush.xpose.msra.mxu0 0.0
    %2443 = vmatpush.xpose.msra.mxu0 0.0
    %2444 = vmatpush.xpose.msra.mxu0 0.0
    %2445 = vmatpush.xpose.msra.mxu0 0.0
    %2446 = vmatpush.xpose.msra.mxu0 0.0
    %2447 = vmatpush.xpose.msra.mxu0 0.0
    %2448 = vmatpush.xpose.msra.mxu0 %v2431
    %2449 = vmatmul.f32.gmra.mxu0 %v2428
    %v2450 = vpop.f32.mrf.mxu0
    %v2451 = vadd.f32 0.0, %v2450
    %2452 = vdwg.mxu0
    %v2454 = vsel %vm300, %v2236, 0
    %v2457 = vsel %vm300, %v2287, 0
    %2459 = vmatpush.xpose.msra.mxu0 0.0
    %2460 = vmatpush.xpose.msra.mxu0 0.0
    %2461 = vmatpush.xpose.msra.mxu0 0.0
    %2462 = vmatpush.xpose.msra.mxu0 0.0
    %2463 = vmatpush.xpose.msra.mxu0 0.0
    %2464 = vmatpush.xpose.msra.mxu0 0.0
    %2465 = vmatpush.xpose.msra.mxu0 0.0
    %2466 = vmatpush.xpose.msra.mxu0 0.0
    %2467 = vmatpush.xpose.msra.mxu0 0.0
    %2468 = vmatpush.xpose.msra.mxu0 0.0
    %2469 = vmatpush.xpose.msra.mxu0 0.0
    %2470 = vmatpush.xpose.msra.mxu0 0.0
    %2471 = vmatpush.xpose.msra.mxu0 0.0
    %2472 = vmatpush.xpose.msra.mxu0 0.0
    %2473 = vmatpush.xpose.msra.mxu0 0.0
    %2474 = vmatpush.xpose.msra.mxu0 %v2457
    %2475 = vmatmul.f32.gmra.mxu0 %v2454
    %v2476 = vpop.f32.mrf.mxu0
    %v2477 = vadd.f32 0.0, %v2476
    %2478 = vdwg.mxu0
    %v2480 = vsel %vm300, %v2239, 0
    %v2483 = vsel %vm300, %v2290, 0
    %2485 = vmatpush.xpose.msra.mxu0 0.0
    %2486 = vmatpush.xpose.msra.mxu0 0.0
    %2487 = vmatpush.xpose.msra.mxu0 0.0
    %2488 = vmatpush.xpose.msra.mxu0 0.0
    %2489 = vmatpush.xpose.msra.mxu0 0.0
    %2490 = vmatpush.xpose.msra.mxu0 0.0
    %2491 = vmatpush.xpose.msra.mxu0 0.0
    %2492 = vmatpush.xpose.msra.mxu0 0.0
    %2493 = vmatpush.xpose.msra.mxu0 0.0
    %2494 = vmatpush.xpose.msra.mxu0 0.0
    %2495 = vmatpush.xpose.msra.mxu0 0.0
    %2496 = vmatpush.xpose.msra.mxu0 0.0
    %2497 = vmatpush.xpose.msra.mxu0 0.0
    %2498 = vmatpush.xpose.msra.mxu0 0.0
    %2499 = vmatpush.xpose.msra.mxu0 0.0
    %2500 = vmatpush.xpose.msra.mxu0 %v2483
    %2501 = vmatmul.f32.gmra.mxu0 %v2480
    %v2502 = vpop.f32.mrf.mxu0
    %v2503 = vadd.f32 0.0, %v2502
    %2504 = vdwg.mxu0
    %v2506 = vsel %vm300, %v2242, 0
    %v2509 = vsel %vm300, %v2293, 0
    %2511 = vmatpush.xpose.msra.mxu0 0.0
    %2512 = vmatpush.xpose.msra.mxu0 0.0
    %2513 = vmatpush.xpose.msra.mxu0 0.0
    %2514 = vmatpush.xpose.msra.mxu0 0.0
    %2515 = vmatpush.xpose.msra.mxu0 0.0
    %2516 = vmatpush.xpose.msra.mxu0 0.0
    %2517 = vmatpush.xpose.msra.mxu0 0.0
    %2518 = vmatpush.xpose.msra.mxu0 0.0
    %2519 = vmatpush.xpose.msra.mxu0 0.0
    %2520 = vmatpush.xpose.msra.mxu0 0.0
    %2521 = vmatpush.xpose.msra.mxu0 0.0
    %2522 = vmatpush.xpose.msra.mxu0 0.0
    %2523 = vmatpush.xpose.msra.mxu0 0.0
    %2524 = vmatpush.xpose.msra.mxu0 0.0
    %2525 = vmatpush.xpose.msra.mxu0 0.0
    %2526 = vmatpush.xpose.msra.mxu0 %v2509
    %2527 = vmatmul.f32.gmra.mxu0 %v2506
    %v2528 = vpop.f32.mrf.mxu0
    %v2529 = vadd.f32 0.0, %v2528
    %2530 = vdwg.mxu0
    %v2532 = vsel %vm300, %v2245, 0
    %v2535 = vsel %vm300, %v2296, 0
    %2537 = vmatpush.xpose.msra.mxu0 0.0
    %2538 = vmatpush.xpose.msra.mxu0 0.0
    %2539 = vmatpush.xpose.msra.mxu0 0.0
    %2540 = vmatpush.xpose.msra.mxu0 0.0
    %2541 = vmatpush.xpose.msra.mxu0 0.0
    %2542 = vmatpush.xpose.msra.mxu0 0.0
    %2543 = vmatpush.xpose.msra.mxu0 0.0
    %2544 = vmatpush.xpose.msra.mxu0 0.0
    %2545 = vmatpush.xpose.msra.mxu0 0.0
    %2546 = vmatpush.xpose.msra.mxu0 0.0
    %2547 = vmatpush.xpose.msra.mxu0 0.0
    %2548 = vmatpush.xpose.msra.mxu0 0.0
    %2549 = vmatpush.xpose.msra.mxu0 0.0
    %2550 = vmatpush.xpose.msra.mxu0 0.0
    %2551 = vmatpush.xpose.msra.mxu0 0.0
    %2552 = vmatpush.xpose.msra.mxu0 %v2535
    %2553 = vmatmul.f32.gmra.mxu0 %v2532
    %v2554 = vpop.f32.mrf.mxu0
    %v2555 = vadd.f32 0.0, %v2554
    %2556 = vdwg.mxu0
    %v2557 = vsel %vm300, %v2373, -inf
    %2558 = vmax.xlane.f32.xlu0 %v2557
    %v2559 = vpop.xlane.xlu0 %2558
    %v2560 = vsel %vm300, %v2399, -inf
    %2561 = vmax.xlane.f32.xlu0 %v2560
    %v2562 = vpop.xlane.xlu0 %2561
    %v2563 = vsel %vm300, %v2425, -inf
    %2564 = vmax.xlane.f32.xlu0 %v2563
    %v2565 = vpop.xlane.xlu0 %2564
    %v2566 = vsel %vm300, %v2451, -inf
    %2567 = vmax.xlane.f32.xlu0 %v2566
    %v2568 = vpop.xlane.xlu0 %2567
    %v2569 = vsel %vm300, %v2477, -inf
    %2570 = vmax.xlane.f32.xlu0 %v2569
    %v2571 = vpop.xlane.xlu0 %2570
    %v2572 = vsel %vm300, %v2503, -inf
    %2573 = vmax.xlane.f32.xlu0 %v2572
    %v2574 = vpop.xlane.xlu0 %2573
    %v2575 = vsel %vm300, %v2529, -inf
    %2576 = vmax.xlane.f32.xlu0 %v2575
    %v2577 = vpop.xlane.xlu0 %2576
    %v2578 = vsel %vm300, %v2555, -inf
    %2579 = vmax.xlane.f32.xlu0 %v2578
    %v2580 = vpop.xlane.xlu0 %2579
    %v2581 = vsub.f32 %v2373, %v2559
    %v2582 = vsub.f32 %v2399, %v2562
    %v2583 = vsub.f32 %v2425, %v2565
    %v2584 = vsub.f32 %v2451, %v2568
    %v2585 = vsub.f32 %v2477, %v2571
    %v2586 = vsub.f32 %v2503, %v2574
    %v2587 = vsub.f32 %v2529, %v2577
    %v2588 = vsub.f32 %v2555, %v2580
    %v2589 = vmul.f32 %v2581, 1.442695
    %v2590 = vpow.pop %v2589
    %v2591 = vmul.f32 %v2582, 1.442695
    %v2592 = vpow.pop %v2591
    %v2593 = vmul.f32 %v2583, 1.442695
    %v2594 = vpow.pop %v2593
    %v2595 = vmul.f32 %v2584, 1.442695
    %v2596 = vpow.pop %v2595
    %v2597 = vmul.f32 %v2585, 1.442695
    %v2598 = vpow.pop %v2597
    %v2599 = vmul.f32 %v2586, 1.442695
    %v2600 = vpow.pop %v2599
    %v2601 = vmul.f32 %v2587, 1.442695
    %v2602 = vpow.pop %v2601
    %v2603 = vmul.f32 %v2588, 1.442695
    %v2604 = vpow.pop %v2603
    %v2605 = vsel %vm300, %v2590, 0.0
    %2606 = vadd.xlane.f32.xlu0 %v2605
    %v2607 = vpop.xlane.xlu0 %2606
    %v2608 = vsel %vm300, %v2592, 0.0
    %2609 = vadd.xlane.f32.xlu0 %v2608
    %v2610 = vpop.xlane.xlu0 %2609
    %v2611 = vsel %vm300, %v2594, 0.0
    %2612 = vadd.xlane.f32.xlu0 %v2611
    %v2613 = vpop.xlane.xlu0 %2612
    %v2614 = vsel %vm300, %v2596, 0.0
    %2615 = vadd.xlane.f32.xlu0 %v2614
    %v2616 = vpop.xlane.xlu0 %2615
    %v2617 = vsel %vm300, %v2598, 0.0
    %2618 = vadd.xlane.f32.xlu0 %v2617
    %v2619 = vpop.xlane.xlu0 %2618
    %v2620 = vsel %vm300, %v2600, 0.0
    %2621 = vadd.xlane.f32.xlu0 %v2620
    %v2622 = vpop.xlane.xlu0 %2621
    %v2623 = vsel %vm300, %v2602, 0.0
    %2624 = vadd.xlane.f32.xlu0 %v2623
    %v2625 = vpop.xlane.xlu0 %2624
    %v2626 = vsel %vm300, %v2604, 0.0
    %2627 = vadd.xlane.f32.xlu0 %v2626
    %v2628 = vpop.xlane.xlu0 %2627
    %v2629 = vrcp.pop %v2607
    %v2630 = vrcp.pop %v2610
    %v2631 = vrcp.pop %v2613
    %v2632 = vrcp.pop %v2616
    %v2633 = vrcp.pop %v2619
    %v2634 = vrcp.pop %v2622
    %v2635 = vrcp.pop %v2625
    %v2636 = vrcp.pop %v2628
    %v2637 = vmul.f32 %v2590, %v2629
    %v2638 = vmul.f32 %v2592, %v2630
    %v2639 = vmul.f32 %v2594, %v2631
    %v2640 = vmul.f32 %v2596, %v2632
    %v2641 = vmul.f32 %v2598, %v2633
    %v2642 = vmul.f32 %v2600, %v2634
    %v2643 = vmul.f32 %v2602, %v2635
    %v2644 = vmul.f32 %v2604, %v2636
    %v2646 = vsel %vm300, %v2637, 0
    %2648 = vmatpush.msra.mxu0 0.0
    %2649 = vmatpush.msra.mxu0 0.0
    %2650 = vmatpush.msra.mxu0 0.0
    %2651 = vmatpush.msra.mxu0 0.0
    %2652 = vmatpush.msra.mxu0 0.0
    %2653 = vmatpush.msra.mxu0 0.0
    %2654 = vmatpush.msra.mxu0 0.0
    %2655 = vmatpush.msra.mxu0 0.0
    %2656 = vmatpush.msra.mxu0 0.0
    %2657 = vmatpush.msra.mxu0 0.0
    %2658 = vmatpush.msra.mxu0 0.0
    %2659 = vmatpush.msra.mxu0 0.0
    %2660 = vmatpush.msra.mxu0 0.0
    %2661 = vmatpush.msra.mxu0 0.0
    %2662 = vmatpush.msra.mxu0 0.0
    %2663 = vmatpush.msra.mxu0 %v2326
    %2664 = vmatmul.f32.gmra.mxu0 %v2646
    %v2665 = vpop.f32.mrf.mxu0
    %v2666 = vadd.f32 0.0, %v2665
    %2667 = vdwg.mxu0
    %v2669 = vsel %vm300, %v2638, 0
    %2671 = vmatpush.msra.mxu0 0.0
    %2672 = vmatpush.msra.mxu0 0.0
    %2673 = vmatpush.msra.mxu0 0.0
    %2674 = vmatpush.msra.mxu0 0.0
    %2675 = vmatpush.msra.mxu0 0.0
    %2676 = vmatpush.msra.mxu0 0.0
    %2677 = vmatpush.msra.mxu0 0.0
    %2678 = vmatpush.msra.mxu0 0.0
    %2679 = vmatpush.msra.mxu0 0.0
    %2680 = vmatpush.msra.mxu0 0.0
    %2681 = vmatpush.msra.mxu0 0.0
    %2682 = vmatpush.msra.mxu0 0.0
    %2683 = vmatpush.msra.mxu0 0.0
    %2684 = vmatpush.msra.mxu0 0.0
    %2685 = vmatpush.msra.mxu0 0.0
    %2686 = vmatpush.msra.mxu0 %v2329
    %2687 = vmatmul.f32.gmra.mxu0 %v2669
    %v2688 = vpop.f32.mrf.mxu0
    %v2689 = vadd.f32 0.0, %v2688
    %2690 = vdwg.mxu0
    %v2692 = vsel %vm300, %v2639, 0
    %2694 = vmatpush.msra.mxu0 0.0
    %2695 = vmatpush.msra.mxu0 0.0
    %2696 = vmatpush.msra.mxu0 0.0
    %2697 = vmatpush.msra.mxu0 0.0
    %2698 = vmatpush.msra.mxu0 0.0
    %2699 = vmatpush.msra.mxu0 0.0
    %2700 = vmatpush.msra.mxu0 0.0
    %2701 = vmatpush.msra.mxu0 0.0
    %2702 = vmatpush.msra.mxu0 0.0
    %2703 = vmatpush.msra.mxu0 0.0
    %2704 = vmatpush.msra.mxu0 0.0
    %2705 = vmatpush.msra.mxu0 0.0
    %2706 = vmatpush.msra.mxu0 0.0
    %2707 = vmatpush.msra.mxu0 0.0
    %2708 = vmatpush.msra.mxu0 0.0
    %2709 = vmatpush.msra.mxu0 %v2332
    %2710 = vmatmul.f32.gmra.mxu0 %v2692
    %v2711 = vpop.f32.mrf.mxu0
    %v2712 = vadd.f32 0.0, %v2711
    %2713 = vdwg.mxu0
    %v2715 = vsel %vm300, %v2640, 0
    %2717 = vmatpush.msra.mxu0 0.0
    %2718 = vmatpush.msra.mxu0 0.0
    %2719 = vmatpush.msra.mxu0 0.0
    %2720 = vmatpush.msra.mxu0 0.0
    %2721 = vmatpush.msra.mxu0 0.0
    %2722 = vmatpush.msra.mxu0 0.0
    %2723 = vmatpush.msra.mxu0 0.0
    %2724 = vmatpush.msra.mxu0 0.0
    %2725 = vmatpush.msra.mxu0 0.0
    %2726 = vmatpush.msra.mxu0 0.0
    %2727 = vmatpush.msra.mxu0 0.0
    %2728 = vmatpush.msra.mxu0 0.0
    %2729 = vmatpush.msra.mxu0 0.0
    %2730 = vmatpush.msra.mxu0 0.0
    %2731 = vmatpush.msra.mxu0 0.0
    %2732 = vmatpush.msra.mxu0 %v2335
    %2733 = vmatmul.f32.gmra.mxu0 %v2715
    %v2734 = vpop.f32.mrf.mxu0
    %v2735 = vadd.f32 0.0, %v2734
    %2736 = vdwg.mxu0
    %v2738 = vsel %vm300, %v2641, 0
    %2740 = vmatpush.msra.mxu0 0.0
    %2741 = vmatpush.msra.mxu0 0.0
    %2742 = vmatpush.msra.mxu0 0.0
    %2743 = vmatpush.msra.mxu0 0.0
    %2744 = vmatpush.msra.mxu0 0.0
    %2745 = vmatpush.msra.mxu0 0.0
    %2746 = vmatpush.msra.mxu0 0.0
    %2747 = vmatpush.msra.mxu0 0.0
    %2748 = vmatpush.msra.mxu0 0.0
    %2749 = vmatpush.msra.mxu0 0.0
    %2750 = vmatpush.msra.mxu0 0.0
    %2751 = vmatpush.msra.mxu0 0.0
    %2752 = vmatpush.msra.mxu0 0.0
    %2753 = vmatpush.msra.mxu0 0.0
    %2754 = vmatpush.msra.mxu0 0.0
    %2755 = vmatpush.msra.mxu0 %v2338
    %2756 = vmatmul.f32.gmra.mxu0 %v2738
    %v2757 = vpop.f32.mrf.mxu0
    %v2758 = vadd.f32 0.0, %v2757
    %2759 = vdwg.mxu0
    %v2761 = vsel %vm300, %v2642, 0
    %2763 = vmatpush.msra.mxu0 0.0
    %2764 = vmatpush.msra.mxu0 0.0
    %2765 = vmatpush.msra.mxu0 0.0
    %2766 = vmatpush.msra.mxu0 0.0
    %2767 = vmatpush.msra.mxu0 0.0
    %2768 = vmatpush.msra.mxu0 0.0
    %2769 = vmatpush.msra.mxu0 0.0
    %2770 = vmatpush.msra.mxu0 0.0
    %2771 = vmatpush.msra.mxu0 0.0
    %2772 = vmatpush.msra.mxu0 0.0
    %2773 = vmatpush.msra.mxu0 0.0
    %2774 = vmatpush.msra.mxu0 0.0
    %2775 = vmatpush.msra.mxu0 0.0
    %2776 = vmatpush.msra.mxu0 0.0
    %2777 = vmatpush.msra.mxu0 0.0
    %2778 = vmatpush.msra.mxu0 %v2341
    %2779 = vmatmul.f32.gmra.mxu0 %v2761
    %v2780 = vpop.f32.mrf.mxu0
    %v2781 = vadd.f32 0.0, %v2780
    %2782 = vdwg.mxu0
    %v2784 = vsel %vm300, %v2643, 0
    %2786 = vmatpush.msra.mxu0 0.0
    %2787 = vmatpush.msra.mxu0 0.0
    %2788 = vmatpush.msra.mxu0 0.0
    %2789 = vmatpush.msra.mxu0 0.0
    %2790 = vmatpush.msra.mxu0 0.0
    %2791 = vmatpush.msra.mxu0 0.0
    %2792 = vmatpush.msra.mxu0 0.0
    %2793 = vmatpush.msra.mxu0 0.0
    %2794 = vmatpush.msra.mxu0 0.0
    %2795 = vmatpush.msra.mxu0 0.0
    %2796 = vmatpush.msra.mxu0 0.0
    %2797 = vmatpush.msra.mxu0 0.0
    %2798 = vmatpush.msra.mxu0 0.0
    %2799 = vmatpush.msra.mxu0 0.0
    %2800 = vmatpush.msra.mxu0 0.0
    %2801 = vmatpush.msra.mxu0 %v2344
    %2802 = vmatmul.f32.gmra.mxu0 %v2784
    %v2803 = vpop.f32.mrf.mxu0
    %v2804 = vadd.f32 0.0, %v2803
    %2805 = vdwg.mxu0
    %v2807 = vsel %vm300, %v2644, 0
    %2809 = vmatpush.msra.mxu0 0.0
    %2810 = vmatpush.msra.mxu0 0.0
    %2811 = vmatpush.msra.mxu0 0.0
    %2812 = vmatpush.msra.mxu0 0.0
    %2813 = vmatpush.msra.mxu0 0.0
    %2814 = vmatpush.msra.mxu0 0.0
    %2815 = vmatpush.msra.mxu0 0.0
    %2816 = vmatpush.msra.mxu0 0.0
    %2817 = vmatpush.msra.mxu0 0.0
    %2818 = vmatpush.msra.mxu0 0.0
    %2819 = vmatpush.msra.mxu0 0.0
    %2820 = vmatpush.msra.mxu0 0.0
    %2821 = vmatpush.msra.mxu0 0.0
    %2822 = vmatpush.msra.mxu0 0.0
    %2823 = vmatpush.msra.mxu0 0.0
    %2824 = vmatpush.msra.mxu0 %v2347
    %2825 = vmatmul.f32.gmra.mxu0 %v2807
    %v2826 = vpop.f32.mrf.mxu0
    %v2827 = vadd.f32 0.0, %v2826
    %2828 = vdwg.mxu0
    %v2829 = vld [vmem:[%s10] sm:$0xff]
    %2830 = vrot.lane.b32.xlu0 %v2224, 120
    %v2831 = vpop.permute.xlu0 %2830
    %2832 = vrot.lane.b32.xlu0 %v2275, 120
    %v2833 = vpop.permute.xlu0 %2832
    %v2834 = vsel %vm300, %v2831, 0
    %v2836 = vsel %vm300, %v2833, 0
    %2838 = vmatpush.xpose.msra.mxu0 0.0
    %2839 = vmatpush.xpose.msra.mxu0 0.0
    %2840 = vmatpush.xpose.msra.mxu0 0.0
    %2841 = vmatpush.xpose.msra.mxu0 0.0
    %2842 = vmatpush.xpose.msra.mxu0 0.0
    %2843 = vmatpush.xpose.msra.mxu0 0.0
    %2844 = vmatpush.xpose.msra.mxu0 0.0
    %2845 = vmatpush.xpose.msra.mxu0 0.0
    %2846 = vmatpush.xpose.msra.mxu0 0.0
    %2847 = vmatpush.xpose.msra.mxu0 0.0
    %2848 = vmatpush.xpose.msra.mxu0 0.0
    %2849 = vmatpush.xpose.msra.mxu0 0.0
    %2850 = vmatpush.xpose.msra.mxu0 0.0
    %2851 = vmatpush.xpose.msra.mxu0 0.0
    %2852 = vmatpush.xpose.msra.mxu0 0.0
    %2853 = vmatpush.xpose.msra.mxu0 %v2836
    %2854 = vmatmul.f32.gmra.mxu0 %v2834
    %v2855 = vpop.f32.mrf.mxu0
    %v2856 = vadd.f32 0.0, %v2855
    %2857 = vdwg.mxu0
    %2858 = vrot.lane.b32.xlu0 %v2227, 120
    %v2859 = vpop.permute.xlu0 %2858
    %2860 = vrot.lane.b32.xlu0 %v2278, 120
    %v2861 = vpop.permute.xlu0 %2860
    %v2862 = vsel %vm300, %v2859, 0
    %v2864 = vsel %vm300, %v2861, 0
    %2866 = vmatpush.xpose.msra.mxu0 0.0
    %2867 = vmatpush.xpose.msra.mxu0 0.0
    %2868 = vmatpush.xpose.msra.mxu0 0.0
    %2869 = vmatpush.xpose.msra.mxu0 0.0
    %2870 = vmatpush.xpose.msra.mxu0 0.0
    %2871 = vmatpush.xpose.msra.mxu0 0.0
    %2872 = vmatpush.xpose.msra.mxu0 0.0
    %2873 = vmatpush.xpose.msra.mxu0 0.0
    %2874 = vmatpush.xpose.msra.mxu0 0.0
    %2875 = vmatpush.xpose.msra.mxu0 0.0
    %2876 = vmatpush.xpose.msra.mxu0 0.0
    %2877 = vmatpush.xpose.msra.mxu0 0.0
    %2878 = vmatpush.xpose.msra.mxu0 0.0
    %2879 = vmatpush.xpose.msra.mxu0 0.0
    %2880 = vmatpush.xpose.msra.mxu0 0.0
    %2881 = vmatpush.xpose.msra.mxu0 %v2864
    %2882 = vmatmul.f32.gmra.mxu0 %v2862
    %v2883 = vpop.f32.mrf.mxu0
    %v2884 = vadd.f32 0.0, %v2883
    %2885 = vdwg.mxu0
    %2886 = vrot.lane.b32.xlu0 %v2230, 120
    %v2887 = vpop.permute.xlu0 %2886
    %2888 = vrot.lane.b32.xlu0 %v2281, 120
    %v2889 = vpop.permute.xlu0 %2888
    %v2890 = vsel %vm300, %v2887, 0
    %v2892 = vsel %vm300, %v2889, 0
    %2894 = vmatpush.xpose.msra.mxu0 0.0
    %2895 = vmatpush.xpose.msra.mxu0 0.0
    %2896 = vmatpush.xpose.msra.mxu0 0.0
    %2897 = vmatpush.xpose.msra.mxu0 0.0
    %2898 = vmatpush.xpose.msra.mxu0 0.0
    %2899 = vmatpush.xpose.msra.mxu0 0.0
    %2900 = vmatpush.xpose.msra.mxu0 0.0
    %2901 = vmatpush.xpose.msra.mxu0 0.0
    %2902 = vmatpush.xpose.msra.mxu0 0.0
    %2903 = vmatpush.xpose.msra.mxu0 0.0
    %2904 = vmatpush.xpose.msra.mxu0 0.0
    %2905 = vmatpush.xpose.msra.mxu0 0.0
    %2906 = vmatpush.xpose.msra.mxu0 0.0
    %2907 = vmatpush.xpose.msra.mxu0 0.0
    %2908 = vmatpush.xpose.msra.mxu0 0.0
    %2909 = vmatpush.xpose.msra.mxu0 %v2892
    %2910 = vmatmul.f32.gmra.mxu0 %v2890
    %v2911 = vpop.f32.mrf.mxu0
    %v2912 = vadd.f32 0.0, %v2911
    %2913 = vdwg.mxu0
    %2914 = vrot.lane.b32.xlu0 %v2233, 120
    %v2915 = vpop.permute.xlu0 %2914
    %2916 = vrot.lane.b32.xlu0 %v2284, 120
    %v2917 = vpop.permute.xlu0 %2916
    %v2918 = vsel %vm300, %v2915, 0
    %v2920 = vsel %vm300, %v2917, 0
    %2922 = vmatpush.xpose.msra.mxu0 0.0
    %2923 = vmatpush.xpose.msra.mxu0 0.0
    %2924 = vmatpush.xpose.msra.mxu0 0.0
    %2925 = vmatpush.xpose.msra.mxu0 0.0
    %2926 = vmatpush.xpose.msra.mxu0 0.0
    %2927 = vmatpush.xpose.msra.mxu0 0.0
    %2928 = vmatpush.xpose.msra.mxu0 0.0
    %2929 = vmatpush.xpose.msra.mxu0 0.0
    %2930 = vmatpush.xpose.msra.mxu0 0.0
    %2931 = vmatpush.xpose.msra.mxu0 0.0
    %2932 = vmatpush.xpose.msra.mxu0 0.0
    %2933 = vmatpush.xpose.msra.mxu0 0.0
    %2934 = vmatpush.xpose.msra.mxu0 0.0
    %2935 = vmatpush.xpose.msra.mxu0 0.0
    %2936 = vmatpush.xpose.msra.mxu0 0.0
    %2937 = vmatpush.xpose.msra.mxu0 %v2920
    %2938 = vmatmul.f32.gmra.mxu0 %v2918
    %v2939 = vpop.f32.mrf.mxu0
    %v2940 = vadd.f32 0.0, %v2939
    %2941 = vdwg.mxu0
    %2942 = vrot.lane.b32.xlu0 %v2236, 120
    %v2943 = vpop.permute.xlu0 %2942
    %2944 = vrot.lane.b32.xlu0 %v2287, 120
    %v2945 = vpop.permute.xlu0 %2944
    %v2946 = vsel %vm300, %v2943, 0
    %v2948 = vsel %vm300, %v2945, 0
    %2950 = vmatpush.xpose.msra.mxu0 0.0
    %2951 = vmatpush.xpose.msra.mxu0 0.0
    %2952 = vmatpush.xpose.msra.mxu0 0.0
    %2953 = vmatpush.xpose.msra.mxu0 0.0
    %2954 = vmatpush.xpose.msra.mxu0 0.0
    %2955 = vmatpush.xpose.msra.mxu0 0.0
    %2956 = vmatpush.xpose.msra.mxu0 0.0
    %2957 = vmatpush.xpose.msra.mxu0 0.0
    %2958 = vmatpush.xpose.msra.mxu0 0.0
    %2959 = vmatpush.xpose.msra.mxu0 0.0
    %2960 = vmatpush.xpose.msra.mxu0 0.0
    %2961 = vmatpush.xpose.msra.mxu0 0.0
    %2962 = vmatpush.xpose.msra.mxu0 0.0
    %2963 = vmatpush.xpose.msra.mxu0 0.0
    %2964 = vmatpush.xpose.msra.mxu0 0.0
    %2965 = vmatpush.xpose.msra.mxu0 %v2948
    %2966 = vmatmul.f32.gmra.mxu0 %v2946
    %v2967 = vpop.f32.mrf.mxu0
    %v2968 = vadd.f32 0.0, %v2967
    %2969 = vdwg.mxu0
    %2970 = vrot.lane.b32.xlu0 %v2239, 120
    %v2971 = vpop.permute.xlu0 %2970
    %2972 = vrot.lane.b32.xlu0 %v2290, 120
    %v2973 = vpop.permute.xlu0 %2972
    %v2974 = vsel %vm300, %v2971, 0
    %v2976 = vsel %vm300, %v2973, 0
    %2978 = vmatpush.xpose.msra.mxu0 0.0
    %2979 = vmatpush.xpose.msra.mxu0 0.0
    %2980 = vmatpush.xpose.msra.mxu0 0.0
    %2981 = vmatpush.xpose.msra.mxu0 0.0
    %2982 = vmatpush.xpose.msra.mxu0 0.0
    %2983 = vmatpush.xpose.msra.mxu0 0.0
    %2984 = vmatpush.xpose.msra.mxu0 0.0
    %2985 = vmatpush.xpose.msra.mxu0 0.0
    %2986 = vmatpush.xpose.msra.mxu0 0.0
    %2987 = vmatpush.xpose.msra.mxu0 0.0
    %2988 = vmatpush.xpose.msra.mxu0 0.0
    %2989 = vmatpush.xpose.msra.mxu0 0.0
    %2990 = vmatpush.xpose.msra.mxu0 0.0
    %2991 = vmatpush.xpose.msra.mxu0 0.0
    %2992 = vmatpush.xpose.msra.mxu0 0.0
    %2993 = vmatpush.xpose.msra.mxu0 %v2976
    %2994 = vmatmul.f32.gmra.mxu0 %v2974
    %v2995 = vpop.f32.mrf.mxu0
    %v2996 = vadd.f32 0.0, %v2995
    %2997 = vdwg.mxu0
    %2998 = vrot.lane.b32.xlu0 %v2242, 120
    %v2999 = vpop.permute.xlu0 %2998
    %3000 = vrot.lane.b32.xlu0 %v2293, 120
    %v3001 = vpop.permute.xlu0 %3000
    %v3002 = vsel %vm300, %v2999, 0
    %v3004 = vsel %vm300, %v3001, 0
    %3006 = vmatpush.xpose.msra.mxu0 0.0
    %3007 = vmatpush.xpose.msra.mxu0 0.0
    %3008 = vmatpush.xpose.msra.mxu0 0.0
    %3009 = vmatpush.xpose.msra.mxu0 0.0
    %3010 = vmatpush.xpose.msra.mxu0 0.0
    %3011 = vmatpush.xpose.msra.mxu0 0.0
    %3012 = vmatpush.xpose.msra.mxu0 0.0
    %3013 = vmatpush.xpose.msra.mxu0 0.0
    %3014 = vmatpush.xpose.msra.mxu0 0.0
    %3015 = vmatpush.xpose.msra.mxu0 0.0
    %3016 = vmatpush.xpose.msra.mxu0 0.0
    %3017 = vmatpush.xpose.msra.mxu0 0.0
    %3018 = vmatpush.xpose.msra.mxu0 0.0
    %3019 = vmatpush.xpose.msra.mxu0 0.0
    %3020 = vmatpush.xpose.msra.mxu0 0.0
    %3021 = vmatpush.xpose.msra.mxu0 %v3004
    %3022 = vmatmul.f32.gmra.mxu0 %v3002
    %v3023 = vpop.f32.mrf.mxu0
    %v3024 = vadd.f32 0.0, %v3023
    %3025 = vdwg.mxu0
    %3026 = vrot.lane.b32.xlu0 %v2245, 120
    %v3027 = vpop.permute.xlu0 %3026
    %3028 = vrot.lane.b32.xlu0 %v2296, 120
    %v3029 = vpop.permute.xlu0 %3028
    %v3030 = vsel %vm300, %v3027, 0
    %v3032 = vsel %vm300, %v3029, 0
    %3034 = vmatpush.xpose.msra.mxu0 0.0
    %3035 = vmatpush.xpose.msra.mxu0 0.0
    %3036 = vmatpush.xpose.msra.mxu0 0.0
    %3037 = vmatpush.xpose.msra.mxu0 0.0
    %3038 = vmatpush.xpose.msra.mxu0 0.0
    %3039 = vmatpush.xpose.msra.mxu0 0.0
    %3040 = vmatpush.xpose.msra.mxu0 0.0
    %3041 = vmatpush.xpose.msra.mxu0 0.0
    %3042 = vmatpush.xpose.msra.mxu0 0.0
    %3043 = vmatpush.xpose.msra.mxu0 0.0
    %3044 = vmatpush.xpose.msra.mxu0 0.0
    %3045 = vmatpush.xpose.msra.mxu0 0.0
    %3046 = vmatpush.xpose.msra.mxu0 0.0
    %3047 = vmatpush.xpose.msra.mxu0 0.0
    %3048 = vmatpush.xpose.msra.mxu0 0.0
    %3049 = vmatpush.xpose.msra.mxu0 %v3032
    %3050 = vmatmul.f32.gmra.mxu0 %v3030
    %v3051 = vpop.f32.mrf.mxu0
    %v3052 = vadd.f32 0.0, %v3051
    %3053 = vdwg.mxu0
    %v3054 = vsel %vm300, %v2856, -inf
    %3055 = vmax.xlane.f32.xlu0 %v3054
    %v3056 = vpop.xlane.xlu0 %3055
    %v3057 = vsel %vm300, %v2884, -inf
    %3058 = vmax.xlane.f32.xlu0 %v3057
    %v3059 = vpop.xlane.xlu0 %3058
    %v3060 = vsel %vm300, %v2912, -inf
    %3061 = vmax.xlane.f32.xlu0 %v3060
    %v3062 = vpop.xlane.xlu0 %3061
    %v3063 = vsel %vm300, %v2940, -inf
    %3064 = vmax.xlane.f32.xlu0 %v3063
    %v3065 = vpop.xlane.xlu0 %3064
    %v3066 = vsel %vm300, %v2968, -inf
    %3067 = vmax.xlane.f32.xlu0 %v3066
    %v3068 = vpop.xlane.xlu0 %3067
    %v3069 = vsel %vm300, %v2996, -inf
    %3070 = vmax.xlane.f32.xlu0 %v3069
    %v3071 = vpop.xlane.xlu0 %3070
    %v3072 = vsel %vm300, %v3024, -inf
    %3073 = vmax.xlane.f32.xlu0 %v3072
    %v3074 = vpop.xlane.xlu0 %3073
    %v3075 = vsel %vm300, %v3052, -inf
    %3076 = vmax.xlane.f32.xlu0 %v3075
    %v3077 = vpop.xlane.xlu0 %3076
    %v3078 = vsub.f32 %v2856, %v3056
    %v3079 = vsub.f32 %v2884, %v3059
    %v3080 = vsub.f32 %v2912, %v3062
    %v3081 = vsub.f32 %v2940, %v3065
    %v3082 = vsub.f32 %v2968, %v3068
    %v3083 = vsub.f32 %v2996, %v3071
    %v3084 = vsub.f32 %v3024, %v3074
    %v3085 = vsub.f32 %v3052, %v3077
    %v3086 = vmul.f32 %v3078, 1.442695
    %v3087 = vpow.pop %v3086
    %v3088 = vmul.f32 %v3079, 1.442695
    %v3089 = vpow.pop %v3088
    %v3090 = vmul.f32 %v3080, 1.442695
    %v3091 = vpow.pop %v3090
    %v3092 = vmul.f32 %v3081, 1.442695
    %v3093 = vpow.pop %v3092
    %v3094 = vmul.f32 %v3082, 1.442695
    %v3095 = vpow.pop %v3094
    %v3096 = vmul.f32 %v3083, 1.442695
    %v3097 = vpow.pop %v3096
    %v3098 = vmul.f32 %v3084, 1.442695
    %v3099 = vpow.pop %v3098
    %v3100 = vmul.f32 %v3085, 1.442695
    %v3101 = vpow.pop %v3100
    %v3102 = vsel %vm300, %v3087, 0.0
    %3103 = vadd.xlane.f32.xlu0 %v3102
    %v3104 = vpop.xlane.xlu0 %3103
    %v3105 = vsel %vm300, %v3089, 0.0
    %3106 = vadd.xlane.f32.xlu0 %v3105
    %v3107 = vpop.xlane.xlu0 %3106
    %v3108 = vsel %vm300, %v3091, 0.0
    %3109 = vadd.xlane.f32.xlu0 %v3108
    %v3110 = vpop.xlane.xlu0 %3109
    %v3111 = vsel %vm300, %v3093, 0.0
    %3112 = vadd.xlane.f32.xlu0 %v3111
    %v3113 = vpop.xlane.xlu0 %3112
    %v3114 = vsel %vm300, %v3095, 0.0
    %3115 = vadd.xlane.f32.xlu0 %v3114
    %v3116 = vpop.xlane.xlu0 %3115
    %v3117 = vsel %vm300, %v3097, 0.0
    %3118 = vadd.xlane.f32.xlu0 %v3117
    %v3119 = vpop.xlane.xlu0 %3118
    %v3120 = vsel %vm300, %v3099, 0.0
    %3121 = vadd.xlane.f32.xlu0 %v3120
    %v3122 = vpop.xlane.xlu0 %3121
    %v3123 = vsel %vm300, %v3101, 0.0
    %3124 = vadd.xlane.f32.xlu0 %v3123
    %v3125 = vpop.xlane.xlu0 %3124
    %v3126 = vrcp.pop %v3104
    %v3127 = vrcp.pop %v3107
    %v3128 = vrcp.pop %v3110
    %v3129 = vrcp.pop %v3113
    %v3130 = vrcp.pop %v3116
    %v3131 = vrcp.pop %v3119
    %v3132 = vrcp.pop %v3122
    %v3133 = vrcp.pop %v3125
    %v3134 = vmul.f32 %v3087, %v3126
    %v3135 = vmul.f32 %v3089, %v3127
    %v3136 = vmul.f32 %v3091, %v3128
    %v3137 = vmul.f32 %v3093, %v3129
    %v3138 = vmul.f32 %v3095, %v3130
    %v3139 = vmul.f32 %v3097, %v3131
    %v3140 = vmul.f32 %v3099, %v3132
    %v3141 = vmul.f32 %v3101, %v3133
    %3143 = vrot.lane.b32.xlu0 %v2326, 120
    %v3144 = vpop.permute.xlu0 %3143
    %v3147 = vsel %vm300, %v3134, 0
    %3149 = vmatpush.msra.mxu0 0.0
    %3150 = vmatpush.msra.mxu0 0.0
    %3151 = vmatpush.msra.mxu0 0.0
    %3152 = vmatpush.msra.mxu0 0.0
    %3153 = vmatpush.msra.mxu0 0.0
    %3154 = vmatpush.msra.mxu0 0.0
    %3155 = vmatpush.msra.mxu0 0.0
    %3156 = vmatpush.msra.mxu0 0.0
    %3157 = vmatpush.msra.mxu0 0.0
    %3158 = vmatpush.msra.mxu0 0.0
    %3159 = vmatpush.msra.mxu0 0.0
    %3160 = vmatpush.msra.mxu0 0.0
    %3161 = vmatpush.msra.mxu0 0.0
    %3162 = vmatpush.msra.mxu0 0.0
    %3163 = vmatpush.msra.mxu0 0.0
    %3164 = vmatpush.msra.mxu0 %v3144
    %3165 = vmatmul.f32.gmra.mxu0 %v3147
    %v3166 = vpop.f32.mrf.mxu0
    %v3167 = vadd.f32 0.0, %v3166
    %3168 = vdwg.mxu0
    %3170 = vrot.lane.b32.xlu0 %v2329, 120
    %v3171 = vpop.permute.xlu0 %3170
    %v3174 = vsel %vm300, %v3135, 0
    %3176 = vmatpush.msra.mxu0 0.0
    %3177 = vmatpush.msra.mxu0 0.0
    %3178 = vmatpush.msra.mxu0 0.0
    %3179 = vmatpush.msra.mxu0 0.0
    %3180 = vmatpush.msra.mxu0 0.0
    %3181 = vmatpush.msra.mxu0 0.0
    %3182 = vmatpush.msra.mxu0 0.0
    %3183 = vmatpush.msra.mxu0 0.0
    %3184 = vmatpush.msra.mxu0 0.0
    %3185 = vmatpush.msra.mxu0 0.0
    %3186 = vmatpush.msra.mxu0 0.0
    %3187 = vmatpush.msra.mxu0 0.0
    %3188 = vmatpush.msra.mxu0 0.0
    %3189 = vmatpush.msra.mxu0 0.0
    %3190 = vmatpush.msra.mxu0 0.0
    %3191 = vmatpush.msra.mxu0 %v3171
    %3192 = vmatmul.f32.gmra.mxu0 %v3174
    %v3193 = vpop.f32.mrf.mxu0
    %v3194 = vadd.f32 0.0, %v3193
    %3195 = vdwg.mxu0
    %3197 = vrot.lane.b32.xlu0 %v2332, 120
    %v3198 = vpop.permute.xlu0 %3197
    %v3201 = vsel %vm300, %v3136, 0
    %3203 = vmatpush.msra.mxu0 0.0
    %3204 = vmatpush.msra.mxu0 0.0
    %3205 = vmatpush.msra.mxu0 0.0
    %3206 = vmatpush.msra.mxu0 0.0
    %3207 = vmatpush.msra.mxu0 0.0
    %3208 = vmatpush.msra.mxu0 0.0
    %3209 = vmatpush.msra.mxu0 0.0
    %3210 = vmatpush.msra.mxu0 0.0
    %3211 = vmatpush.msra.mxu0 0.0
    %3212 = vmatpush.msra.mxu0 0.0
    %3213 = vmatpush.msra.mxu0 0.0
    %3214 = vmatpush.msra.mxu0 0.0
    %3215 = vmatpush.msra.mxu0 0.0
    %3216 = vmatpush.msra.mxu0 0.0
    %3217 = vmatpush.msra.mxu0 0.0
    %3218 = vmatpush.msra.mxu0 %v3198
    %3219 = vmatmul.f32.gmra.mxu0 %v3201
    %v3220 = vpop.f32.mrf.mxu0
    %v3221 = vadd.f32 0.0, %v3220
    %3222 = vdwg.mxu0
    %3224 = vrot.lane.b32.xlu0 %v2335, 120
    %v3225 = vpop.permute.xlu0 %3224
    %v3228 = vsel %vm300, %v3137, 0
    %3230 = vmatpush.msra.mxu0 0.0
    %3231 = vmatpush.msra.mxu0 0.0
    %3232 = vmatpush.msra.mxu0 0.0
    %3233 = vmatpush.msra.mxu0 0.0
    %3234 = vmatpush.msra.mxu0 0.0
    %3235 = vmatpush.msra.mxu0 0.0
    %3236 = vmatpush.msra.mxu0 0.0
    %3237 = vmatpush.msra.mxu0 0.0
    %3238 = vmatpush.msra.mxu0 0.0
    %3239 = vmatpush.msra.mxu0 0.0
    %3240 = vmatpush.msra.mxu0 0.0
    %3241 = vmatpush.msra.mxu0 0.0
    %3242 = vmatpush.msra.mxu0 0.0
    %3243 = vmatpush.msra.mxu0 0.0
    %3244 = vmatpush.msra.mxu0 0.0
    %3245 = vmatpush.msra.mxu0 %v3225
    %3246 = vmatmul.f32.gmra.mxu0 %v3228
    %v3247 = vpop.f32.mrf.mxu0
    %v3248 = vadd.f32 0.0, %v3247
    %3249 = vdwg.mxu0
    %3251 = vrot.lane.b32.xlu0 %v2338, 120
    %v3252 = vpop.permute.xlu0 %3251
    %v3255 = vsel %vm300, %v3138, 0
    %3257 = vmatpush.msra.mxu0 0.0
    %3258 = vmatpush.msra.mxu0 0.0
    %3259 = vmatpush.msra.mxu0 0.0
    %3260 = vmatpush.msra.mxu0 0.0
    %3261 = vmatpush.msra.mxu0 0.0
    %3262 = vmatpush.msra.mxu0 0.0
    %3263 = vmatpush.msra.mxu0 0.0
    %3264 = vmatpush.msra.mxu0 0.0
    %3265 = vmatpush.msra.mxu0 0.0
    %3266 = vmatpush.msra.mxu0 0.0
    %3267 = vmatpush.msra.mxu0 0.0
    %3268 = vmatpush.msra.mxu0 0.0
    %3269 = vmatpush.msra.mxu0 0.0
    %3270 = vmatpush.msra.mxu0 0.0
    %3271 = vmatpush.msra.mxu0 0.0
    %3272 = vmatpush.msra.mxu0 %v3252
    %3273 = vmatmul.f32.gmra.mxu0 %v3255
    %v3274 = vpop.f32.mrf.mxu0
    %v3275 = vadd.f32 0.0, %v3274
    %3276 = vdwg.mxu0
    %3278 = vrot.lane.b32.xlu0 %v2341, 120
    %v3279 = vpop.permute.xlu0 %3278
    %v3282 = vsel %vm300, %v3139, 0
    %3284 = vmatpush.msra.mxu0 0.0
    %3285 = vmatpush.msra.mxu0 0.0
    %3286 = vmatpush.msra.mxu0 0.0
    %3287 = vmatpush.msra.mxu0 0.0
    %3288 = vmatpush.msra.mxu0 0.0
    %3289 = vmatpush.msra.mxu0 0.0
    %3290 = vmatpush.msra.mxu0 0.0
    %3291 = vmatpush.msra.mxu0 0.0
    %3292 = vmatpush.msra.mxu0 0.0
    %3293 = vmatpush.msra.mxu0 0.0
    %3294 = vmatpush.msra.mxu0 0.0
    %3295 = vmatpush.msra.mxu0 0.0
    %3296 = vmatpush.msra.mxu0 0.0
    %3297 = vmatpush.msra.mxu0 0.0
    %3298 = vmatpush.msra.mxu0 0.0
    %3299 = vmatpush.msra.mxu0 %v3279
    %3300 = vmatmul.f32.gmra.mxu0 %v3282
    %v3301 = vpop.f32.mrf.mxu0
    %v3302 = vadd.f32 0.0, %v3301
    %3303 = vdwg.mxu0
    %3305 = vrot.lane.b32.xlu0 %v2344, 120
    %v3306 = vpop.permute.xlu0 %3305
    %v3309 = vsel %vm300, %v3140, 0
    %3311 = vmatpush.msra.mxu0 0.0
    %3312 = vmatpush.msra.mxu0 0.0
    %3313 = vmatpush.msra.mxu0 0.0
    %3314 = vmatpush.msra.mxu0 0.0
    %3315 = vmatpush.msra.mxu0 0.0
    %3316 = vmatpush.msra.mxu0 0.0
    %3317 = vmatpush.msra.mxu0 0.0
    %3318 = vmatpush.msra.mxu0 0.0
    %3319 = vmatpush.msra.mxu0 0.0
    %3320 = vmatpush.msra.mxu0 0.0
    %3321 = vmatpush.msra.mxu0 0.0
    %3322 = vmatpush.msra.mxu0 0.0
    %3323 = vmatpush.msra.mxu0 0.0
    %3324 = vmatpush.msra.mxu0 0.0
    %3325 = vmatpush.msra.mxu0 0.0
    %3326 = vmatpush.msra.mxu0 %v3306
    %3327 = vmatmul.f32.gmra.mxu0 %v3309
    %v3328 = vpop.f32.mrf.mxu0
    %v3329 = vadd.f32 0.0, %v3328
    %3330 = vdwg.mxu0
    %3332 = vrot.lane.b32.xlu0 %v2347, 120
    %v3333 = vpop.permute.xlu0 %3332
    %v3336 = vsel %vm300, %v3141, 0
    %3338 = vmatpush.msra.mxu0 0.0
    %3339 = vmatpush.msra.mxu0 0.0
    %3340 = vmatpush.msra.mxu0 0.0
    %3341 = vmatpush.msra.mxu0 0.0
    %3342 = vmatpush.msra.mxu0 0.0
    %3343 = vmatpush.msra.mxu0 0.0
    %3344 = vmatpush.msra.mxu0 0.0
    %3345 = vmatpush.msra.mxu0 0.0
    %3346 = vmatpush.msra.mxu0 0.0
    %3347 = vmatpush.msra.mxu0 0.0
    %3348 = vmatpush.msra.mxu0 0.0
    %3349 = vmatpush.msra.mxu0 0.0
    %3350 = vmatpush.msra.mxu0 0.0
    %3351 = vmatpush.msra.mxu0 0.0
    %3352 = vmatpush.msra.mxu0 0.0
    %3353 = vmatpush.msra.mxu0 %v3333
    %3354 = vmatmul.f32.gmra.mxu0 %v3336
    %v3355 = vpop.f32.mrf.mxu0
    %v3356 = vadd.f32 0.0, %v3355
    %3357 = vdwg.mxu0
    %s3358 = scalar_lea.vmem %s10, 8
    %v3359 = vld [vmem:[%s3358] sm:$0xff]
    %v3361 = vsel %vm300, %v3167, 0
    %v3364 = vsel %vm300, %v3194, 0
    %v3367 = vsel %vm300, %v3221, 0
    %v3370 = vsel %vm300, %v3248, 0
    %v3373 = vsel %vm300, %v3275, 0
    %v3376 = vsel %vm300, %v3302, 0
    %v3379 = vsel %vm300, %v3329, 0
    %v3382 = vsel %vm300, %v3356, 0
    %3384 = vmatpush.msra.mxu0 0.0
    %3385 = vmatpush.msra.mxu0 0.0
    %3386 = vmatpush.msra.mxu0 0.0
    %3387 = vmatpush.msra.mxu0 0.0
    %3388 = vmatpush.msra.mxu0 0.0
    %3389 = vmatpush.msra.mxu0 0.0
    %3390 = vmatpush.msra.mxu0 0.0
    %3391 = vmatpush.msra.mxu0 0.0
    %3392 = vmatpush.msra.mxu0 0.0
    %3393 = vmatpush.msra.mxu0 0.0
    %3394 = vmatpush.msra.mxu0 0.0
    %3395 = vmatpush.msra.mxu0 0.0
    %3396 = vmatpush.msra.mxu0 0.0
    %3397 = vmatpush.msra.mxu0 0.0
    %3398 = vmatpush.msra.mxu0 0.0
    %3399 = vmatpush.msra.mxu0 %v3359
    %3400 = vmatmul.f32.gmra.mxu0 %v3361
    %v3401 = vpop.f32.mrf.mxu0
    %v3402 = vadd.f32 0.0, %v3401
    %3403 = vmatmul.f32.gmra.mxu0 %v3364
    %v3404 = vpop.f32.mrf.mxu0
    %v3405 = vadd.f32 0.0, %v3404
    %3406 = vmatmul.f32.gmra.mxu0 %v3367
    %v3407 = vpop.f32.mrf.mxu0
    %v3408 = vadd.f32 0.0, %v3407
    %3409 = vmatmul.f32.gmra.mxu0 %v3370
    %v3410 = vpop.f32.mrf.mxu0
    %v3411 = vadd.f32 0.0, %v3410
    %3412 = vmatmul.f32.gmra.mxu0 %v3373
    %v3413 = vpop.f32.mrf.mxu0
    %v3414 = vadd.f32 0.0, %v3413
    %3415 = vmatmul.f32.gmra.mxu0 %v3376
    %v3416 = vpop.f32.mrf.mxu0
    %v3417 = vadd.f32 0.0, %v3416
    %3418 = vmatmul.f32.gmra.mxu0 %v3379
    %v3419 = vpop.f32.mrf.mxu0
    %v3420 = vadd.f32 0.0, %v3419
    %3421 = vmatmul.f32.gmra.mxu0 %v3382
    %v3422 = vpop.f32.mrf.mxu0
    %v3423 = vadd.f32 0.0, %v3422
    %3424 = vdwg.mxu0
    %v3426 = vsel %vm300, %v2666, 0
    %v3429 = vsel %vm300, %v2689, 0
    %v3432 = vsel %vm300, %v2712, 0
    %v3435 = vsel %vm300, %v2735, 0
    %v3438 = vsel %vm300, %v2758, 0
    %v3441 = vsel %vm300, %v2781, 0
    %v3444 = vsel %vm300, %v2804, 0
    %v3447 = vsel %vm300, %v2827, 0
    %3449 = vmatpush.msra.mxu0 0.0
    %3450 = vmatpush.msra.mxu0 0.0
    %3451 = vmatpush.msra.mxu0 0.0
    %3452 = vmatpush.msra.mxu0 0.0
    %3453 = vmatpush.msra.mxu0 0.0
    %3454 = vmatpush.msra.mxu0 0.0
    %3455 = vmatpush.msra.mxu0 0.0
    %3456 = vmatpush.msra.mxu0 0.0
    %3457 = vmatpush.msra.mxu0 0.0
    %3458 = vmatpush.msra.mxu0 0.0
    %3459 = vmatpush.msra.mxu0 0.0
    %3460 = vmatpush.msra.mxu0 0.0
    %3461 = vmatpush.msra.mxu0 0.0
    %3462 = vmatpush.msra.mxu0 0.0
    %3463 = vmatpush.msra.mxu0 0.0
    %3464 = vmatpush.msra.mxu0 %v2829
    %3465 = vmatmul.f32.gmra.mxu0 %v3426
    %v3466 = vpop.f32.mrf.mxu0
    %v3467 = vadd.f32 %v3402, %v3466
    %3468 = vmatmul.f32.gmra.mxu0 %v3429
    %v3469 = vpop.f32.mrf.mxu0
    %v3470 = vadd.f32 %v3405, %v3469
    %3471 = vmatmul.f32.gmra.mxu0 %v3432
    %v3472 = vpop.f32.mrf.mxu0
    %v3473 = vadd.f32 %v3408, %v3472
    %3474 = vmatmul.f32.gmra.mxu0 %v3435
    %v3475 = vpop.f32.mrf.mxu0
    %v3476 = vadd.f32 %v3411, %v3475
    %3477 = vmatmul.f32.gmra.mxu0 %v3438
    %v3478 = vpop.f32.mrf.mxu0
    %v3479 = vadd.f32 %v3414, %v3478
    %3480 = vmatmul.f32.gmra.mxu0 %v3441
    %v3481 = vpop.f32.mrf.mxu0
    %v3482 = vadd.f32 %v3417, %v3481
    %3483 = vmatmul.f32.gmra.mxu0 %v3444
    %v3484 = vpop.f32.mrf.mxu0
    %v3485 = vadd.f32 %v3420, %v3484
    %3486 = vmatmul.f32.gmra.mxu0 %v3447
    %v3487 = vpop.f32.mrf.mxu0
    %v3488 = vadd.f32 %v3423, %v3487
    %3489 = vdwg.mxu0
    %3490 = vrot.lane.b32.xlu0 %v2224, 112
    %v3491 = vpop.permute.xlu0 %3490
    %3492 = vrot.lane.b32.xlu0 %v2275, 112
    %v3493 = vpop.permute.xlu0 %3492
    %v3494 = vsel %vm300, %v3491, 0
    %v3496 = vsel %vm300, %v3493, 0
    %3498 = vmatpush.xpose.msra.mxu0 0.0
    %3499 = vmatpush.xpose.msra.mxu0 0.0
    %3500 = vmatpush.xpose.msra.mxu0 0.0
    %3501 = vmatpush.xpose.msra.mxu0 0.0
    %3502 = vmatpush.xpose.msra.mxu0 0.0
    %3503 = vmatpush.xpose.msra.mxu0 0.0
    %3504 = vmatpush.xpose.msra.mxu0 0.0
    %3505 = vmatpush.xpose.msra.mxu0 0.0
    %3506 = vmatpush.xpose.msra.mxu0 0.0
    %3507 = vmatpush.xpose.msra.mxu0 0.0
    %3508 = vmatpush.xpose.msra.mxu0 0.0
    %3509 = vmatpush.xpose.msra.mxu0 0.0
    %3510 = vmatpush.xpose.msra.mxu0 0.0
    %3511 = vmatpush.xpose.msra.mxu0 0.0
    %3512 = vmatpush.xpose.msra.mxu0 0.0
    %3513 = vmatpush.xpose.msra.mxu0 %v3496
    %3514 = vmatmul.f32.gmra.mxu0 %v3494
    %v3515 = vpop.f32.mrf.mxu0
    %v3516 = vadd.f32 0.0, %v3515
    %3517 = vdwg.mxu0
    %3518 = vrot.lane.b32.xlu0 %v2227, 112
    %v3519 = vpop.permute.xlu0 %3518
    %3520 = vrot.lane.b32.xlu0 %v2278, 112
    %v3521 = vpop.permute.xlu0 %3520
    %v3522 = vsel %vm300, %v3519, 0
    %v3524 = vsel %vm300, %v3521, 0
    %3526 = vmatpush.xpose.msra.mxu0 0.0
    %3527 = vmatpush.xpose.msra.mxu0 0.0
    %3528 = vmatpush.xpose.msra.mxu0 0.0
    %3529 = vmatpush.xpose.msra.mxu0 0.0
    %3530 = vmatpush.xpose.msra.mxu0 0.0
    %3531 = vmatpush.xpose.msra.mxu0 0.0
    %3532 = vmatpush.xpose.msra.mxu0 0.0
    %3533 = vmatpush.xpose.msra.mxu0 0.0
    %3534 = vmatpush.xpose.msra.mxu0 0.0
    %3535 = vmatpush.xpose.msra.mxu0 0.0
    %3536 = vmatpush.xpose.msra.mxu0 0.0
    %3537 = vmatpush.xpose.msra.mxu0 0.0
    %3538 = vmatpush.xpose.msra.mxu0 0.0
    %3539 = vmatpush.xpose.msra.mxu0 0.0
    %3540 = vmatpush.xpose.msra.mxu0 0.0
    %3541 = vmatpush.xpose.msra.mxu0 %v3524
    %3542 = vmatmul.f32.gmra.mxu0 %v3522
    %v3543 = vpop.f32.mrf.mxu0
    %v3544 = vadd.f32 0.0, %v3543
    %3545 = vdwg.mxu0
    %3546 = vrot.lane.b32.xlu0 %v2230, 112
    %v3547 = vpop.permute.xlu0 %3546
    %3548 = vrot.lane.b32.xlu0 %v2281, 112
    %v3549 = vpop.permute.xlu0 %3548
    %v3550 = vsel %vm300, %v3547, 0
    %v3552 = vsel %vm300, %v3549, 0
    %3554 = vmatpush.xpose.msra.mxu0 0.0
    %3555 = vmatpush.xpose.msra.mxu0 0.0
    %3556 = vmatpush.xpose.msra.mxu0 0.0
    %3557 = vmatpush.xpose.msra.mxu0 0.0
    %3558 = vmatpush.xpose.msra.mxu0 0.0
    %3559 = vmatpush.xpose.msra.mxu0 0.0
    %3560 = vmatpush.xpose.msra.mxu0 0.0
    %3561 = vmatpush.xpose.msra.mxu0 0.0
    %3562 = vmatpush.xpose.msra.mxu0 0.0
    %3563 = vmatpush.xpose.msra.mxu0 0.0
    %3564 = vmatpush.xpose.msra.mxu0 0.0
    %3565 = vmatpush.xpose.msra.mxu0 0.0
    %3566 = vmatpush.xpose.msra.mxu0 0.0
    %3567 = vmatpush.xpose.msra.mxu0 0.0
    %3568 = vmatpush.xpose.msra.mxu0 0.0
    %3569 = vmatpush.xpose.msra.mxu0 %v3552
    %3570 = vmatmul.f32.gmra.mxu0 %v3550
    %v3571 = vpop.f32.mrf.mxu0
    %v3572 = vadd.f32 0.0, %v3571
    %3573 = vdwg.mxu0
    %3574 = vrot.lane.b32.xlu0 %v2233, 112
    %v3575 = vpop.permute.xlu0 %3574
    %3576 = vrot.lane.b32.xlu0 %v2284, 112
    %v3577 = vpop.permute.xlu0 %3576
    %v3578 = vsel %vm300, %v3575, 0
    %v3580 = vsel %vm300, %v3577, 0
    %3582 = vmatpush.xpose.msra.mxu0 0.0
    %3583 = vmatpush.xpose.msra.mxu0 0.0
    %3584 = vmatpush.xpose.msra.mxu0 0.0
    %3585 = vmatpush.xpose.msra.mxu0 0.0
    %3586 = vmatpush.xpose.msra.mxu0 0.0
    %3587 = vmatpush.xpose.msra.mxu0 0.0
    %3588 = vmatpush.xpose.msra.mxu0 0.0
    %3589 = vmatpush.xpose.msra.mxu0 0.0
    %3590 = vmatpush.xpose.msra.mxu0 0.0
    %3591 = vmatpush.xpose.msra.mxu0 0.0
    %3592 = vmatpush.xpose.msra.mxu0 0.0
    %3593 = vmatpush.xpose.msra.mxu0 0.0
    %3594 = vmatpush.xpose.msra.mxu0 0.0
    %3595 = vmatpush.xpose.msra.mxu0 0.0
    %3596 = vmatpush.xpose.msra.mxu0 0.0
    %3597 = vmatpush.xpose.msra.mxu0 %v3580
    %3598 = vmatmul.f32.gmra.mxu0 %v3578
    %v3599 = vpop.f32.mrf.mxu0
    %v3600 = vadd.f32 0.0, %v3599
    %3601 = vdwg.mxu0
    %3602 = vrot.lane.b32.xlu0 %v2236, 112
    %v3603 = vpop.permute.xlu0 %3602
    %3604 = vrot.lane.b32.xlu0 %v2287, 112
    %v3605 = vpop.permute.xlu0 %3604
    %v3606 = vsel %vm300, %v3603, 0
    %v3608 = vsel %vm300, %v3605, 0
    %3610 = vmatpush.xpose.msra.mxu0 0.0
    %3611 = vmatpush.xpose.msra.mxu0 0.0
    %3612 = vmatpush.xpose.msra.mxu0 0.0
    %3613 = vmatpush.xpose.msra.mxu0 0.0
    %3614 = vmatpush.xpose.msra.mxu0 0.0
    %3615 = vmatpush.xpose.msra.mxu0 0.0
    %3616 = vmatpush.xpose.msra.mxu0 0.0
    %3617 = vmatpush.xpose.msra.mxu0 0.0
    %3618 = vmatpush.xpose.msra.mxu0 0.0
    %3619 = vmatpush.xpose.msra.mxu0 0.0
    %3620 = vmatpush.xpose.msra.mxu0 0.0
    %3621 = vmatpush.xpose.msra.mxu0 0.0
    %3622 = vmatpush.xpose.msra.mxu0 0.0
    %3623 = vmatpush.xpose.msra.mxu0 0.0
    %3624 = vmatpush.xpose.msra.mxu0 0.0
    %3625 = vmatpush.xpose.msra.mxu0 %v3608
    %3626 = vmatmul.f32.gmra.mxu0 %v3606
    %v3627 = vpop.f32.mrf.mxu0
    %v3628 = vadd.f32 0.0, %v3627
    %3629 = vdwg.mxu0
    %3630 = vrot.lane.b32.xlu0 %v2239, 112
    %v3631 = vpop.permute.xlu0 %3630
    %3632 = vrot.lane.b32.xlu0 %v2290, 112
    %v3633 = vpop.permute.xlu0 %3632
    %v3634 = vsel %vm300, %v3631, 0
    %v3636 = vsel %vm300, %v3633, 0
    %3638 = vmatpush.xpose.msra.mxu0 0.0
    %3639 = vmatpush.xpose.msra.mxu0 0.0
    %3640 = vmatpush.xpose.msra.mxu0 0.0
    %3641 = vmatpush.xpose.msra.mxu0 0.0
    %3642 = vmatpush.xpose.msra.mxu0 0.0
    %3643 = vmatpush.xpose.msra.mxu0 0.0
    %3644 = vmatpush.xpose.msra.mxu0 0.0
    %3645 = vmatpush.xpose.msra.mxu0 0.0
    %3646 = vmatpush.xpose.msra.mxu0 0.0
    %3647 = vmatpush.xpose.msra.mxu0 0.0
    %3648 = vmatpush.xpose.msra.mxu0 0.0
    %3649 = vmatpush.xpose.msra.mxu0 0.0
    %3650 = vmatpush.xpose.msra.mxu0 0.0
    %3651 = vmatpush.xpose.msra.mxu0 0.0
    %3652 = vmatpush.xpose.msra.mxu0 0.0
    %3653 = vmatpush.xpose.msra.mxu0 %v3636
    %3654 = vmatmul.f32.gmra.mxu0 %v3634
    %v3655 = vpop.f32.mrf.mxu0
    %v3656 = vadd.f32 0.0, %v3655
    %3657 = vdwg.mxu0
    %3658 = vrot.lane.b32.xlu0 %v2242, 112
    %v3659 = vpop.permute.xlu0 %3658
    %3660 = vrot.lane.b32.xlu0 %v2293, 112
    %v3661 = vpop.permute.xlu0 %3660
    %v3662 = vsel %vm300, %v3659, 0
    %v3664 = vsel %vm300, %v3661, 0
    %3666 = vmatpush.xpose.msra.mxu0 0.0
    %3667 = vmatpush.xpose.msra.mxu0 0.0
    %3668 = vmatpush.xpose.msra.mxu0 0.0
    %3669 = vmatpush.xpose.msra.mxu0 0.0
    %3670 = vmatpush.xpose.msra.mxu0 0.0
    %3671 = vmatpush.xpose.msra.mxu0 0.0
    %3672 = vmatpush.xpose.msra.mxu0 0.0
    %3673 = vmatpush.xpose.msra.mxu0 0.0
    %3674 = vmatpush.xpose.msra.mxu0 0.0
    %3675 = vmatpush.xpose.msra.mxu0 0.0
    %3676 = vmatpush.xpose.msra.mxu0 0.0
    %3677 = vmatpush.xpose.msra.mxu0 0.0
    %3678 = vmatpush.xpose.msra.mxu0 0.0
    %3679 = vmatpush.xpose.msra.mxu0 0.0
    %3680 = vmatpush.xpose.msra.mxu0 0.0
    %3681 = vmatpush.xpose.msra.mxu0 %v3664
    %3682 = vmatmul.f32.gmra.mxu0 %v3662
    %v3683 = vpop.f32.mrf.mxu0
    %v3684 = vadd.f32 0.0, %v3683
    %3685 = vdwg.mxu0
    %3686 = vrot.lane.b32.xlu0 %v2245, 112
    %v3687 = vpop.permute.xlu0 %3686
    %3688 = vrot.lane.b32.xlu0 %v2296, 112
    %v3689 = vpop.permute.xlu0 %3688
    %v3690 = vsel %vm300, %v3687, 0
    %v3692 = vsel %vm300, %v3689, 0
    %3694 = vmatpush.xpose.msra.mxu0 0.0
    %3695 = vmatpush.xpose.msra.mxu0 0.0
    %3696 = vmatpush.xpose.msra.mxu0 0.0
    %3697 = vmatpush.xpose.msra.mxu0 0.0
    %3698 = vmatpush.xpose.msra.mxu0 0.0
    %3699 = vmatpush.xpose.msra.mxu0 0.0
    %3700 = vmatpush.xpose.msra.mxu0 0.0
    %3701 = vmatpush.xpose.msra.mxu0 0.0
    %3702 = vmatpush.xpose.msra.mxu0 0.0
    %3703 = vmatpush.xpose.msra.mxu0 0.0
    %3704 = vmatpush.xpose.msra.mxu0 0.0
    %3705 = vmatpush.xpose.msra.mxu0 0.0
    %3706 = vmatpush.xpose.msra.mxu0 0.0
    %3707 = vmatpush.xpose.msra.mxu0 0.0
    %3708 = vmatpush.xpose.msra.mxu0 0.0
    %3709 = vmatpush.xpose.msra.mxu0 %v3692
    %3710 = vmatmul.f32.gmra.mxu0 %v3690
    %v3711 = vpop.f32.mrf.mxu0
    %v3712 = vadd.f32 0.0, %v3711
    %3713 = vdwg.mxu0
    %v3714 = vsel %vm300, %v3516, -inf
    %3715 = vmax.xlane.f32.xlu0 %v3714
    %v3716 = vpop.xlane.xlu0 %3715
    %v3717 = vsel %vm300, %v3544, -inf
    %3718 = vmax.xlane.f32.xlu0 %v3717
    %v3719 = vpop.xlane.xlu0 %3718
    %v3720 = vsel %vm300, %v3572, -inf
    %3721 = vmax.xlane.f32.xlu0 %v3720
    %v3722 = vpop.xlane.xlu0 %3721
    %v3723 = vsel %vm300, %v3600, -inf
    %3724 = vmax.xlane.f32.xlu0 %v3723
    %v3725 = vpop.xlane.xlu0 %3724
    %v3726 = vsel %vm300, %v3628, -inf
    %3727 = vmax.xlane.f32.xlu0 %v3726
    %v3728 = vpop.xlane.xlu0 %3727
    %v3729 = vsel %vm300, %v3656, -inf
    %3730 = vmax.xlane.f32.xlu0 %v3729
    %v3731 = vpop.xlane.xlu0 %3730
    %v3732 = vsel %vm300, %v3684, -inf
    %3733 = vmax.xlane.f32.xlu0 %v3732
    %v3734 = vpop.xlane.xlu0 %3733
    %v3735 = vsel %vm300, %v3712, -inf
    %3736 = vmax.xlane.f32.xlu0 %v3735
    %v3737 = vpop.xlane.xlu0 %3736
    %v3738 = vsub.f32 %v3516, %v3716
    %v3739 = vsub.f32 %v3544, %v3719
    %v3740 = vsub.f32 %v3572, %v3722
    %v3741 = vsub.f32 %v3600, %v3725
    %v3742 = vsub.f32 %v3628, %v3728
    %v3743 = vsub.f32 %v3656, %v3731
    %v3744 = vsub.f32 %v3684, %v3734
    %v3745 = vsub.f32 %v3712, %v3737
    %v3746 = vmul.f32 %v3738, 1.442695
    %v3747 = vpow.pop %v3746
    %v3748 = vmul.f32 %v3739, 1.442695
    %v3749 = vpow.pop %v3748
    %v3750 = vmul.f32 %v3740, 1.442695
    %v3751 = vpow.pop %v3750
    %v3752 = vmul.f32 %v3741, 1.442695
    %v3753 = vpow.pop %v3752
    %v3754 = vmul.f32 %v3742, 1.442695
    %v3755 = vpow.pop %v3754
    %v3756 = vmul.f32 %v3743, 1.442695
    %v3757 = vpow.pop %v3756
    %v3758 = vmul.f32 %v3744, 1.442695
    %v3759 = vpow.pop %v3758
    %v3760 = vmul.f32 %v3745, 1.442695
    %v3761 = vpow.pop %v3760
    %v3762 = vsel %vm300, %v3747, 0.0
    %3763 = vadd.xlane.f32.xlu0 %v3762
    %v3764 = vpop.xlane.xlu0 %3763
    %v3765 = vsel %vm300, %v3749, 0.0
    %3766 = vadd.xlane.f32.xlu0 %v3765
    %v3767 = vpop.xlane.xlu0 %3766
    %v3768 = vsel %vm300, %v3751, 0.0
    %3769 = vadd.xlane.f32.xlu0 %v3768
    %v3770 = vpop.xlane.xlu0 %3769
    %v3771 = vsel %vm300, %v3753, 0.0
    %3772 = vadd.xlane.f32.xlu0 %v3771
    %v3773 = vpop.xlane.xlu0 %3772
    %v3774 = vsel %vm300, %v3755, 0.0
    %3775 = vadd.xlane.f32.xlu0 %v3774
    %v3776 = vpop.xlane.xlu0 %3775
    %v3777 = vsel %vm300, %v3757, 0.0
    %3778 = vadd.xlane.f32.xlu0 %v3777
    %v3779 = vpop.xlane.xlu0 %3778
    %v3780 = vsel %vm300, %v3759, 0.0
    %3781 = vadd.xlane.f32.xlu0 %v3780
    %v3782 = vpop.xlane.xlu0 %3781
    %v3783 = vsel %vm300, %v3761, 0.0
    %3784 = vadd.xlane.f32.xlu0 %v3783
    %v3785 = vpop.xlane.xlu0 %3784
    %v3786 = vrcp.pop %v3764
    %v3787 = vrcp.pop %v3767
    %v3788 = vrcp.pop %v3770
    %v3789 = vrcp.pop %v3773
    %v3790 = vrcp.pop %v3776
    %v3791 = vrcp.pop %v3779
    %v3792 = vrcp.pop %v3782
    %v3793 = vrcp.pop %v3785
    %v3794 = vmul.f32 %v3747, %v3786
    %v3795 = vmul.f32 %v3749, %v3787
    %v3796 = vmul.f32 %v3751, %v3788
    %v3797 = vmul.f32 %v3753, %v3789
    %v3798 = vmul.f32 %v3755, %v3790
    %v3799 = vmul.f32 %v3757, %v3791
    %v3800 = vmul.f32 %v3759, %v3792
    %v3801 = vmul.f32 %v3761, %v3793
    %3802 = vrot.lane.b32.xlu0 %v2326, 112
    %v3803 = vpop.permute.xlu0 %3802
    %v3806 = vsel %vm300, %v3794, 0
    %3808 = vmatpush.msra.mxu0 0.0
    %3809 = vmatpush.msra.mxu0 0.0
    %3810 = vmatpush.msra.mxu0 0.0
    %3811 = vmatpush.msra.mxu0 0.0
    %3812 = vmatpush.msra.mxu0 0.0
    %3813 = vmatpush.msra.mxu0 0.0
    %3814 = vmatpush.msra.mxu0 0.0
    %3815 = vmatpush.msra.mxu0 0.0
    %3816 = vmatpush.msra.mxu0 0.0
    %3817 = vmatpush.msra.mxu0 0.0
    %3818 = vmatpush.msra.mxu0 0.0
    %3819 = vmatpush.msra.mxu0 0.0
    %3820 = vmatpush.msra.mxu0 0.0
    %3821 = vmatpush.msra.mxu0 0.0
    %3822 = vmatpush.msra.mxu0 0.0
    %3823 = vmatpush.msra.mxu0 %v3803
    %3824 = vmatmul.f32.gmra.mxu0 %v3806
    %v3825 = vpop.f32.mrf.mxu0
    %v3826 = vadd.f32 0.0, %v3825
    %3827 = vdwg.mxu0
    %3828 = vrot.lane.b32.xlu0 %v2329, 112
    %v3829 = vpop.permute.xlu0 %3828
    %v3832 = vsel %vm300, %v3795, 0
    %3834 = vmatpush.msra.mxu0 0.0
    %3835 = vmatpush.msra.mxu0 0.0
    %3836 = vmatpush.msra.mxu0 0.0
    %3837 = vmatpush.msra.mxu0 0.0
    %3838 = vmatpush.msra.mxu0 0.0
    %3839 = vmatpush.msra.mxu0 0.0
    %3840 = vmatpush.msra.mxu0 0.0
    %3841 = vmatpush.msra.mxu0 0.0
    %3842 = vmatpush.msra.mxu0 0.0
    %3843 = vmatpush.msra.mxu0 0.0
    %3844 = vmatpush.msra.mxu0 0.0
    %3845 = vmatpush.msra.mxu0 0.0
    %3846 = vmatpush.msra.mxu0 0.0
    %3847 = vmatpush.msra.mxu0 0.0
    %3848 = vmatpush.msra.mxu0 0.0
    %3849 = vmatpush.msra.mxu0 %v3829
    %3850 = vmatmul.f32.gmra.mxu0 %v3832
    %v3851 = vpop.f32.mrf.mxu0
    %v3852 = vadd.f32 0.0, %v3851
    %3853 = vdwg.mxu0
    %3854 = vrot.lane.b32.xlu0 %v2332, 112
    %v3855 = vpop.permute.xlu0 %3854
    %v3858 = vsel %vm300, %v3796, 0
    %3860 = vmatpush.msra.mxu0 0.0
    %3861 = vmatpush.msra.mxu0 0.0
    %3862 = vmatpush.msra.mxu0 0.0
    %3863 = vmatpush.msra.mxu0 0.0
    %3864 = vmatpush.msra.mxu0 0.0
    %3865 = vmatpush.msra.mxu0 0.0
    %3866 = vmatpush.msra.mxu0 0.0
    %3867 = vmatpush.msra.mxu0 0.0
    %3868 = vmatpush.msra.mxu0 0.0
    %3869 = vmatpush.msra.mxu0 0.0
    %3870 = vmatpush.msra.mxu0 0.0
    %3871 = vmatpush.msra.mxu0 0.0
    %3872 = vmatpush.msra.mxu0 0.0
    %3873 = vmatpush.msra.mxu0 0.0
    %3874 = vmatpush.msra.mxu0 0.0
    %3875 = vmatpush.msra.mxu0 %v3855
    %3876 = vmatmul.f32.gmra.mxu0 %v3858
    %v3877 = vpop.f32.mrf.mxu0
    %v3878 = vadd.f32 0.0, %v3877
    %3879 = vdwg.mxu0
    %3880 = vrot.lane.b32.xlu0 %v2335, 112
    %v3881 = vpop.permute.xlu0 %3880
    %v3884 = vsel %vm300, %v3797, 0
    %3886 = vmatpush.msra.mxu0 0.0
    %3887 = vmatpush.msra.mxu0 0.0
    %3888 = vmatpush.msra.mxu0 0.0
    %3889 = vmatpush.msra.mxu0 0.0
    %3890 = vmatpush.msra.mxu0 0.0
    %3891 = vmatpush.msra.mxu0 0.0
    %3892 = vmatpush.msra.mxu0 0.0
    %3893 = vmatpush.msra.mxu0 0.0
    %3894 = vmatpush.msra.mxu0 0.0
    %3895 = vmatpush.msra.mxu0 0.0
    %3896 = vmatpush.msra.mxu0 0.0
    %3897 = vmatpush.msra.mxu0 0.0
    %3898 = vmatpush.msra.mxu0 0.0
    %3899 = vmatpush.msra.mxu0 0.0
    %3900 = vmatpush.msra.mxu0 0.0
    %3901 = vmatpush.msra.mxu0 %v3881
    %3902 = vmatmul.f32.gmra.mxu0 %v3884
    %v3903 = vpop.f32.mrf.mxu0
    %v3904 = vadd.f32 0.0, %v3903
    %3905 = vdwg.mxu0
    %3906 = vrot.lane.b32.xlu0 %v2338, 112
    %v3907 = vpop.permute.xlu0 %3906
    %v3910 = vsel %vm300, %v3798, 0
    %3912 = vmatpush.msra.mxu0 0.0
    %3913 = vmatpush.msra.mxu0 0.0
    %3914 = vmatpush.msra.mxu0 0.0
    %3915 = vmatpush.msra.mxu0 0.0
    %3916 = vmatpush.msra.mxu0 0.0
    %3917 = vmatpush.msra.mxu0 0.0
    %3918 = vmatpush.msra.mxu0 0.0
    %3919 = vmatpush.msra.mxu0 0.0
    %3920 = vmatpush.msra.mxu0 0.0
    %3921 = vmatpush.msra.mxu0 0.0
    %3922 = vmatpush.msra.mxu0 0.0
    %3923 = vmatpush.msra.mxu0 0.0
    %3924 = vmatpush.msra.mxu0 0.0
    %3925 = vmatpush.msra.mxu0 0.0
    %3926 = vmatpush.msra.mxu0 0.0
    %3927 = vmatpush.msra.mxu0 %v3907
    %3928 = vmatmul.f32.gmra.mxu0 %v3910
    %v3929 = vpop.f32.mrf.mxu0
    %v3930 = vadd.f32 0.0, %v3929
    %3931 = vdwg.mxu0
    %3932 = vrot.lane.b32.xlu0 %v2341, 112
    %v3933 = vpop.permute.xlu0 %3932
    %v3936 = vsel %vm300, %v3799, 0
    %3938 = vmatpush.msra.mxu0 0.0
    %3939 = vmatpush.msra.mxu0 0.0
    %3940 = vmatpush.msra.mxu0 0.0
    %3941 = vmatpush.msra.mxu0 0.0
    %3942 = vmatpush.msra.mxu0 0.0
    %3943 = vmatpush.msra.mxu0 0.0
    %3944 = vmatpush.msra.mxu0 0.0
    %3945 = vmatpush.msra.mxu0 0.0
    %3946 = vmatpush.msra.mxu0 0.0
    %3947 = vmatpush.msra.mxu0 0.0
    %3948 = vmatpush.msra.mxu0 0.0
    %3949 = vmatpush.msra.mxu0 0.0
    %3950 = vmatpush.msra.mxu0 0.0
    %3951 = vmatpush.msra.mxu0 0.0
    %3952 = vmatpush.msra.mxu0 0.0
    %3953 = vmatpush.msra.mxu0 %v3933
    %3954 = vmatmul.f32.gmra.mxu0 %v3936
    %v3955 = vpop.f32.mrf.mxu0
    %v3956 = vadd.f32 0.0, %v3955
    %3957 = vdwg.mxu0
    %3958 = vrot.lane.b32.xlu0 %v2344, 112
    %v3959 = vpop.permute.xlu0 %3958
    %v3962 = vsel %vm300, %v3800, 0
    %3964 = vmatpush.msra.mxu0 0.0
    %3965 = vmatpush.msra.mxu0 0.0
    %3966 = vmatpush.msra.mxu0 0.0
    %3967 = vmatpush.msra.mxu0 0.0
    %3968 = vmatpush.msra.mxu0 0.0
    %3969 = vmatpush.msra.mxu0 0.0
    %3970 = vmatpush.msra.mxu0 0.0
    %3971 = vmatpush.msra.mxu0 0.0
    %3972 = vmatpush.msra.mxu0 0.0
    %3973 = vmatpush.msra.mxu0 0.0
    %3974 = vmatpush.msra.mxu0 0.0
    %3975 = vmatpush.msra.mxu0 0.0
    %3976 = vmatpush.msra.mxu0 0.0
    %3977 = vmatpush.msra.mxu0 0.0
    %3978 = vmatpush.msra.mxu0 0.0
    %3979 = vmatpush.msra.mxu0 %v3959
    %3980 = vmatmul.f32.gmra.mxu0 %v3962
    %v3981 = vpop.f32.mrf.mxu0
    %v3982 = vadd.f32 0.0, %v3981
    %3983 = vdwg.mxu0
    %3984 = vrot.lane.b32.xlu0 %v2347, 112
    %v3985 = vpop.permute.xlu0 %3984
    %v3988 = vsel %vm300, %v3801, 0
    %3990 = vmatpush.msra.mxu0 0.0
    %3991 = vmatpush.msra.mxu0 0.0
    %3992 = vmatpush.msra.mxu0 0.0
    %3993 = vmatpush.msra.mxu0 0.0
    %3994 = vmatpush.msra.mxu0 0.0
    %3995 = vmatpush.msra.mxu0 0.0
    %3996 = vmatpush.msra.mxu0 0.0
    %3997 = vmatpush.msra.mxu0 0.0
    %3998 = vmatpush.msra.mxu0 0.0
    %3999 = vmatpush.msra.mxu0 0.0
    %4000 = vmatpush.msra.mxu0 0.0
    %4001 = vmatpush.msra.mxu0 0.0
    %4002 = vmatpush.msra.mxu0 0.0
    %4003 = vmatpush.msra.mxu0 0.0
    %4004 = vmatpush.msra.mxu0 0.0
    %4005 = vmatpush.msra.mxu0 %v3985
    %4006 = vmatmul.f32.gmra.mxu0 %v3988
    %v4007 = vpop.f32.mrf.mxu0
    %v4008 = vadd.f32 0.0, %v4007
    %4009 = vdwg.mxu0
    %s4010 = scalar_lea.vmem %s10, 16
    %v4011 = vld [vmem:[%s4010] sm:$0xff]
    %v4013 = vsel %vm300, %v3826, 0
    %v4016 = vsel %vm300, %v3852, 0
    %v4019 = vsel %vm300, %v3878, 0
    %v4022 = vsel %vm300, %v3904, 0
    %v4025 = vsel %vm300, %v3930, 0
    %v4028 = vsel %vm300, %v3956, 0
    %v4031 = vsel %vm300, %v3982, 0
    %v4034 = vsel %vm300, %v4008, 0
    %4036 = vmatpush.msra.mxu0 0.0
    %4037 = vmatpush.msra.mxu0 0.0
    %4038 = vmatpush.msra.mxu0 0.0
    %4039 = vmatpush.msra.mxu0 0.0
    %4040 = vmatpush.msra.mxu0 0.0
    %4041 = vmatpush.msra.mxu0 0.0
    %4042 = vmatpush.msra.mxu0 0.0
    %4043 = vmatpush.msra.mxu0 0.0
    %4044 = vmatpush.msra.mxu0 0.0
    %4045 = vmatpush.msra.mxu0 0.0
    %4046 = vmatpush.msra.mxu0 0.0
    %4047 = vmatpush.msra.mxu0 0.0
    %4048 = vmatpush.msra.mxu0 0.0
    %4049 = vmatpush.msra.mxu0 0.0
    %4050 = vmatpush.msra.mxu0 0.0
    %4051 = vmatpush.msra.mxu0 %v4011
    %4052 = vmatmul.f32.gmra.mxu0 %v4013
    %v4053 = vpop.f32.mrf.mxu0
    %v4054 = vadd.f32 0.0, %v4053
    %4055 = vmatmul.f32.gmra.mxu0 %v4016
    %v4056 = vpop.f32.mrf.mxu0
    %v4057 = vadd.f32 0.0, %v4056
    %4058 = vmatmul.f32.gmra.mxu0 %v4019
    %v4059 = vpop.f32.mrf.mxu0
    %v4060 = vadd.f32 0.0, %v4059
    %4061 = vmatmul.f32.gmra.mxu0 %v4022
    %v4062 = vpop.f32.mrf.mxu0
    %v4063 = vadd.f32 0.0, %v4062
    %4064 = vmatmul.f32.gmra.mxu0 %v4025
    %v4065 = vpop.f32.mrf.mxu0
    %v4066 = vadd.f32 0.0, %v4065
    %4067 = vmatmul.f32.gmra.mxu0 %v4028
    %v4068 = vpop.f32.mrf.mxu0
    %v4069 = vadd.f32 0.0, %v4068
    %4070 = vmatmul.f32.gmra.mxu0 %v4031
    %v4071 = vpop.f32.mrf.mxu0
    %v4072 = vadd.f32 0.0, %v4071
    %4073 = vmatmul.f32.gmra.mxu0 %v4034
    %v4074 = vpop.f32.mrf.mxu0
    %v4075 = vadd.f32 0.0, %v4074
    %4076 = vdwg.mxu0
    %v4077 = vadd.f32 %v3467, %v4054
    %v4078 = vadd.f32 %v3470, %v4057
    %v4079 = vadd.f32 %v3473, %v4060
    %v4080 = vadd.f32 %v3476, %v4063
    %v4081 = vadd.f32 %v3479, %v4066
    %v4082 = vadd.f32 %v3482, %v4069
    %v4083 = vadd.f32 %v3485, %v4072
    %v4084 = vadd.f32 %v3488, %v4075
    %4085 = vrot.lane.b32.xlu0 %v2224, 104
    %v4086 = vpop.permute.xlu0 %4085
    %4087 = vrot.lane.b32.xlu0 %v2275, 104
    %v4088 = vpop.permute.xlu0 %4087
    %v4089 = vsel %vm300, %v4086, 0
    %v4091 = vsel %vm300, %v4088, 0
    %4093 = vmatpush.xpose.msra.mxu0 0.0
    %4094 = vmatpush.xpose.msra.mxu0 0.0
    %4095 = vmatpush.xpose.msra.mxu0 0.0
    %4096 = vmatpush.xpose.msra.mxu0 0.0
    %4097 = vmatpush.xpose.msra.mxu0 0.0
    %4098 = vmatpush.xpose.msra.mxu0 0.0
    %4099 = vmatpush.xpose.msra.mxu0 0.0
    %4100 = vmatpush.xpose.msra.mxu0 0.0
    %4101 = vmatpush.xpose.msra.mxu0 0.0
    %4102 = vmatpush.xpose.msra.mxu0 0.0
    %4103 = vmatpush.xpose.msra.mxu0 0.0
    %4104 = vmatpush.xpose.msra.mxu0 0.0
    %4105 = vmatpush.xpose.msra.mxu0 0.0
    %4106 = vmatpush.xpose.msra.mxu0 0.0
    %4107 = vmatpush.xpose.msra.mxu0 0.0
    %4108 = vmatpush.xpose.msra.mxu0 %v4091
    %4109 = vmatmul.f32.gmra.mxu0 %v4089
    %v4110 = vpop.f32.mrf.mxu0
    %v4111 = vadd.f32 0.0, %v4110
    %4112 = vdwg.mxu0
    %4113 = vrot.lane.b32.xlu0 %v2227, 104
    %v4114 = vpop.permute.xlu0 %4113
    %4115 = vrot.lane.b32.xlu0 %v2278, 104
    %v4116 = vpop.permute.xlu0 %4115
    %v4117 = vsel %vm300, %v4114, 0
    %v4119 = vsel %vm300, %v4116, 0
    %4121 = vmatpush.xpose.msra.mxu0 0.0
    %4122 = vmatpush.xpose.msra.mxu0 0.0
    %4123 = vmatpush.xpose.msra.mxu0 0.0
    %4124 = vmatpush.xpose.msra.mxu0 0.0
    %4125 = vmatpush.xpose.msra.mxu0 0.0
    %4126 = vmatpush.xpose.msra.mxu0 0.0
    %4127 = vmatpush.xpose.msra.mxu0 0.0
    %4128 = vmatpush.xpose.msra.mxu0 0.0
    %4129 = vmatpush.xpose.msra.mxu0 0.0
    %4130 = vmatpush.xpose.msra.mxu0 0.0
    %4131 = vmatpush.xpose.msra.mxu0 0.0
    %4132 = vmatpush.xpose.msra.mxu0 0.0
    %4133 = vmatpush.xpose.msra.mxu0 0.0
    %4134 = vmatpush.xpose.msra.mxu0 0.0
    %4135 = vmatpush.xpose.msra.mxu0 0.0
    %4136 = vmatpush.xpose.msra.mxu0 %v4119
    %4137 = vmatmul.f32.gmra.mxu0 %v4117
    %v4138 = vpop.f32.mrf.mxu0
    %v4139 = vadd.f32 0.0, %v4138
    %4140 = vdwg.mxu0
    %4141 = vrot.lane.b32.xlu0 %v2230, 104
    %v4142 = vpop.permute.xlu0 %4141
    %4143 = vrot.lane.b32.xlu0 %v2281, 104
    %v4144 = vpop.permute.xlu0 %4143
    %v4145 = vsel %vm300, %v4142, 0
    %v4147 = vsel %vm300, %v4144, 0
    %4149 = vmatpush.xpose.msra.mxu0 0.0
    %4150 = vmatpush.xpose.msra.mxu0 0.0
    %4151 = vmatpush.xpose.msra.mxu0 0.0
    %4152 = vmatpush.xpose.msra.mxu0 0.0
    %4153 = vmatpush.xpose.msra.mxu0 0.0
    %4154 = vmatpush.xpose.msra.mxu0 0.0
    %4155 = vmatpush.xpose.msra.mxu0 0.0
    %4156 = vmatpush.xpose.msra.mxu0 0.0
    %4157 = vmatpush.xpose.msra.mxu0 0.0
    %4158 = vmatpush.xpose.msra.mxu0 0.0
    %4159 = vmatpush.xpose.msra.mxu0 0.0
    %4160 = vmatpush.xpose.msra.mxu0 0.0
    %4161 = vmatpush.xpose.msra.mxu0 0.0
    %4162 = vmatpush.xpose.msra.mxu0 0.0
    %4163 = vmatpush.xpose.msra.mxu0 0.0
    %4164 = vmatpush.xpose.msra.mxu0 %v4147
    %4165 = vmatmul.f32.gmra.mxu0 %v4145
    %v4166 = vpop.f32.mrf.mxu0
    %v4167 = vadd.f32 0.0, %v4166
    %4168 = vdwg.mxu0
    %4169 = vrot.lane.b32.xlu0 %v2233, 104
    %v4170 = vpop.permute.xlu0 %4169
    %4171 = vrot.lane.b32.xlu0 %v2284, 104
    %v4172 = vpop.permute.xlu0 %4171
    %v4173 = vsel %vm300, %v4170, 0
    %v4175 = vsel %vm300, %v4172, 0
    %4177 = vmatpush.xpose.msra.mxu0 0.0
    %4178 = vmatpush.xpose.msra.mxu0 0.0
    %4179 = vmatpush.xpose.msra.mxu0 0.0
    %4180 = vmatpush.xpose.msra.mxu0 0.0
    %4181 = vmatpush.xpose.msra.mxu0 0.0
    %4182 = vmatpush.xpose.msra.mxu0 0.0
    %4183 = vmatpush.xpose.msra.mxu0 0.0
    %4184 = vmatpush.xpose.msra.mxu0 0.0
    %4185 = vmatpush.xpose.msra.mxu0 0.0
    %4186 = vmatpush.xpose.msra.mxu0 0.0
    %4187 = vmatpush.xpose.msra.mxu0 0.0
    %4188 = vmatpush.xpose.msra.mxu0 0.0
    %4189 = vmatpush.xpose.msra.mxu0 0.0
    %4190 = vmatpush.xpose.msra.mxu0 0.0
    %4191 = vmatpush.xpose.msra.mxu0 0.0
    %4192 = vmatpush.xpose.msra.mxu0 %v4175
    %4193 = vmatmul.f32.gmra.mxu0 %v4173
    %v4194 = vpop.f32.mrf.mxu0
    %v4195 = vadd.f32 0.0, %v4194
    %4196 = vdwg.mxu0
    %4197 = vrot.lane.b32.xlu0 %v2236, 104
    %v4198 = vpop.permute.xlu0 %4197
    %4199 = vrot.lane.b32.xlu0 %v2287, 104
    %v4200 = vpop.permute.xlu0 %4199
    %v4201 = vsel %vm300, %v4198, 0
    %v4203 = vsel %vm300, %v4200, 0
    %4205 = vmatpush.xpose.msra.mxu0 0.0
    %4206 = vmatpush.xpose.msra.mxu0 0.0
    %4207 = vmatpush.xpose.msra.mxu0 0.0
    %4208 = vmatpush.xpose.msra.mxu0 0.0
    %4209 = vmatpush.xpose.msra.mxu0 0.0
    %4210 = vmatpush.xpose.msra.mxu0 0.0
    %4211 = vmatpush.xpose.msra.mxu0 0.0
    %4212 = vmatpush.xpose.msra.mxu0 0.0
    %4213 = vmatpush.xpose.msra.mxu0 0.0
    %4214 = vmatpush.xpose.msra.mxu0 0.0
    %4215 = vmatpush.xpose.msra.mxu0 0.0
    %4216 = vmatpush.xpose.msra.mxu0 0.0
    %4217 = vmatpush.xpose.msra.mxu0 0.0
    %4218 = vmatpush.xpose.msra.mxu0 0.0
    %4219 = vmatpush.xpose.msra.mxu0 0.0
    %4220 = vmatpush.xpose.msra.mxu0 %v4203
    %4221 = vmatmul.f32.gmra.mxu0 %v4201
    %v4222 = vpop.f32.mrf.mxu0
    %v4223 = vadd.f32 0.0, %v4222
    %4224 = vdwg.mxu0
    %4225 = vrot.lane.b32.xlu0 %v2239, 104
    %v4226 = vpop.permute.xlu0 %4225
    %4227 = vrot.lane.b32.xlu0 %v2290, 104
    %v4228 = vpop.permute.xlu0 %4227
    %v4229 = vsel %vm300, %v4226, 0
    %v4231 = vsel %vm300, %v4228, 0
    %4233 = vmatpush.xpose.msra.mxu0 0.0
    %4234 = vmatpush.xpose.msra.mxu0 0.0
    %4235 = vmatpush.xpose.msra.mxu0 0.0
    %4236 = vmatpush.xpose.msra.mxu0 0.0
    %4237 = vmatpush.xpose.msra.mxu0 0.0
    %4238 = vmatpush.xpose.msra.mxu0 0.0
    %4239 = vmatpush.xpose.msra.mxu0 0.0
    %4240 = vmatpush.xpose.msra.mxu0 0.0
    %4241 = vmatpush.xpose.msra.mxu0 0.0
    %4242 = vmatpush.xpose.msra.mxu0 0.0
    %4243 = vmatpush.xpose.msra.mxu0 0.0
    %4244 = vmatpush.xpose.msra.mxu0 0.0
    %4245 = vmatpush.xpose.msra.mxu0 0.0
    %4246 = vmatpush.xpose.msra.mxu0 0.0
    %4247 = vmatpush.xpose.msra.mxu0 0.0
    %4248 = vmatpush.xpose.msra.mxu0 %v4231
    %4249 = vmatmul.f32.gmra.mxu0 %v4229
    %v4250 = vpop.f32.mrf.mxu0
    %v4251 = vadd.f32 0.0, %v4250
    %4252 = vdwg.mxu0
    %4253 = vrot.lane.b32.xlu0 %v2242, 104
    %v4254 = vpop.permute.xlu0 %4253
    %4255 = vrot.lane.b32.xlu0 %v2293, 104
    %v4256 = vpop.permute.xlu0 %4255
    %v4257 = vsel %vm300, %v4254, 0
    %v4259 = vsel %vm300, %v4256, 0
    %4261 = vmatpush.xpose.msra.mxu0 0.0
    %4262 = vmatpush.xpose.msra.mxu0 0.0
    %4263 = vmatpush.xpose.msra.mxu0 0.0
    %4264 = vmatpush.xpose.msra.mxu0 0.0
    %4265 = vmatpush.xpose.msra.mxu0 0.0
    %4266 = vmatpush.xpose.msra.mxu0 0.0
    %4267 = vmatpush.xpose.msra.mxu0 0.0
    %4268 = vmatpush.xpose.msra.mxu0 0.0
    %4269 = vmatpush.xpose.msra.mxu0 0.0
    %4270 = vmatpush.xpose.msra.mxu0 0.0
    %4271 = vmatpush.xpose.msra.mxu0 0.0
    %4272 = vmatpush.xpose.msra.mxu0 0.0
    %4273 = vmatpush.xpose.msra.mxu0 0.0
    %4274 = vmatpush.xpose.msra.mxu0 0.0
    %4275 = vmatpush.xpose.msra.mxu0 0.0
    %4276 = vmatpush.xpose.msra.mxu0 %v4259
    %4277 = vmatmul.f32.gmra.mxu0 %v4257
    %v4278 = vpop.f32.mrf.mxu0
    %v4279 = vadd.f32 0.0, %v4278
    %4280 = vdwg.mxu0
    %4281 = vrot.lane.b32.xlu0 %v2245, 104
    %v4282 = vpop.permute.xlu0 %4281
    %4283 = vrot.lane.b32.xlu0 %v2296, 104
    %v4284 = vpop.permute.xlu0 %4283
    %v4285 = vsel %vm300, %v4282, 0
    %v4287 = vsel %vm300, %v4284, 0
    %4289 = vmatpush.xpose.msra.mxu0 0.0
    %4290 = vmatpush.xpose.msra.mxu0 0.0
    %4291 = vmatpush.xpose.msra.mxu0 0.0
    %4292 = vmatpush.xpose.msra.mxu0 0.0
    %4293 = vmatpush.xpose.msra.mxu0 0.0
    %4294 = vmatpush.xpose.msra.mxu0 0.0
    %4295 = vmatpush.xpose.msra.mxu0 0.0
    %4296 = vmatpush.xpose.msra.mxu0 0.0
    %4297 = vmatpush.xpose.msra.mxu0 0.0
    %4298 = vmatpush.xpose.msra.mxu0 0.0
    %4299 = vmatpush.xpose.msra.mxu0 0.0
    %4300 = vmatpush.xpose.msra.mxu0 0.0
    %4301 = vmatpush.xpose.msra.mxu0 0.0
    %4302 = vmatpush.xpose.msra.mxu0 0.0
    %4303 = vmatpush.xpose.msra.mxu0 0.0
    %4304 = vmatpush.xpose.msra.mxu0 %v4287
    %4305 = vmatmul.f32.gmra.mxu0 %v4285
    %v4306 = vpop.f32.mrf.mxu0
    %v4307 = vadd.f32 0.0, %v4306
    %4308 = vdwg.mxu0
    %v4309 = vsel %vm300, %v4111, -inf
    %4310 = vmax.xlane.f32.xlu0 %v4309
    %v4311 = vpop.xlane.xlu0 %4310
    %v4312 = vsel %vm300, %v4139, -inf
    %4313 = vmax.xlane.f32.xlu0 %v4312
    %v4314 = vpop.xlane.xlu0 %4313
    %v4315 = vsel %vm300, %v4167, -inf
    %4316 = vmax.xlane.f32.xlu0 %v4315
    %v4317 = vpop.xlane.xlu0 %4316
    %v4318 = vsel %vm300, %v4195, -inf
    %4319 = vmax.xlane.f32.xlu0 %v4318
    %v4320 = vpop.xlane.xlu0 %4319
    %v4321 = vsel %vm300, %v4223, -inf
    %4322 = vmax.xlane.f32.xlu0 %v4321
    %v4323 = vpop.xlane.xlu0 %4322
    %v4324 = vsel %vm300, %v4251, -inf
    %4325 = vmax.xlane.f32.xlu0 %v4324
    %v4326 = vpop.xlane.xlu0 %4325
    %v4327 = vsel %vm300, %v4279, -inf
    %4328 = vmax.xlane.f32.xlu0 %v4327
    %v4329 = vpop.xlane.xlu0 %4328
    %v4330 = vsel %vm300, %v4307, -inf
    %4331 = vmax.xlane.f32.xlu0 %v4330
    %v4332 = vpop.xlane.xlu0 %4331
    %v4333 = vsub.f32 %v4111, %v4311
    %v4334 = vsub.f32 %v4139, %v4314
    %v4335 = vsub.f32 %v4167, %v4317
    %v4336 = vsub.f32 %v4195, %v4320
    %v4337 = vsub.f32 %v4223, %v4323
    %v4338 = vsub.f32 %v4251, %v4326
    %v4339 = vsub.f32 %v4279, %v4329
    %v4340 = vsub.f32 %v4307, %v4332
    %v4341 = vmul.f32 %v4333, 1.442695
    %v4342 = vpow.pop %v4341
    %v4343 = vmul.f32 %v4334, 1.442695
    %v4344 = vpow.pop %v4343
    %v4345 = vmul.f32 %v4335, 1.442695
    %v4346 = vpow.pop %v4345
    %v4347 = vmul.f32 %v4336, 1.442695
    %v4348 = vpow.pop %v4347
    %v4349 = vmul.f32 %v4337, 1.442695
    %v4350 = vpow.pop %v4349
    %v4351 = vmul.f32 %v4338, 1.442695
    %v4352 = vpow.pop %v4351
    %v4353 = vmul.f32 %v4339, 1.442695
    %v4354 = vpow.pop %v4353
    %v4355 = vmul.f32 %v4340, 1.442695
    %v4356 = vpow.pop %v4355
    %v4357 = vsel %vm300, %v4342, 0.0
    %4358 = vadd.xlane.f32.xlu0 %v4357
    %v4359 = vpop.xlane.xlu0 %4358
    %v4360 = vsel %vm300, %v4344, 0.0
    %4361 = vadd.xlane.f32.xlu0 %v4360
    %v4362 = vpop.xlane.xlu0 %4361
    %v4363 = vsel %vm300, %v4346, 0.0
    %4364 = vadd.xlane.f32.xlu0 %v4363
    %v4365 = vpop.xlane.xlu0 %4364
    %v4366 = vsel %vm300, %v4348, 0.0
    %4367 = vadd.xlane.f32.xlu0 %v4366
    %v4368 = vpop.xlane.xlu0 %4367
    %v4369 = vsel %vm300, %v4350, 0.0
    %4370 = vadd.xlane.f32.xlu0 %v4369
    %v4371 = vpop.xlane.xlu0 %4370
    %v4372 = vsel %vm300, %v4352, 0.0
    %4373 = vadd.xlane.f32.xlu0 %v4372
    %v4374 = vpop.xlane.xlu0 %4373
    %v4375 = vsel %vm300, %v4354, 0.0
    %4376 = vadd.xlane.f32.xlu0 %v4375
    %v4377 = vpop.xlane.xlu0 %4376
    %v4378 = vsel %vm300, %v4356, 0.0
    %4379 = vadd.xlane.f32.xlu0 %v4378
    %v4380 = vpop.xlane.xlu0 %4379
    %v4381 = vrcp.pop %v4359
    %v4382 = vrcp.pop %v4362
    %v4383 = vrcp.pop %v4365
    %v4384 = vrcp.pop %v4368
    %v4385 = vrcp.pop %v4371
    %v4386 = vrcp.pop %v4374
    %v4387 = vrcp.pop %v4377
    %v4388 = vrcp.pop %v4380
    %v4389 = vmul.f32 %v4342, %v4381
    %v4390 = vmul.f32 %v4344, %v4382
    %v4391 = vmul.f32 %v4346, %v4383
    %v4392 = vmul.f32 %v4348, %v4384
    %v4393 = vmul.f32 %v4350, %v4385
    %v4394 = vmul.f32 %v4352, %v4386
    %v4395 = vmul.f32 %v4354, %v4387
    %v4396 = vmul.f32 %v4356, %v4388
    %4397 = vrot.lane.b32.xlu0 %v2326, 104
    %v4398 = vpop.permute.xlu0 %4397
    %v4401 = vsel %vm300, %v4389, 0
    %4403 = vmatpush.msra.mxu0 0.0
    %4404 = vmatpush.msra.mxu0 0.0
    %4405 = vmatpush.msra.mxu0 0.0
    %4406 = vmatpush.msra.mxu0 0.0
    %4407 = vmatpush.msra.mxu0 0.0
    %4408 = vmatpush.msra.mxu0 0.0
    %4409 = vmatpush.msra.mxu0 0.0
    %4410 = vmatpush.msra.mxu0 0.0
    %4411 = vmatpush.msra.mxu0 0.0
    %4412 = vmatpush.msra.mxu0 0.0
    %4413 = vmatpush.msra.mxu0 0.0
    %4414 = vmatpush.msra.mxu0 0.0
    %4415 = vmatpush.msra.mxu0 0.0
    %4416 = vmatpush.msra.mxu0 0.0
    %4417 = vmatpush.msra.mxu0 0.0
    %4418 = vmatpush.msra.mxu0 %v4398
    %4419 = vmatmul.f32.gmra.mxu0 %v4401
    %v4420 = vpop.f32.mrf.mxu0
    %v4421 = vadd.f32 0.0, %v4420
    %4422 = vdwg.mxu0
    %4423 = vrot.lane.b32.xlu0 %v2329, 104
    %v4424 = vpop.permute.xlu0 %4423
    %v4427 = vsel %vm300, %v4390, 0
    %4429 = vmatpush.msra.mxu0 0.0
    %4430 = vmatpush.msra.mxu0 0.0
    %4431 = vmatpush.msra.mxu0 0.0
    %4432 = vmatpush.msra.mxu0 0.0
    %4433 = vmatpush.msra.mxu0 0.0
    %4434 = vmatpush.msra.mxu0 0.0
    %4435 = vmatpush.msra.mxu0 0.0
    %4436 = vmatpush.msra.mxu0 0.0
    %4437 = vmatpush.msra.mxu0 0.0
    %4438 = vmatpush.msra.mxu0 0.0
    %4439 = vmatpush.msra.mxu0 0.0
    %4440 = vmatpush.msra.mxu0 0.0
    %4441 = vmatpush.msra.mxu0 0.0
    %4442 = vmatpush.msra.mxu0 0.0
    %4443 = vmatpush.msra.mxu0 0.0
    %4444 = vmatpush.msra.mxu0 %v4424
    %4445 = vmatmul.f32.gmra.mxu0 %v4427
    %v4446 = vpop.f32.mrf.mxu0
    %v4447 = vadd.f32 0.0, %v4446
    %4448 = vdwg.mxu0
    %4449 = vrot.lane.b32.xlu0 %v2332, 104
    %v4450 = vpop.permute.xlu0 %4449
    %v4453 = vsel %vm300, %v4391, 0
    %4455 = vmatpush.msra.mxu0 0.0
    %4456 = vmatpush.msra.mxu0 0.0
    %4457 = vmatpush.msra.mxu0 0.0
    %4458 = vmatpush.msra.mxu0 0.0
    %4459 = vmatpush.msra.mxu0 0.0
    %4460 = vmatpush.msra.mxu0 0.0
    %4461 = vmatpush.msra.mxu0 0.0
    %4462 = vmatpush.msra.mxu0 0.0
    %4463 = vmatpush.msra.mxu0 0.0
    %4464 = vmatpush.msra.mxu0 0.0
    %4465 = vmatpush.msra.mxu0 0.0
    %4466 = vmatpush.msra.mxu0 0.0
    %4467 = vmatpush.msra.mxu0 0.0
    %4468 = vmatpush.msra.mxu0 0.0
    %4469 = vmatpush.msra.mxu0 0.0
    %4470 = vmatpush.msra.mxu0 %v4450
    %4471 = vmatmul.f32.gmra.mxu0 %v4453
    %v4472 = vpop.f32.mrf.mxu0
    %v4473 = vadd.f32 0.0, %v4472
    %4474 = vdwg.mxu0
    %4475 = vrot.lane.b32.xlu0 %v2335, 104
    %v4476 = vpop.permute.xlu0 %4475
    %v4479 = vsel %vm300, %v4392, 0
    %4481 = vmatpush.msra.mxu0 0.0
    %4482 = vmatpush.msra.mxu0 0.0
    %4483 = vmatpush.msra.mxu0 0.0
    %4484 = vmatpush.msra.mxu0 0.0
    %4485 = vmatpush.msra.mxu0 0.0
    %4486 = vmatpush.msra.mxu0 0.0
    %4487 = vmatpush.msra.mxu0 0.0
    %4488 = vmatpush.msra.mxu0 0.0
    %4489 = vmatpush.msra.mxu0 0.0
    %4490 = vmatpush.msra.mxu0 0.0
    %4491 = vmatpush.msra.mxu0 0.0
    %4492 = vmatpush.msra.mxu0 0.0
    %4493 = vmatpush.msra.mxu0 0.0
    %4494 = vmatpush.msra.mxu0 0.0
    %4495 = vmatpush.msra.mxu0 0.0
    %4496 = vmatpush.msra.mxu0 %v4476
    %4497 = vmatmul.f32.gmra.mxu0 %v4479
    %v4498 = vpop.f32.mrf.mxu0
    %v4499 = vadd.f32 0.0, %v4498
    %4500 = vdwg.mxu0
    %4501 = vrot.lane.b32.xlu0 %v2338, 104
    %v4502 = vpop.permute.xlu0 %4501
    %v4505 = vsel %vm300, %v4393, 0
    %4507 = vmatpush.msra.mxu0 0.0
    %4508 = vmatpush.msra.mxu0 0.0
    %4509 = vmatpush.msra.mxu0 0.0
    %4510 = vmatpush.msra.mxu0 0.0
    %4511 = vmatpush.msra.mxu0 0.0
    %4512 = vmatpush.msra.mxu0 0.0
    %4513 = vmatpush.msra.mxu0 0.0
    %4514 = vmatpush.msra.mxu0 0.0
    %4515 = vmatpush.msra.mxu0 0.0
    %4516 = vmatpush.msra.mxu0 0.0
    %4517 = vmatpush.msra.mxu0 0.0
    %4518 = vmatpush.msra.mxu0 0.0
    %4519 = vmatpush.msra.mxu0 0.0
    %4520 = vmatpush.msra.mxu0 0.0
    %4521 = vmatpush.msra.mxu0 0.0
    %4522 = vmatpush.msra.mxu0 %v4502
    %4523 = vmatmul.f32.gmra.mxu0 %v4505
    %v4524 = vpop.f32.mrf.mxu0
    %v4525 = vadd.f32 0.0, %v4524
    %4526 = vdwg.mxu0
    %4527 = vrot.lane.b32.xlu0 %v2341, 104
    %v4528 = vpop.permute.xlu0 %4527
    %v4531 = vsel %vm300, %v4394, 0
    %4533 = vmatpush.msra.mxu0 0.0
    %4534 = vmatpush.msra.mxu0 0.0
    %4535 = vmatpush.msra.mxu0 0.0
    %4536 = vmatpush.msra.mxu0 0.0
    %4537 = vmatpush.msra.mxu0 0.0
    %4538 = vmatpush.msra.mxu0 0.0
    %4539 = vmatpush.msra.mxu0 0.0
    %4540 = vmatpush.msra.mxu0 0.0
    %4541 = vmatpush.msra.mxu0 0.0
    %4542 = vmatpush.msra.mxu0 0.0
    %4543 = vmatpush.msra.mxu0 0.0
    %4544 = vmatpush.msra.mxu0 0.0
    %4545 = vmatpush.msra.mxu0 0.0
    %4546 = vmatpush.msra.mxu0 0.0
    %4547 = vmatpush.msra.mxu0 0.0
    %4548 = vmatpush.msra.mxu0 %v4528
    %4549 = vmatmul.f32.gmra.mxu0 %v4531
    %v4550 = vpop.f32.mrf.mxu0
    %v4551 = vadd.f32 0.0, %v4550
    %4552 = vdwg.mxu0
    %4553 = vrot.lane.b32.xlu0 %v2344, 104
    %v4554 = vpop.permute.xlu0 %4553
    %v4557 = vsel %vm300, %v4395, 0
    %4559 = vmatpush.msra.mxu0 0.0
    %4560 = vmatpush.msra.mxu0 0.0
    %4561 = vmatpush.msra.mxu0 0.0
    %4562 = vmatpush.msra.mxu0 0.0
    %4563 = vmatpush.msra.mxu0 0.0
    %4564 = vmatpush.msra.mxu0 0.0
    %4565 = vmatpush.msra.mxu0 0.0
    %4566 = vmatpush.msra.mxu0 0.0
    %4567 = vmatpush.msra.mxu0 0.0
    %4568 = vmatpush.msra.mxu0 0.0
    %4569 = vmatpush.msra.mxu0 0.0
    %4570 = vmatpush.msra.mxu0 0.0
    %4571 = vmatpush.msra.mxu0 0.0
    %4572 = vmatpush.msra.mxu0 0.0
    %4573 = vmatpush.msra.mxu0 0.0
    %4574 = vmatpush.msra.mxu0 %v4554
    %4575 = vmatmul.f32.gmra.mxu0 %v4557
    %v4576 = vpop.f32.mrf.mxu0
    %v4577 = vadd.f32 0.0, %v4576
    %4578 = vdwg.mxu0
    %4579 = vrot.lane.b32.xlu0 %v2347, 104
    %v4580 = vpop.permute.xlu0 %4579
    %v4583 = vsel %vm300, %v4396, 0
    %4585 = vmatpush.msra.mxu0 0.0
    %4586 = vmatpush.msra.mxu0 0.0
    %4587 = vmatpush.msra.mxu0 0.0
    %4588 = vmatpush.msra.mxu0 0.0
    %4589 = vmatpush.msra.mxu0 0.0
    %4590 = vmatpush.msra.mxu0 0.0
    %4591 = vmatpush.msra.mxu0 0.0
    %4592 = vmatpush.msra.mxu0 0.0
    %4593 = vmatpush.msra.mxu0 0.0
    %4594 = vmatpush.msra.mxu0 0.0
    %4595 = vmatpush.msra.mxu0 0.0
    %4596 = vmatpush.msra.mxu0 0.0
    %4597 = vmatpush.msra.mxu0 0.0
    %4598 = vmatpush.msra.mxu0 0.0
    %4599 = vmatpush.msra.mxu0 0.0
    %4600 = vmatpush.msra.mxu0 %v4580
    %4601 = vmatmul.f32.gmra.mxu0 %v4583
    %v4602 = vpop.f32.mrf.mxu0
    %v4603 = vadd.f32 0.0, %v4602
    %4604 = vdwg.mxu0
    %s4605 = scalar_lea.vmem %s10, 24
    %v4606 = vld [vmem:[%s4605] sm:$0xff]
    %v4608 = vsel %vm300, %v4421, 0
    %v4611 = vsel %vm300, %v4447, 0
    %v4614 = vsel %vm300, %v4473, 0
    %v4617 = vsel %vm300, %v4499, 0
    %v4620 = vsel %vm300, %v4525, 0
    %v4623 = vsel %vm300, %v4551, 0
    %v4626 = vsel %vm300, %v4577, 0
    %v4629 = vsel %vm300, %v4603, 0
    %4631 = vmatpush.msra.mxu0 0.0
    %4632 = vmatpush.msra.mxu0 0.0
    %4633 = vmatpush.msra.mxu0 0.0
    %4634 = vmatpush.msra.mxu0 0.0
    %4635 = vmatpush.msra.mxu0 0.0
    %4636 = vmatpush.msra.mxu0 0.0
    %4637 = vmatpush.msra.mxu0 0.0
    %4638 = vmatpush.msra.mxu0 0.0
    %4639 = vmatpush.msra.mxu0 0.0
    %4640 = vmatpush.msra.mxu0 0.0
    %4641 = vmatpush.msra.mxu0 0.0
    %4642 = vmatpush.msra.mxu0 0.0
    %4643 = vmatpush.msra.mxu0 0.0
    %4644 = vmatpush.msra.mxu0 0.0
    %4645 = vmatpush.msra.mxu0 0.0
    %4646 = vmatpush.msra.mxu0 %v4606
    %4647 = vmatmul.f32.gmra.mxu0 %v4608
    %v4648 = vpop.f32.mrf.mxu0
    %v4649 = vadd.f32 0.0, %v4648
    %4650 = vmatmul.f32.gmra.mxu0 %v4611
    %v4651 = vpop.f32.mrf.mxu0
    %v4652 = vadd.f32 0.0, %v4651
    %4653 = vmatmul.f32.gmra.mxu0 %v4614
    %v4654 = vpop.f32.mrf.mxu0
    %v4655 = vadd.f32 0.0, %v4654
    %4656 = vmatmul.f32.gmra.mxu0 %v4617
    %v4657 = vpop.f32.mrf.mxu0
    %v4658 = vadd.f32 0.0, %v4657
    %4659 = vmatmul.f32.gmra.mxu0 %v4620
    %v4660 = vpop.f32.mrf.mxu0
    %v4661 = vadd.f32 0.0, %v4660
    %4662 = vmatmul.f32.gmra.mxu0 %v4623
    %v4663 = vpop.f32.mrf.mxu0
    %v4664 = vadd.f32 0.0, %v4663
    %4665 = vmatmul.f32.gmra.mxu0 %v4626
    %v4666 = vpop.f32.mrf.mxu0
    %v4667 = vadd.f32 0.0, %v4666
    %4668 = vmatmul.f32.gmra.mxu0 %v4629
    %v4669 = vpop.f32.mrf.mxu0
    %v4670 = vadd.f32 0.0, %v4669
    %4671 = vdwg.mxu0
    %v4672 = vadd.f32 %v4077, %v4649
    %v4673 = vadd.f32 %v4078, %v4652
    %v4674 = vadd.f32 %v4079, %v4655
    %v4675 = vadd.f32 %v4080, %v4658
    %v4676 = vadd.f32 %v4081, %v4661
    %v4677 = vadd.f32 %v4082, %v4664
    %v4678 = vadd.f32 %v4083, %v4667
    %v4679 = vadd.f32 %v4084, %v4670
    %v4680 = vld [vmem:[%s11] sm:$0x1]
    %v4682 = vperm.slane %v4680, 0
    %v4684 = vadd.f32 %v4672, %v4682
    %v4685 = vadd.f32 %v4673, %v4682
    %v4686 = vadd.f32 %v4674, %v4682
    %v4687 = vadd.f32 %v4675, %v4682
    %v4688 = vadd.f32 %v4676, %v4682
    %v4689 = vadd.f32 %v4677, %v4682
    %v4690 = vadd.f32 %v4678, %v4682
    %v4691 = vadd.f32 %v4679, %v4682
    %v4692 = vld [vmem:[%s2] sm:$0xff]
    %v4693 = vld [vmem:[%s2 + $0x8] sm:$0xff]
    %v4694 = vld [vmem:[%s2 + $0x10] sm:$0xff]
    %v4695 = vld [vmem:[%s2 + $0x18] sm:$0xff]
    %v4696 = vld [vmem:[%s2 + $0x20] sm:$0xff]
    %v4697 = vld [vmem:[%s2 + $0x28] sm:$0xff]
    %v4698 = vld [vmem:[%s2 + $0x30] sm:$0xff]
    %v4699 = vld [vmem:[%s2 + $0x38] sm:$0xff]
    %v4701 = vsel %vm58, %v4692, 0
    %v4704 = vsel %vm58, %v4693, 0
    %v4707 = vsel %vm58, %v4694, 0
    %v4710 = vsel %vm58, %v4695, 0
    %v4713 = vsel %vm58, %v4696, 0
    %v4716 = vsel %vm58, %v4697, 0
    %v4719 = vsel %vm58, %v4698, 0
    %v4722 = vsel %vm58, %v4699, 0
    %4724 = vmatpush.msra.mxu0 0.0
    %4725 = vmatpush.msra.mxu0 0.0
    %4726 = vmatpush.msra.mxu0 0.0
    %4727 = vmatpush.msra.mxu0 0.0
    %4728 = vmatpush.msra.mxu0 0.0
    %4729 = vmatpush.msra.mxu0 0.0
    %4730 = vmatpush.msra.mxu0 0.0
    %4731 = vmatpush.msra.mxu0 0.0
    %4732 = vmatpush.msra.mxu0 %v4691
    %4733 = vmatpush.msra.mxu0 %v4690
    %4734 = vmatpush.msra.mxu0 %v4689
    %4735 = vmatpush.msra.mxu0 %v4688
    %4736 = vmatpush.msra.mxu0 %v4687
    %4737 = vmatpush.msra.mxu0 %v4686
    %4738 = vmatpush.msra.mxu0 %v4685
    %4739 = vmatpush.msra.mxu0 %v4684
    %4740 = vmatmul.f32.gmra.mxu0 %v4701
    %v4741 = vpop.f32.mrf.mxu0
    %v4742 = vadd.f32 0.0, %v4741
    %4743 = vmatmul.f32.gmra.mxu0 %v4704
    %v4744 = vpop.f32.mrf.mxu0
    %v4745 = vadd.f32 0.0, %v4744
    %4746 = vmatmul.f32.gmra.mxu0 %v4707
    %v4747 = vpop.f32.mrf.mxu0
    %v4748 = vadd.f32 0.0, %v4747
    %4749 = vmatmul.f32.gmra.mxu0 %v4710
    %v4750 = vpop.f32.mrf.mxu0
    %v4751 = vadd.f32 0.0, %v4750
    %4752 = vmatmul.f32.gmra.mxu0 %v4713
    %v4753 = vpop.f32.mrf.mxu0
    %v4754 = vadd.f32 0.0, %v4753
    %4755 = vmatmul.f32.gmra.mxu0 %v4716
    %v4756 = vpop.f32.mrf.mxu0
    %v4757 = vadd.f32 0.0, %v4756
    %4758 = vmatmul.f32.gmra.mxu0 %v4719
    %v4759 = vpop.f32.mrf.mxu0
    %v4760 = vadd.f32 0.0, %v4759
    %4761 = vmatmul.f32.gmra.mxu0 %v4722
    %v4762 = vpop.f32.mrf.mxu0
    %v4763 = vadd.f32 0.0, %v4762
    %4764 = vdwg.mxu0
    %4765 = vst.msk [vmem:[#allocation2] sm:$0xff] %vm132, %v4742
    %4766 = vst.msk [vmem:[#allocation2 + $0x8] sm:$0xff] %vm132, %v4745
    %4767 = vst.msk [vmem:[#allocation2 + $0x10] sm:$0xff] %vm132, %v4748
    %4768 = vst.msk [vmem:[#allocation2 + $0x18] sm:$0xff] %vm132, %v4751
    %4769 = vst.msk [vmem:[#allocation2 + $0x20] sm:$0xff] %vm132, %v4754
    %4770 = vst.msk [vmem:[#allocation2 + $0x28] sm:$0xff] %vm132, %v4757
    %4771 = vst.msk [vmem:[#allocation2 + $0x30] sm:$0xff] %vm132, %v4760
    %4772 = vst.msk [vmem:[#allocation2 + $0x38] sm:$0xff] %vm132, %v4763
    // Predicated region
    $region50: #{spatio_temporal_attention.1} parent=1 // pred_check
      _
    $region51: #{spatio_temporal_attention.1} parent=1 // pred_check_branch
      %4774 = sbr.rel (0) target = $region53
    $region52: #{spatio_temporal_attention.1} parent=1 // pred_region
      %4776 = vsyncadd [#allocation3], 0
      %s4777 = sshll.u32 [#allocation2], 4
      %s4778 = int_to_ptr.vmem [resolvable:$true] %s4777
      %s4779 = sshll.u32 %s12, 4
      %s4780 = int_to_ptr.hbm [resolvable:$true] %s4779
      %4785 = dma.vmem_to_hbm [thread:$0]  %s4778, 1024, %s4780, [#allocation3], 128, 128, 8
    $region53: #{spatio_temporal_attention.1} parent=1 // pred_fallthru
      _
    // Predicated region
    $region54: #{spatio_temporal_attention.1} parent=1 // pred_check
      _
    $region55: #{spatio_temporal_attention.1} parent=1 // pred_check_branch
      %4787 = sbr.rel (0) target = $region57
    $region56: #{spatio_temporal_attention.1} parent=1 // pred_region
      %4789 = dma.done [#allocation3], 1024
    $region57: #{spatio_temporal_attention.1} parent=1 // pred_fallthru
      _
    %4790 = vsyncpa [#allocation3], 1

</llo_original>
